<compile_context>
chip_gen: v7x
topology: tpu7x:2x2x1
jax: 0.10.0
libtpu: 0.0.40
codegen_flags: <defaults>
</compile_context>

<pallas_src>
import functools

import jax
import jax.numpy as jnp
from jax.experimental import pallas as pl
from jax.experimental.pallas import tpu as pltpu


def _round_up(x, m):
    return ((x + m - 1) // m) * m


def _choose_block_b(B):
    """Batch tile: aim for >=2 grid steps (v7x dual-TC occupancy), MXU-friendly
    multiples of 128, capped at 512 to amortize per-step pipeline overhead."""
    half = _round_up(max(pl.cdiv(max(B, 1), 2), 1), 128)
    return int(min(512, max(128, half)))


def _mlp_kernel(x_ref,
                w1_ref, b1_ref,
                w2_ref, b2_ref,
                w3_ref, b3_ref,
                w4_ref, b4_ref,
                w5_ref, b5_ref,
                o_ref):
    """Whole 5-layer MLP forward for one batch tile, entirely in VMEM.

    Weights arrive as bf16 [in, out]; matmuls accumulate in f32 on the MXU;
    biases are f32 rows added to the f32 accumulator; ReLU runs in bf16.
    """
    h = x_ref[...].astype(jnp.bfloat16)

    h = jnp.dot(h, w1_ref[...], preferred_element_type=jnp.float32) + b1_ref[...]
    h = jnp.maximum(h.astype(jnp.bfloat16), 0.0)

    h = jnp.dot(h, w2_ref[...], preferred_element_type=jnp.float32) + b2_ref[...]
    h = jnp.maximum(h.astype(jnp.bfloat16), 0.0)

    h = jnp.dot(h, w3_ref[...], preferred_element_type=jnp.float32) + b3_ref[...]
    h = jnp.maximum(h.astype(jnp.bfloat16), 0.0)

    h = jnp.dot(h, w4_ref[...], preferred_element_type=jnp.float32) + b4_ref[...]
    h = jnp.maximum(h.astype(jnp.bfloat16), 0.0)

    out = jnp.dot(h, w5_ref[...], preferred_element_type=jnp.float32) + b5_ref[...]
    o_ref[...] = out.astype(o_ref.dtype)


def prepare_params(params):
    """ONE-TIME weight preprocessing (hoisted out of the per-call jit):
      * pad W1 rows so K matches the 128-lane-padded input dim,
      * pad final W/b columns so the output dim is a multiple of 128 lanes,
      * cast weights to bf16, reshape biases to f32 (1, out) broadcast rows.

    Returns (flat_arrays, meta) with meta = (in_dim, in_pad, out_dim, out_pad).
    """
    in_dim = params[0][0].shape[0]
    out_dim = params[-1][0].shape[1]
    in_pad = _round_up(in_dim, 128)
    out_pad = _round_up(out_dim, 128)

    n_layers = len(params)
    flat = []
    for li, (w, b) in enumerate(params):
        w = jnp.asarray(w, jnp.float32)
        b = jnp.asarray(b, jnp.float32)
        if li == 0 and in_pad != in_dim:
            w = jnp.pad(w, ((0, in_pad - in_dim), (0, 0)))
        if li == n_layers - 1 and out_pad != out_dim:
            w = jnp.pad(w, ((0, 0), (0, out_pad - out_dim)))
            b = jnp.pad(b, ((0, out_pad - out_dim),))
        flat.append(w.astype(jnp.bfloat16))
        flat.append(b.reshape(1, -1))
    # TODO(synk): for repeated tiny-batch (RL serving) calls, add a cross-call
    # weight-prefetch pallas_call (semaphore + VMEM-ref outputs) so the per-call
    # cost is only the x/out DMA.
    # TODO(synk): optional v7x-only fp8 quantization of the 512x512 hidden
    # weights (per-channel scales) for 2x MXU rate; opt-in, accuracy-gated.
    return tuple(flat), (int(in_dim), int(in_pad), int(out_dim), int(out_pad))


@functools.partial(jax.jit, static_argnames=("meta", "block_b", "out_dtype"))
def _forward_impl(x, flat_params, meta, block_b, out_dtype):
    in_dim, in_pad, out_dim, out_pad = meta
    B = x.shape[0]

    # Pad batch to a multiple of block_b and input columns to a lane-dense K.
    B_pad = _round_up(max(B, 1), block_b)
    pad_rows = B_pad - B
    pad_cols = in_pad - in_dim
    if pad_rows or pad_cols:
        x = jnp.pad(x, ((0, pad_rows), (0, pad_cols)))

    in_specs = [pl.BlockSpec((block_b, in_pad), lambda i: (i, 0))]
    weight_bytes = 0
    flops = 0
    for idx in range(0, len(flat_params), 2):
        w, b = flat_params[idx], flat_params[idx + 1]
        # Constant index_map: the weight/bias block is identical on every grid
        # step, so it stays resident in VMEM across the batch grid.
        in_specs.append(pl.BlockSpec(w.shape, lambda i: (0, 0)))
        in_specs.append(pl.BlockSpec(b.shape, lambda i: (0, 0)))
        weight_bytes += w.size * w.dtype.itemsize + b.size * b.dtype.itemsize
        flops += 2 * B_pad * w.shape[0] * w.shape[1]

    grid = (B_pad // block_b,)
    out_specs = pl.BlockSpec((block_b, out_pad), lambda i: (i, 0))

    cost = pl.CostEstimate(
        flops=flops,
        transcendentals=0,
        bytes_accessed=weight_bytes + x.size * x.dtype.itemsize
        + B_pad * out_pad * jnp.dtype(out_dtype).itemsize,
    )

    out = pl.pallas_call(
        _mlp_kernel,
        out_shape=jax.ShapeDtypeStruct((B_pad, out_pad), out_dtype),
        grid_spec=pltpu.PrefetchScalarGridSpec(
            num_scalar_prefetch=0,
            grid=grid,
            in_specs=in_specs,
            out_specs=out_specs,
        ),
        compiler_params=pltpu.CompilerParams(
            dimension_semantics=("parallel",),   # batch tiles shard across TCs (v7x)
            vmem_limit_bytes=32 << 20,           # headroom for large batch tiles
        ),
        cost_estimate=cost,
    )(x, *flat_params)

    return out[:B, :out_dim]


def deep_policy_net_forward(x, prepared, block_b=None, out_dtype=jnp.float32):
    """x: [B, input_dim] f32. prepared: output of prepare_params(params)."""
    flat_params, meta = prepared
    if block_b is None:
        block_b = _choose_block_b(x.shape[0])
    return _forward_impl(x, flat_params, meta, int(block_b), out_dtype)


def init_params(input_dim, output_dim, key):
    """Deterministic synthetic init matching DeepPolicyNet layer shapes (f32)."""
    dims = [(input_dim, 512), (512, 512), (512, 512), (512, 256), (256, output_dim)]
    params = []
    for (fan_in, fan_out) in dims:
        kw, kb, key = jax.random.split(key, 3)
        bound = 1.0 / jnp.sqrt(fan_in)
        # Stored as [in, out] (transpose of PyTorch's [out, in]); math identical.
        w = jax.random.uniform(kw, (fan_in, fan_out), jnp.float32, -bound, bound)
        b = jax.random.uniform(kb, (fan_out,), jnp.float32, -bound, bound)
        params.append((w, b))
    return params


def reference_forward_f32(x, params):
    """Full-precision reference (matches the PyTorch module in f32)."""
    h = x
    for i, (w, b) in enumerate(params):
        h = h @ w + b
        if i < len(params) - 1:
            h = jnp.maximum(h, 0.0)
    return h


def reference_forward_bf16(x, params):
    """Reference with the kernel's numerics: bf16 matmul inputs, f32 acc, bf16 ReLU."""
    h = x.astype(jnp.bfloat16)
    for i, (w, b) in enumerate(params):
        h = jnp.dot(h, w.astype(jnp.bfloat16),
                    preferred_element_type=jnp.float32) + b
        if i < len(params) - 1:
            h = jnp.maximum(h.astype(jnp.bfloat16), 0.0)
    return h


if __name__ == "__main__":
    key = jax.random.PRNGKey(0)
    kx, kp = jax.random.split(key)

    # Small demo shapes: batch deliberately NOT a multiple of the tile to
    # exercise the padded tail; auto block_b=128 -> 2-step parallel grid.
    batch, input_dim, output_dim = 200, 32, 16
    x = jax.random.normal(kx, (batch, input_dim), jnp.float32)
    params = init_params(input_dim, output_dim, kp)
    prepared = prepare_params(params)   # one-time bf16 cast / padding

    out = deep_policy_net_forward(x, prepared)
    out = jax.block_until_ready(out)
    assert out.shape == (batch, output_dim)

    # Check vs. a reference with identical numerics (bf16 inputs, f32 acc).
    ref_q = reference_forward_bf16(x, params)
    assert jnp.allclose(out, ref_q, atol=2e-3, rtol=2e-3), "mismatch vs bf16 reference"

    # Loose sanity check vs. full-f32 math (bf16 weight quantization error only).
    ref_f32 = reference_forward_f32(x, params)
    assert jnp.allclose(out, ref_f32, atol=5e-2, rtol=5e-2), "mismatch vs f32 reference"

    print("KERNEL_OK")
</pallas_src>

<mosaic_0001>
module attributes {stable_mosaic.version = 11 : i64} {
  func.func @_mlp_kernel(%arg0: i32, %arg1: memref<128x128xf32, #tpu.memory_space<vmem>>, %arg2: memref<128x512xbf16, #tpu.memory_space<vmem>>, %arg3: memref<1x512xf32, #tpu.memory_space<vmem>>, %arg4: memref<512x512xbf16, #tpu.memory_space<vmem>>, %arg5: memref<1x512xf32, #tpu.memory_space<vmem>>, %arg6: memref<512x512xbf16, #tpu.memory_space<vmem>>, %arg7: memref<1x512xf32, #tpu.memory_space<vmem>>, %arg8: memref<512x256xbf16, #tpu.memory_space<vmem>>, %arg9: memref<1x256xf32, #tpu.memory_space<vmem>>, %arg10: memref<256x128xbf16, #tpu.memory_space<vmem>>, %arg11: memref<1x128xf32, #tpu.memory_space<vmem>>, %arg12: memref<128x128xf32, #tpu.memory_space<vmem>>) attributes {dimension_semantics = [#tpu.dimension_semantics<parallel>], iteration_bounds = array<i64: 2>, scalar_prefetch = 0 : i64, scratch_operands = 0 : i64, tpu.core_type = #tpu.core_type<tc>, window_params = [{transform_indices = @transform_0, window_bounds = array<i64: 128, 128>}, {pipeline_mode = #tpu.pipeline_mode<synchronous>, transform_indices = @transform_1, window_bounds = array<i64: 128, 512>}, {pipeline_mode = #tpu.pipeline_mode<synchronous>, transform_indices = @transform_2, window_bounds = array<i64: 1, 512>}, {pipeline_mode = #tpu.pipeline_mode<synchronous>, transform_indices = @transform_3, window_bounds = array<i64: 512, 512>}, {pipeline_mode = #tpu.pipeline_mode<synchronous>, transform_indices = @transform_4, window_bounds = array<i64: 1, 512>}, {pipeline_mode = #tpu.pipeline_mode<synchronous>, transform_indices = @transform_5, window_bounds = array<i64: 512, 512>}, {pipeline_mode = #tpu.pipeline_mode<synchronous>, transform_indices = @transform_6, window_bounds = array<i64: 1, 512>}, {pipeline_mode = #tpu.pipeline_mode<synchronous>, transform_indices = @transform_7, window_bounds = array<i64: 512, 256>}, {pipeline_mode = #tpu.pipeline_mode<synchronous>, transform_indices = @transform_8, window_bounds = array<i64: 1, 256>}, {pipeline_mode = #tpu.pipeline_mode<synchronous>, transform_indices = @transform_9, window_bounds = array<i64: 256, 128>}, {pipeline_mode = #tpu.pipeline_mode<synchronous>, transform_indices = @transform_10, window_bounds = array<i64: 1, 128>}, {transform_indices = @transform_11, window_bounds = array<i64: 128, 128>}]} {
    %c0 = arith.constant 0 : index
    %c0_0 = arith.constant 0 : index
    %0 = vector.load %arg1[%c0, %c0_0] : memref<128x128xf32, #tpu.memory_space<vmem>>, vector<128x128xf32>
    %1 = arith.truncf %0 : vector<128x128xf32> to vector<128x128xbf16>
    %c0_1 = arith.constant 0 : index
    %c0_2 = arith.constant 0 : index
    %2 = vector.load %arg2[%c0_1, %c0_2] : memref<128x512xbf16, #tpu.memory_space<vmem>>, vector<128x512xbf16>
    %cst = arith.constant dense<0.000000e+00> : vector<128x512xf32>
    %3 = tpu.matmul %1, %2, %cst {dimension_numbers = #tpu.dot_dimension_numbers<[1], [0], [0], [1], [0, 0, 1, 1], [], []>} : vector<128x128xbf16>, vector<128x512xbf16>, vector<128x512xf32> -> vector<128x512xf32>
    %c0_3 = arith.constant 0 : index
    %c0_4 = arith.constant 0 : index
    %4 = vector.load %arg3[%c0_3, %c0_4] : memref<1x512xf32, #tpu.memory_space<vmem>>, vector<1x512xf32>
    %5 = vector.broadcast %4 : vector<1x512xf32> to vector<128x512xf32>
    %6 = arith.addf %3, %5 : vector<128x512xf32>
    %7 = arith.truncf %6 : vector<128x512xf32> to vector<128x512xbf16>
    %cst_5 = arith.constant 0.000000e+00 : bf16
    %8 = vector.broadcast %cst_5 : bf16 to vector<128x512xbf16>
    %9 = arith.maximumf %7, %8 : vector<128x512xbf16>
    %c0_6 = arith.constant 0 : index
    %c0_7 = arith.constant 0 : index
    %10 = vector.load %arg4[%c0_6, %c0_7] : memref<512x512xbf16, #tpu.memory_space<vmem>>, vector<512x512xbf16>
    %cst_8 = arith.constant dense<0.000000e+00> : vector<128x512xf32>
    %11 = tpu.matmul %9, %10, %cst_8 {dimension_numbers = #tpu.dot_dimension_numbers<[1], [0], [0], [1], [0, 0, 1, 1], [], []>} : vector<128x512xbf16>, vector<512x512xbf16>, vector<128x512xf32> -> vector<128x512xf32>
    %c0_9 = arith.constant 0 : index
    %c0_10 = arith.constant 0 : index
    %12 = vector.load %arg5[%c0_9, %c0_10] : memref<1x512xf32, #tpu.memory_space<vmem>>, vector<1x512xf32>
    %13 = vector.broadcast %12 : vector<1x512xf32> to vector<128x512xf32>
    %14 = arith.addf %11, %13 : vector<128x512xf32>
    %15 = arith.truncf %14 : vector<128x512xf32> to vector<128x512xbf16>
    %cst_11 = arith.constant 0.000000e+00 : bf16
    %16 = vector.broadcast %cst_11 : bf16 to vector<128x512xbf16>
    %17 = arith.maximumf %15, %16 : vector<128x512xbf16>
    %c0_12 = arith.constant 0 : index
    %c0_13 = arith.constant 0 : index
    %18 = vector.load %arg6[%c0_12, %c0_13] : memref<512x512xbf16, #tpu.memory_space<vmem>>, vector<512x512xbf16>
    %cst_14 = arith.constant dense<0.000000e+00> : vector<128x512xf32>
    %19 = tpu.matmul %17, %18, %cst_14 {dimension_numbers = #tpu.dot_dimension_numbers<[1], [0], [0], [1], [0, 0, 1, 1], [], []>} : vector<128x512xbf16>, vector<512x512xbf16>, vector<128x512xf32> -> vector<128x512xf32>
    %c0_15 = arith.constant 0 : index
    %c0_16 = arith.constant 0 : index
    %20 = vector.load %arg7[%c0_15, %c0_16] : memref<1x512xf32, #tpu.memory_space<vmem>>, vector<1x512xf32>
    %21 = vector.broadcast %20 : vector<1x512xf32> to vector<128x512xf32>
    %22 = arith.addf %19, %21 : vector<128x512xf32>
    %23 = arith.truncf %22 : vector<128x512xf32> to vector<128x512xbf16>
    %cst_17 = arith.constant 0.000000e+00 : bf16
    %24 = vector.broadcast %cst_17 : bf16 to vector<128x512xbf16>
    %25 = arith.maximumf %23, %24 : vector<128x512xbf16>
    %c0_18 = arith.constant 0 : index
    %c0_19 = arith.constant 0 : index
    %26 = vector.load %arg8[%c0_18, %c0_19] : memref<512x256xbf16, #tpu.memory_space<vmem>>, vector<512x256xbf16>
    %cst_20 = arith.constant dense<0.000000e+00> : vector<128x256xf32>
    %27 = tpu.matmul %25, %26, %cst_20 {dimension_numbers = #tpu.dot_dimension_numbers<[1], [0], [0], [1], [0, 0, 1, 1], [], []>} : vector<128x512xbf16>, vector<512x256xbf16>, vector<128x256xf32> -> vector<128x256xf32>
    %c0_21 = arith.constant 0 : index
    %c0_22 = arith.constant 0 : index
    %28 = vector.load %arg9[%c0_21, %c0_22] : memref<1x256xf32, #tpu.memory_space<vmem>>, vector<1x256xf32>
    %29 = vector.broadcast %28 : vector<1x256xf32> to vector<128x256xf32>
    %30 = arith.addf %27, %29 : vector<128x256xf32>
    %31 = arith.truncf %30 : vector<128x256xf32> to vector<128x256xbf16>
    %cst_23 = arith.constant 0.000000e+00 : bf16
    %32 = vector.broadcast %cst_23 : bf16 to vector<128x256xbf16>
    %33 = arith.maximumf %31, %32 : vector<128x256xbf16>
    %c0_24 = arith.constant 0 : index
    %c0_25 = arith.constant 0 : index
    %34 = vector.load %arg10[%c0_24, %c0_25] : memref<256x128xbf16, #tpu.memory_space<vmem>>, vector<256x128xbf16>
    %cst_26 = arith.constant dense<0.000000e+00> : vector<128x128xf32>
    %35 = tpu.matmul %33, %34, %cst_26 {dimension_numbers = #tpu.dot_dimension_numbers<[1], [0], [0], [1], [0, 0, 1, 1], [], []>} : vector<128x256xbf16>, vector<256x128xbf16>, vector<128x128xf32> -> vector<128x128xf32>
    %c0_27 = arith.constant 0 : index
    %c0_28 = arith.constant 0 : index
    %36 = vector.load %arg11[%c0_27, %c0_28] : memref<1x128xf32, #tpu.memory_space<vmem>>, vector<1x128xf32>
    %37 = vector.broadcast %36 : vector<1x128xf32> to vector<128x128xf32>
    %38 = arith.addf %35, %37 : vector<128x128xf32>
    %c0_29 = arith.constant 0 : index
    %c0_30 = arith.constant 0 : index
    %39 = vector.load %arg12[%c0_29, %c0_30] : memref<128x128xf32, #tpu.memory_space<vmem>>, vector<128x128xf32>
    tpu.vector_store %arg12[%c0_29, %c0_30], %38 {strides = array<i32>} : memref<128x128xf32, #tpu.memory_space<vmem>>, vector<128x128xf32>,
    return
  }
  func.func @transform_0(%arg0: i32) -> (i32, i32) {
    %c0_i32 = arith.constant 0 : i32
    %c0_i32_0 = arith.constant 0 : i32
    return %arg0, %c0_i32 : i32, i32
  }
  func.func @transform_1(%arg0: i32) -> (i32, i32) {
    %c0_i32 = arith.constant 0 : i32
    %c0_i32_0 = arith.constant 0 : i32
    %c0_i32_1 = arith.constant 0 : i32
    return %c0_i32, %c0_i32_0 : i32, i32
  }
  func.func @transform_2(%arg0: i32) -> (i32, i32) {
    %c0_i32 = arith.constant 0 : i32
    %c0_i32_0 = arith.constant 0 : i32
    %c0_i32_1 = arith.constant 0 : i32
    return %c0_i32, %c0_i32_0 : i32, i32
  }
  func.func @transform_3(%arg0: i32) -> (i32, i32) {
    %c0_i32 = arith.constant 0 : i32
    %c0_i32_0 = arith.constant 0 : i32
    %c0_i32_1 = arith.constant 0 : i32
    return %c0_i32, %c0_i32_0 : i32, i32
  }
  func.func @transform_4(%arg0: i32) -> (i32, i32) {
    %c0_i32 = arith.constant 0 : i32
    %c0_i32_0 = arith.constant 0 : i32
    %c0_i32_1 = arith.constant 0 : i32
    return %c0_i32, %c0_i32_0 : i32, i32
  }
  func.func @transform_5(%arg0: i32) -> (i32, i32) {
    %c0_i32 = arith.constant 0 : i32
    %c0_i32_0 = arith.constant 0 : i32
    %c0_i32_1 = arith.constant 0 : i32
    return %c0_i32, %c0_i32_0 : i32, i32
  }
  func.func @transform_6(%arg0: i32) -> (i32, i32) {
    %c0_i32 = arith.constant 0 : i32
    %c0_i32_0 = arith.constant 0 : i32
    %c0_i32_1 = arith.constant 0 : i32
    return %c0_i32, %c0_i32_0 : i32, i32
  }
  func.func @transform_7(%arg0: i32) -> (i32, i32) {
    %c0_i32 = arith.constant 0 : i32
    %c0_i32_0 = arith.constant 0 : i32
    %c0_i32_1 = arith.constant 0 : i32
    return %c0_i32, %c0_i32_0 : i32, i32
  }
  func.func @transform_8(%arg0: i32) -> (i32, i32) {
    %c0_i32 = arith.constant 0 : i32
    %c0_i32_0 = arith.constant 0 : i32
    %c0_i32_1 = arith.constant 0 : i32
    return %c0_i32, %c0_i32_0 : i32, i32
  }
  func.func @transform_9(%arg0: i32) -> (i32, i32) {
    %c0_i32 = arith.constant 0 : i32
    %c0_i32_0 = arith.constant 0 : i32
    %c0_i32_1 = arith.constant 0 : i32
    return %c0_i32, %c0_i32_0 : i32, i32
  }
  func.func @transform_10(%arg0: i32) -> (i32, i32) {
    %c0_i32 = arith.constant 0 : i32
    %c0_i32_0 = arith.constant 0 : i32
    %c0_i32_1 = arith.constant 0 : i32
    return %c0_i32, %c0_i32_0 : i32, i32
  }
  func.func @transform_11(%arg0: i32) -> (i32, i32) {
    %c0_i32 = arith.constant 0 : i32
    %c0_i32_0 = arith.constant 0 : i32
    return %arg0, %c0_i32 : i32, i32
  }
}

</mosaic_0001>

<llo_original>
// kernel: _forward_impl.1
$region0: #{_forward_impl.1}
  #allocation0 [shape = 'u32[]', space=smem, size = 0x4, offset = 0x4, fixed_abs, tag = 'smem constant byte address 0x4 - core index']
  #allocation1 [shape = 'u32[144,128]{1,0:T(1,128)}', space=vmem, size = 0x12000, scoped, tag = 'internal scratch']
  %s0 = inlined_call_operand.vmem [shape: f32[256,128], index: 0, kind: input, shape index: {}]
  %s1 = inlined_call_operand.hbm [shape: bf16[128,512], index: 1, kind: input, shape index: {}]
  %s2 = inlined_call_operand.vmem [shape: f32[1,512], index: 2, kind: input, shape index: {}]
  %s3 = inlined_call_operand.hbm [shape: bf16[512,512], index: 3, kind: input, shape index: {}]
  %s4 = inlined_call_operand.vmem [shape: f32[1,512], index: 4, kind: input, shape index: {}]
  %s5 = inlined_call_operand.hbm [shape: bf16[512,512], index: 5, kind: input, shape index: {}]
  %s6 = inlined_call_operand.vmem [shape: f32[1,512], index: 6, kind: input, shape index: {}]
  %s7 = inlined_call_operand.vmem [shape: bf16[512,256], index: 7, kind: input, shape index: {}]
  %s8 = inlined_call_operand.vmem [shape: f32[1,256], index: 8, kind: input, shape index: {}]
  %s9 = inlined_call_operand.vmem [shape: bf16[256,128], index: 9, kind: input, shape index: {}]
  %s10 = inlined_call_operand.vmem [shape: f32[1,128], index: 10, kind: input, shape index: {}]
  %s11 = inlined_call_operand.vmem [shape: f32[256,128], index: 11, kind: output, shape index: {}]
  %s12 = sld [smem:[#allocation0]]
  $region89: #{_forward_impl.1} parent=0
    _
  %s14 = ssub.s32 1, %s12
  %s15 = scalar_select 0, %s14, %s12
  $region1: #{_forward_impl.1} parent=0
    #allocation2 [shape = 'u8[131072]{0}', space=vmem, size = 0x20000, scoped, tag = 'input window, operand 1, single buffered']
    #allocation3 [shape = 's32[2]{0}', space=sflag, size = 0x8, scoped, tag = 'scoped memory for _forward_impl.1']
    #allocation4 [shape = 'u8[524288]{0}', space=vmem, size = 0x80000, scoped, tag = 'input window, operand 3, single buffered']
    #allocation5 [shape = 's32[1]{0}', space=sflag, size = 0x4, scoped, tag = 'scoped memory for _forward_impl.1']
    #allocation6 [shape = 'u8[524288]{0}', space=vmem, size = 0x80000, scoped, tag = 'input window, operand 5, single buffered']
    %16 = vsyncpa [#allocation3], 0
    %17 = vsyncpa [#allocation5], 0
    loop: start=0, step=1, limit=4
    $region2: #{_forward_impl.1} parent=1 // loop_pre_header
      _
    $region3: #{_forward_impl.1} parent=1 // loop_header
      %s19 = sphi 0, %s23
      %p20 = scmp.ge.s32.totalorder %s19, 4
      %s29 = sphi 0, %s31
      %s32 = sphi 0, %s29
      %s33 = sphi 0, %s32
      %s49 = sphi 0, %s33
      %s53 = sphi 0, %s53
      %s55 = sphi 0, %s53
      %s56 = sphi 0, %s55
      %s70 = sphi 0, %s56
      %s74 = sphi 0, %s74
      %s76 = sphi 0, %s74
      %s77 = sphi 0, %s76
      %s91 = sphi 0, %s77
      %s95 = sphi 0, %s95
      %s97 = sphi 0, %s95
      %s98 = sphi 0, %s97
      %s112 = sphi 0, %s98
      %s116 = sphi 0, %s116
      %s118 = sphi 0, %s116
      %s119 = sphi 0, %s118
      %s133 = sphi 0, %s119
      %s137 = sphi 0, %s137
      %s139 = sphi 0, %s137
      %s140 = sphi 0, %s139
      %s154 = sphi 0, %s140
      %s158 = sphi 0, %s158
      %s160 = sphi 0, %s158
      %s161 = sphi 0, %s160
      %s175 = sphi 0, %s161
      %s179 = sphi 0, %s179
      %s181 = sphi 0, %s179
      %s182 = sphi 0, %s181
      %s196 = sphi 0, %s182
      %s200 = sphi 0, %s200
      %s202 = sphi 0, %s200
      %s203 = sphi 0, %s202
      %s217 = sphi 0, %s203
      %s221 = sphi 0, %s221
      %s223 = sphi 0, %s221
      %s224 = sphi 0, %s223
      %s238 = sphi 0, %s224
      %s242 = sphi 0, %s242
      %s244 = sphi 0, %s242
      %s245 = sphi 0, %s244
      %s259 = sphi 0, %s245
      %s265 = sphi 0, %s267
      %s268 = sphi 0, %s265
      %s269 = sphi 0, %s268
      %s285 = sphi 0, %s269
    $region4: #{_forward_impl.1} parent=1 // loop_header_branch
      %22 = sbr.rel (%p20) target = $region8
    $region5: #{_forward_impl.1} parent=1 // loop_body
      %s24 = ssub.s32 %s19, 1
      %s25 = ssub.s32 %s19, 2
      %s26 = sadd.s32 %s19, 1
      %s27 = ssub.s32 %s19, %s26
      %p28 = scmp.eq.s32.totalorder %s27, 0
      %s30 = sadd.s32 %s29, 1
      %s31 = scalar_select %p28, %s29, %s30
      %p34 = pneg %p28
      %p35 = scmp.eq.s32.totalorder %s19, 1
      %p36 = por %p34, %p35
      %p37 = scmp.ne.s32.totalorder %s29, %s32
      %p38 = scmp.eq.s32.totalorder %s19, 0
      %p39 = por %p37, %p38
      %p40 = scmp.ne.s32.totalorder %s29, %s32
      %p41 = scmp.eq.s32.totalorder %s24, 1
      %p42 = por %p40, %p41
      %p43 = scmp.ne.s32.totalorder %s32, %s33
      %p44 = scmp.eq.s32.totalorder %s24, 0
      %p45 = por %p43, %p44
      %p46 = scmp.ne.s32.totalorder %s32, %s33
      %p47 = scmp.eq.s32.totalorder %s25, 1
      %p48 = por %p46, %p47
      %p50 = scmp.ne.s32.totalorder %s33, %s49
      %p51 = scmp.eq.s32.totalorder %s25, 0
      %p52 = por %p50, %p51
      %s54 = sadd.s32 %s53, 1
      %p57 = scmp.eq.s32.totalorder %s19, 1
      %p58 = scmp.ne.s32.totalorder %s53, %s55
      %p59 = scmp.eq.s32.totalorder %s19, 0
      %p60 = por %p58, %p59
      %p61 = scmp.ne.s32.totalorder %s53, %s55
      %p62 = scmp.eq.s32.totalorder %s24, 1
      %p63 = por %p61, %p62
      %p64 = scmp.ne.s32.totalorder %s55, %s56
      %p65 = scmp.eq.s32.totalorder %s24, 0
      %p66 = por %p64, %p65
      %p67 = scmp.ne.s32.totalorder %s55, %s56
      %p68 = scmp.eq.s32.totalorder %s25, 1
      %p69 = por %p67, %p68
      %p71 = scmp.ne.s32.totalorder %s56, %s70
      %p72 = scmp.eq.s32.totalorder %s25, 0
      %p73 = por %p71, %p72
      %s75 = sadd.s32 %s74, 1
      %p78 = scmp.eq.s32.totalorder %s19, 1
      %p79 = scmp.ne.s32.totalorder %s74, %s76
      %p80 = scmp.eq.s32.totalorder %s19, 0
      %p81 = por %p79, %p80
      %p82 = scmp.ne.s32.totalorder %s74, %s76
      %p83 = scmp.eq.s32.totalorder %s24, 1
      %p84 = por %p82, %p83
      %p85 = scmp.ne.s32.totalorder %s76, %s77
      %p86 = scmp.eq.s32.totalorder %s24, 0
      %p87 = por %p85, %p86
      %p88 = scmp.ne.s32.totalorder %s76, %s77
      %p89 = scmp.eq.s32.totalorder %s25, 1
      %p90 = por %p88, %p89
      %p92 = scmp.ne.s32.totalorder %s77, %s91
      %p93 = scmp.eq.s32.totalorder %s25, 0
      %p94 = por %p92, %p93
      %s96 = sadd.s32 %s95, 1
      %p99 = scmp.eq.s32.totalorder %s19, 1
      %p100 = scmp.ne.s32.totalorder %s95, %s97
      %p101 = scmp.eq.s32.totalorder %s19, 0
      %p102 = por %p100, %p101
      %p103 = scmp.ne.s32.totalorder %s95, %s97
      %p104 = scmp.eq.s32.totalorder %s24, 1
      %p105 = por %p103, %p104
      %p106 = scmp.ne.s32.totalorder %s97, %s98
      %p107 = scmp.eq.s32.totalorder %s24, 0
      %p108 = por %p106, %p107
      %p109 = scmp.ne.s32.totalorder %s97, %s98
      %p110 = scmp.eq.s32.totalorder %s25, 1
      %p111 = por %p109, %p110
      %p113 = scmp.ne.s32.totalorder %s98, %s112
      %p114 = scmp.eq.s32.totalorder %s25, 0
      %p115 = por %p113, %p114
      %s117 = sadd.s32 %s116, 1
      %p120 = scmp.eq.s32.totalorder %s19, 1
      %p121 = scmp.ne.s32.totalorder %s116, %s118
      %p122 = scmp.eq.s32.totalorder %s19, 0
      %p123 = por %p121, %p122
      %p124 = scmp.ne.s32.totalorder %s116, %s118
      %p125 = scmp.eq.s32.totalorder %s24, 1
      %p126 = por %p124, %p125
      %p127 = scmp.ne.s32.totalorder %s118, %s119
      %p128 = scmp.eq.s32.totalorder %s24, 0
      %p129 = por %p127, %p128
      %p130 = scmp.ne.s32.totalorder %s118, %s119
      %p131 = scmp.eq.s32.totalorder %s25, 1
      %p132 = por %p130, %p131
      %p134 = scmp.ne.s32.totalorder %s119, %s133
      %p135 = scmp.eq.s32.totalorder %s25, 0
      %p136 = por %p134, %p135
      %s138 = sadd.s32 %s137, 1
      %p141 = scmp.eq.s32.totalorder %s19, 1
      %p142 = scmp.ne.s32.totalorder %s137, %s139
      %p143 = scmp.eq.s32.totalorder %s19, 0
      %p144 = por %p142, %p143
      %p145 = scmp.ne.s32.totalorder %s137, %s139
      %p146 = scmp.eq.s32.totalorder %s24, 1
      %p147 = por %p145, %p146
      %p148 = scmp.ne.s32.totalorder %s139, %s140
      %p149 = scmp.eq.s32.totalorder %s24, 0
      %p150 = por %p148, %p149
      %p151 = scmp.ne.s32.totalorder %s139, %s140
      %p152 = scmp.eq.s32.totalorder %s25, 1
      %p153 = por %p151, %p152
      %p155 = scmp.ne.s32.totalorder %s140, %s154
      %p156 = scmp.eq.s32.totalorder %s25, 0
      %p157 = por %p155, %p156
      %s159 = sadd.s32 %s158, 1
      %p162 = scmp.eq.s32.totalorder %s19, 1
      %p163 = scmp.ne.s32.totalorder %s158, %s160
      %p164 = scmp.eq.s32.totalorder %s19, 0
      %p165 = por %p163, %p164
      %p166 = scmp.ne.s32.totalorder %s158, %s160
      %p167 = scmp.eq.s32.totalorder %s24, 1
      %p168 = por %p166, %p167
      %p169 = scmp.ne.s32.totalorder %s160, %s161
      %p170 = scmp.eq.s32.totalorder %s24, 0
      %p171 = por %p169, %p170
      %p172 = scmp.ne.s32.totalorder %s160, %s161
      %p173 = scmp.eq.s32.totalorder %s25, 1
      %p174 = por %p172, %p173
      %p176 = scmp.ne.s32.totalorder %s161, %s175
      %p177 = scmp.eq.s32.totalorder %s25, 0
      %p178 = por %p176, %p177
      %s180 = sadd.s32 %s179, 1
      %p183 = scmp.eq.s32.totalorder %s19, 1
      %p184 = scmp.ne.s32.totalorder %s179, %s181
      %p185 = scmp.eq.s32.totalorder %s19, 0
      %p186 = por %p184, %p185
      %p187 = scmp.ne.s32.totalorder %s179, %s181
      %p188 = scmp.eq.s32.totalorder %s24, 1
      %p189 = por %p187, %p188
      %p190 = scmp.ne.s32.totalorder %s181, %s182
      %p191 = scmp.eq.s32.totalorder %s24, 0
      %p192 = por %p190, %p191
      %p193 = scmp.ne.s32.totalorder %s181, %s182
      %p194 = scmp.eq.s32.totalorder %s25, 1
      %p195 = por %p193, %p194
      %p197 = scmp.ne.s32.totalorder %s182, %s196
      %p198 = scmp.eq.s32.totalorder %s25, 0
      %p199 = por %p197, %p198
      %s201 = sadd.s32 %s200, 1
      %p204 = scmp.eq.s32.totalorder %s19, 1
      %p205 = scmp.ne.s32.totalorder %s200, %s202
      %p206 = scmp.eq.s32.totalorder %s19, 0
      %p207 = por %p205, %p206
      %p208 = scmp.ne.s32.totalorder %s200, %s202
      %p209 = scmp.eq.s32.totalorder %s24, 1
      %p210 = por %p208, %p209
      %p211 = scmp.ne.s32.totalorder %s202, %s203
      %p212 = scmp.eq.s32.totalorder %s24, 0
      %p213 = por %p211, %p212
      %p214 = scmp.ne.s32.totalorder %s202, %s203
      %p215 = scmp.eq.s32.totalorder %s25, 1
      %p216 = por %p214, %p215
      %p218 = scmp.ne.s32.totalorder %s203, %s217
      %p219 = scmp.eq.s32.totalorder %s25, 0
      %p220 = por %p218, %p219
      %s222 = sadd.s32 %s221, 1
      %p225 = scmp.eq.s32.totalorder %s19, 1
      %p226 = scmp.ne.s32.totalorder %s221, %s223
      %p227 = scmp.eq.s32.totalorder %s19, 0
      %p228 = por %p226, %p227
      %p229 = scmp.ne.s32.totalorder %s221, %s223
      %p230 = scmp.eq.s32.totalorder %s24, 1
      %p231 = por %p229, %p230
      %p232 = scmp.ne.s32.totalorder %s223, %s224
      %p233 = scmp.eq.s32.totalorder %s24, 0
      %p234 = por %p232, %p233
      %p235 = scmp.ne.s32.totalorder %s223, %s224
      %p236 = scmp.eq.s32.totalorder %s25, 1
      %p237 = por %p235, %p236
      %p239 = scmp.ne.s32.totalorder %s224, %s238
      %p240 = scmp.eq.s32.totalorder %s25, 0
      %p241 = por %p239, %p240
      %s243 = sadd.s32 %s242, 1
      %p246 = scmp.eq.s32.totalorder %s19, 1
      %p247 = scmp.ne.s32.totalorder %s242, %s244
      %p248 = scmp.eq.s32.totalorder %s19, 0
      %p249 = por %p247, %p248
      %p250 = scmp.ne.s32.totalorder %s242, %s244
      %p251 = scmp.eq.s32.totalorder %s24, 1
      %p252 = por %p250, %p251
      %p253 = scmp.ne.s32.totalorder %s244, %s245
      %p254 = scmp.eq.s32.totalorder %s24, 0
      %p255 = por %p253, %p254
      %p256 = scmp.ne.s32.totalorder %s244, %s245
      %p257 = scmp.eq.s32.totalorder %s25, 1
      %p258 = por %p256, %p257
      %p260 = scmp.ne.s32.totalorder %s245, %s259
      %p261 = scmp.eq.s32.totalorder %s25, 0
      %p262 = por %p260, %p261
      %s263 = ssub.s32 %s19, %s26
      %p264 = scmp.eq.s32.totalorder %s263, 0
      %s266 = sadd.s32 %s265, 1
      %s267 = scalar_select %p264, %s265, %s266
      %p270 = pneg %p264
      %p271 = scmp.eq.s32.totalorder %s19, 1
      %p272 = por %p270, %p271
      %p273 = scmp.ne.s32.totalorder %s265, %s268
      %p274 = scmp.eq.s32.totalorder %s19, 0
      %p275 = por %p273, %p274
      %p276 = scmp.ne.s32.totalorder %s265, %s268
      %p277 = scmp.eq.s32.totalorder %s24, 1
      %p278 = por %p276, %p277
      %p279 = scmp.ne.s32.totalorder %s268, %s269
      %p280 = scmp.eq.s32.totalorder %s24, 0
      %p281 = por %p279, %p280
      %p282 = scmp.ne.s32.totalorder %s268, %s269
      %p283 = scmp.eq.s32.totalorder %s25, 1
      %p284 = por %p282, %p283
      %p286 = scmp.ne.s32.totalorder %s269, %s285
      %p287 = scmp.eq.s32.totalorder %s25, 0
      %p288 = por %p286, %p287
      %p289 = scmp.le.s32.totalorder 1, %s19
      %p290 = scmp.lt.s32.totalorder %s19, 3
      %p291 = pnand %p289, %p290
      %p292 = pneg %p291
      // Predicated region
      $region9: #{_forward_impl.1} parent=5 // pred_check
        _
      $region10: #{_forward_impl.1} parent=5 // pred_check_branch
        %294 = sbr.rel (%p291) target = $region12
      $region11: #{_forward_impl.1} parent=5 // pred_region
        %s295 = ssub.s32 %s19, 1
        // Predicated region
        $region13: #{_forward_impl.1} parent=11 // pred_check
          %p296 = pneg %p66
        $region14: #{_forward_impl.1} parent=11 // pred_check_branch
          %298 = sbr.rel (%p296) target = $region16
        $region15: #{_forward_impl.1} parent=11 // pred_region
          %s300 = ssub.s32 4096, 4096
          %301 = vsyncadd [#allocation3], %s300
          %s302 = sshll.u32 [#allocation2], 4
          %s303 = int_to_ptr.vmem [resolvable:$true] %s302
          %308 = dma.hbm_to_vmem [thread:$0]  %s1, 4096, %s303, [#allocation3], 256, 256, 16
        $region16: #{_forward_impl.1} parent=11 // pred_fallthru
          _
        // Predicated region
        $region17: #{_forward_impl.1} parent=11 // pred_check
          %p309 = pneg %p87
        $region18: #{_forward_impl.1} parent=11 // pred_check_branch
          %311 = sbr.rel (%p309) target = $region20
        $region19: #{_forward_impl.1} parent=11 // pred_region
          _
        $region20: #{_forward_impl.1} parent=11 // pred_fallthru
          _
        // Predicated region
        $region21: #{_forward_impl.1} parent=11 // pred_check
          %p312 = pneg %p108
        $region22: #{_forward_impl.1} parent=11 // pred_check_branch
          %314 = sbr.rel (%p312) target = $region24
        $region23: #{_forward_impl.1} parent=11 // pred_region
          %s316 = ssub.s32 16384, 16384
          %317 = vsyncadd [#allocation5], %s316
          %s318 = sshll.u32 [#allocation4], 4
          %s319 = int_to_ptr.vmem [resolvable:$true] %s318
          %324 = dma.hbm_to_vmem [thread:$0]  %s3, 16384, %s319, [#allocation5], 256, 256, 16
        $region24: #{_forward_impl.1} parent=11 // pred_fallthru
          _
        // Predicated region
        $region25: #{_forward_impl.1} parent=11 // pred_check
          %p325 = pneg %p129
        $region26: #{_forward_impl.1} parent=11 // pred_check_branch
          %327 = sbr.rel (%p325) target = $region28
        $region27: #{_forward_impl.1} parent=11 // pred_region
          _
        $region28: #{_forward_impl.1} parent=11 // pred_fallthru
          _
        // Predicated region
        $region29: #{_forward_impl.1} parent=11 // pred_check
          %p328 = pneg %p150
        $region30: #{_forward_impl.1} parent=11 // pred_check_branch
          %330 = sbr.rel (%p328) target = $region32
        $region31: #{_forward_impl.1} parent=11 // pred_region
          %s332 = ssub.s32 16384, 16384
          %333 = vsyncadd [#allocation5], %s332
          %s334 = sshll.u32 [#allocation6], 4
          %s335 = int_to_ptr.vmem [resolvable:$true] %s334
          %340 = dma.hbm_to_vmem [thread:$0]  %s5, 16384, %s335, [#allocation5], 256, 256, 16
        $region32: #{_forward_impl.1} parent=11 // pred_fallthru
          _
        // Predicated region
        $region33: #{_forward_impl.1} parent=11 // pred_check
          %p341 = pneg %p171
        $region34: #{_forward_impl.1} parent=11 // pred_check_branch
          %343 = sbr.rel (%p341) target = $region36
        $region35: #{_forward_impl.1} parent=11 // pred_region
          _
        $region36: #{_forward_impl.1} parent=11 // pred_fallthru
          _
        // Predicated region
        $region37: #{_forward_impl.1} parent=11 // pred_check
          %p344 = pneg %p192
        $region38: #{_forward_impl.1} parent=11 // pred_check_branch
          %346 = sbr.rel (%p344) target = $region40
        $region39: #{_forward_impl.1} parent=11 // pred_region
          _
        $region40: #{_forward_impl.1} parent=11 // pred_fallthru
          _
        // Predicated region
        $region41: #{_forward_impl.1} parent=11 // pred_check
          %p347 = pneg %p213
        $region42: #{_forward_impl.1} parent=11 // pred_check_branch
          %349 = sbr.rel (%p347) target = $region44
        $region43: #{_forward_impl.1} parent=11 // pred_region
          _
        $region44: #{_forward_impl.1} parent=11 // pred_fallthru
          _
        // Predicated region
        $region45: #{_forward_impl.1} parent=11 // pred_check
          %p350 = pneg %p234
        $region46: #{_forward_impl.1} parent=11 // pred_check_branch
          %352 = sbr.rel (%p350) target = $region48
        $region47: #{_forward_impl.1} parent=11 // pred_region
          _
        $region48: #{_forward_impl.1} parent=11 // pred_fallthru
          _
        // Predicated region
        $region49: #{_forward_impl.1} parent=11 // pred_check
          %p353 = pneg %p255
        $region50: #{_forward_impl.1} parent=11 // pred_check_branch
          %355 = sbr.rel (%p353) target = $region52
        $region51: #{_forward_impl.1} parent=11 // pred_region
          _
        $region52: #{_forward_impl.1} parent=11 // pred_fallthru
          _
      $region12: #{_forward_impl.1} parent=5 // pred_fallthru
        _
      %p356 = scmp.lt.s32.totalorder %s19, 2
      // Predicated region
      $region53: #{_forward_impl.1} parent=5 // pred_check
        %p357 = pneg %p356
      $region54: #{_forward_impl.1} parent=5 // pred_check_branch
        %359 = sbr.rel (%p357) target = $region56
      $region55: #{_forward_impl.1} parent=5 // pred_region
        // Predicated region
        $region57: #{_forward_impl.1} parent=55 // pred_check
          %p360 = pneg %p39
        $region58: #{_forward_impl.1} parent=55 // pred_check_branch
          %362 = sbr.rel (%p360) target = $region60
        $region59: #{_forward_impl.1} parent=55 // pred_region
          %s363 = smul.u32 16, %s19
          %p364 = scmp.lt.s32.totalorder %s363, 31
          %s365 = scalar_select %p364, %s363, 31
          %s366 = smul.addr %s365, 8
          %s367 = scalar_lea.vmem %s0, %s366
          %s368 = smul.u32 16, %s19
        $region60: #{_forward_impl.1} parent=55 // pred_fallthru
          _
      $region56: #{_forward_impl.1} parent=5 // pred_fallthru
        _
      %p369 = scmp.le.s32.totalorder 1, %s19
      %p370 = scmp.lt.s32.totalorder %s19, 3
      %p371 = pnand %p369, %p370
      %p372 = pneg %p371
      // Predicated region
      $region61: #{_forward_impl.1} parent=5 // pred_check
        _
      $region62: #{_forward_impl.1} parent=5 // pred_check_branch
        %374 = sbr.rel (%p371) target = $region64
      $region63: #{_forward_impl.1} parent=5 // pred_region
        %s375 = ssub.s32 %s19, 1
        // Predicated region
        $region65: #{_forward_impl.1} parent=63 // pred_check
          %p376 = pneg %p66
        $region66: #{_forward_impl.1} parent=63 // pred_check_branch
          %378 = sbr.rel (%p376) target = $region68
        $region67: #{_forward_impl.1} parent=63 // pred_region
          %379 = dma.done [#allocation3], 4096
        $region68: #{_forward_impl.1} parent=63 // pred_fallthru
          _
        // Predicated region
        $region69: #{_forward_impl.1} parent=63 // pred_check
          %p380 = pneg %p108
        $region70: #{_forward_impl.1} parent=63 // pred_check_branch
          %382 = sbr.rel (%p380) target = $region72
        $region71: #{_forward_impl.1} parent=63 // pred_region
          %383 = dma.done [#allocation5], 16384
        $region72: #{_forward_impl.1} parent=63 // pred_fallthru
          _
        // Predicated region
        $region73: #{_forward_impl.1} parent=63 // pred_check
          %p384 = pneg %p150
        $region74: #{_forward_impl.1} parent=63 // pred_check_branch
          %386 = sbr.rel (%p384) target = $region76
        $region75: #{_forward_impl.1} parent=63 // pred_region
          %387 = dma.done [#allocation5], 16384
        $region76: #{_forward_impl.1} parent=63 // pred_fallthru
          _
        %s388 = smul.u32 16, %s24
        %p389 = scmp.lt.s32.totalorder %s388, 31
        %s390 = scalar_select %p389, %s388, 31
        %s391 = smul.addr %s390, 8
        %s392 = scalar_lea.vmem %s0, %s391
        %p393 = pneg %p45
        %p394 = pneg %p42
        %p395 = pneg %p66
        %p396 = pneg %p63
        %p397 = pneg %p87
        %p398 = pneg %p84
        %p399 = pneg %p108
        %p400 = pneg %p105
        %p401 = pneg %p129
        %p402 = pneg %p126
        %p403 = pneg %p150
        %p404 = pneg %p147
        %p405 = pneg %p171
        %p406 = pneg %p168
        %p407 = pneg %p192
        %p408 = pneg %p189
        %p409 = pneg %p213
        %p410 = pneg %p210
        %p411 = pneg %p234
        %p412 = pneg %p231
        %p413 = pneg %p255
        %p414 = pneg %p252
        %p415 = pneg %p281
        %p416 = pneg %p278
        %s417 = smul.u32 16, %s24
        %p418 = scmp.lt.s32.totalorder %s417, 31
        %s419 = scalar_select %p418, %s417, 31
        %s420 = smul.addr %s419, 8
        %s421 = scalar_lea.vmem %s11, %s420
        %s422 = smul.u32 16, %s24
        %p423 = scmp.lt.s32.totalorder %s422, 31
        %s424 = scalar_select %p423, %s422, 31
        %s425 = smul.addr %s424, 8
        %s426 = scalar_lea.vmem %s0, %s425
        %s427 = smul.u32 16, %s24
        %s428 = smul.u32 16, %s24
        %p429 = scmp.lt.s32.totalorder %s428, 31
        %s430 = scalar_select %p429, %s428, 31
        %s431 = smul.addr %s430, 8
        %s432 = scalar_lea.vmem %s11, %s431
        %s433 = smul.u32 16, %s24
        %v435 = vld [vmem:[%s426] sm:$0xff]
        %v436 = vld [vmem:[%s426 + $0x8] sm:$0xff]
        %v437 = vld [vmem:[%s426 + $0x10] sm:$0xff]
        %v438 = vld [vmem:[%s426 + $0x18] sm:$0xff]
        %v439 = vld [vmem:[%s426 + $0x20] sm:$0xff]
        %v440 = vld [vmem:[%s426 + $0x28] sm:$0xff]
        %v441 = vld [vmem:[%s426 + $0x30] sm:$0xff]
        %v442 = vld [vmem:[%s426 + $0x38] sm:$0xff]
        %v443 = vld [vmem:[%s426 + $0x40] sm:$0xff]
        %v444 = vld [vmem:[%s426 + $0x48] sm:$0xff]
        %v445 = vld [vmem:[%s426 + $0x50] sm:$0xff]
        %v446 = vld [vmem:[%s426 + $0x58] sm:$0xff]
        %v447 = vld [vmem:[%s426 + $0x60] sm:$0xff]
        %v448 = vld [vmem:[%s426 + $0x68] sm:$0xff]
        %v449 = vld [vmem:[%s426 + $0x70] sm:$0xff]
        %v450 = vld [vmem:[%s426 + $0x78] sm:$0xff]
        %v451 = vpack.c.bf16 %v436, %v435
        %v452 = vpack.c.bf16 %v438, %v437
        %v453 = vpack.c.bf16 %v440, %v439
        %v454 = vpack.c.bf16 %v442, %v441
        %v455 = vpack.c.bf16 %v444, %v443
        %v456 = vpack.c.bf16 %v446, %v445
        %v457 = vpack.c.bf16 %v448, %v447
        %v458 = vpack.c.bf16 %v450, %v449
        %v459 = vld [vmem:[#allocation2] sm:$0xff]
        %v460 = vld [vmem:[#allocation2 + $0x8] sm:$0xff]
        %v461 = vld [vmem:[#allocation2 + $0x10] sm:$0xff]
        %v462 = vld [vmem:[#allocation2 + $0x18] sm:$0xff]
        %v463 = vld [vmem:[#allocation2 + $0x20] sm:$0xff]
        %v464 = vld [vmem:[#allocation2 + $0x28] sm:$0xff]
        %v465 = vld [vmem:[#allocation2 + $0x30] sm:$0xff]
        %v466 = vld [vmem:[#allocation2 + $0x38] sm:$0xff]
        %v467 = vld [vmem:[#allocation2 + $0x40] sm:$0xff]
        %v468 = vld [vmem:[#allocation2 + $0x48] sm:$0xff]
        %v469 = vld [vmem:[#allocation2 + $0x50] sm:$0xff]
        %v470 = vld [vmem:[#allocation2 + $0x58] sm:$0xff]
        %v471 = vld [vmem:[#allocation2 + $0x60] sm:$0xff]
        %v472 = vld [vmem:[#allocation2 + $0x68] sm:$0xff]
        %v473 = vld [vmem:[#allocation2 + $0x70] sm:$0xff]
        %v474 = vld [vmem:[#allocation2 + $0x78] sm:$0xff]
        %v475 = vld [vmem:[#allocation2 + $0x80] sm:$0xff]
        %v476 = vld [vmem:[#allocation2 + $0x88] sm:$0xff]
        %v477 = vld [vmem:[#allocation2 + $0x90] sm:$0xff]
        %v478 = vld [vmem:[#allocation2 + $0x98] sm:$0xff]
        %v479 = vld [vmem:[#allocation2 + $0xa0] sm:$0xff]
        %v480 = vld [vmem:[#allocation2 + $0xa8] sm:$0xff]
        %v481 = vld [vmem:[#allocation2 + $0xb0] sm:$0xff]
        %v482 = vld [vmem:[#allocation2 + $0xb8] sm:$0xff]
        %v483 = vld [vmem:[#allocation2 + $0xc0] sm:$0xff]
        %v484 = vld [vmem:[#allocation2 + $0xc8] sm:$0xff]
        %v485 = vld [vmem:[#allocation2 + $0xd0] sm:$0xff]
        %v486 = vld [vmem:[#allocation2 + $0xd8] sm:$0xff]
        %v487 = vld [vmem:[#allocation2 + $0xe0] sm:$0xff]
        %v488 = vld [vmem:[#allocation2 + $0xe8] sm:$0xff]
        %v489 = vld [vmem:[#allocation2 + $0xf0] sm:$0xff]
        %v490 = vld [vmem:[#allocation2 + $0xf8] sm:$0xff]
        %v491 = vld [vmem:[%s2] sm:$0xf]
        %v493 = vlaneseq
        %v494 = vshrl.u32 %v493, 7
        %v495 = vsub.s32 0, %v494
        %v496 = vrot.slane %v491, %v495
        %v497 = vlaneseq
        %v498 = vshrl.u32 %v497, 7
        %v499 = vsub.s32 1, %v498
        %v500 = vrot.slane %v491, %v499
        %v501 = vlaneseq
        %v502 = vshrl.u32 %v501, 7
        %v503 = vsub.s32 2, %v502
        %v504 = vrot.slane %v491, %v503
        %v505 = vlaneseq
        %v506 = vshrl.u32 %v505, 7
        %v507 = vsub.s32 3, %v506
        %v508 = vrot.slane %v491, %v507
        %v545 = vunpack.c.l.b16 %v459
        %v546 = vunpack.c.h.b16 %v459
        %v547 = vunpack.c.l.b16 %v460
        %v548 = vunpack.c.h.b16 %v460
        %v549 = vunpack.c.l.b16 %v461
        %v550 = vunpack.c.h.b16 %v461
        %v551 = vunpack.c.l.b16 %v462
        %v552 = vunpack.c.h.b16 %v462
        %v553 = vunpack.c.l.b16 %v463
        %v554 = vunpack.c.h.b16 %v463
        %v555 = vunpack.c.l.b16 %v464
        %v556 = vunpack.c.h.b16 %v464
        %v557 = vunpack.c.l.b16 %v465
        %v558 = vunpack.c.h.b16 %v465
        %v559 = vunpack.c.l.b16 %v466
        %v560 = vunpack.c.h.b16 %v466
        %v561 = vunpack.c.l.b16 %v467
        %v562 = vunpack.c.h.b16 %v467
        %v563 = vunpack.c.l.b16 %v468
        %v564 = vunpack.c.h.b16 %v468
        %v565 = vunpack.c.l.b16 %v469
        %v566 = vunpack.c.h.b16 %v469
        %v567 = vunpack.c.l.b16 %v470
        %v568 = vunpack.c.h.b16 %v470
        %v569 = vunpack.c.l.b16 %v471
        %v570 = vunpack.c.h.b16 %v471
        %v571 = vunpack.c.l.b16 %v472
        %v572 = vunpack.c.h.b16 %v472
        %v573 = vunpack.c.l.b16 %v473
        %v574 = vunpack.c.h.b16 %v473
        %v575 = vunpack.c.l.b16 %v474
        %v576 = vunpack.c.h.b16 %v474
        %v577 = vunpack.c.l.b16 %v475
        %v578 = vunpack.c.h.b16 %v475
        %v579 = vunpack.c.l.b16 %v476
        %v580 = vunpack.c.h.b16 %v476
        %v581 = vunpack.c.l.b16 %v477
        %v582 = vunpack.c.h.b16 %v477
        %v583 = vunpack.c.l.b16 %v478
        %v584 = vunpack.c.h.b16 %v478
        %v585 = vunpack.c.l.b16 %v479
        %v586 = vunpack.c.h.b16 %v479
        %v587 = vunpack.c.l.b16 %v480
        %v588 = vunpack.c.h.b16 %v480
        %v589 = vunpack.c.l.b16 %v481
        %v590 = vunpack.c.h.b16 %v481
        %v591 = vunpack.c.l.b16 %v482
        %v592 = vunpack.c.h.b16 %v482
        %v593 = vunpack.c.l.b16 %v483
        %v594 = vunpack.c.h.b16 %v483
        %v595 = vunpack.c.l.b16 %v484
        %v596 = vunpack.c.h.b16 %v484
        %v597 = vunpack.c.l.b16 %v485
        %v598 = vunpack.c.h.b16 %v485
        %v599 = vunpack.c.l.b16 %v486
        %v600 = vunpack.c.h.b16 %v486
        %v601 = vunpack.c.l.b16 %v487
        %v602 = vunpack.c.h.b16 %v487
        %v603 = vunpack.c.l.b16 %v488
        %v604 = vunpack.c.h.b16 %v488
        %v605 = vunpack.c.l.b16 %v489
        %v606 = vunpack.c.h.b16 %v489
        %v607 = vunpack.c.l.b16 %v490
        %v608 = vunpack.c.h.b16 %v490
        %v609 = vpack.c.b16 %v549, %v545
        %v610 = vpack.c.b16 %v550, %v546
        %v611 = vpack.c.b16 %v551, %v547
        %v612 = vpack.c.b16 %v552, %v548
        %v613 = vpack.c.b16 %v557, %v553
        %v614 = vpack.c.b16 %v558, %v554
        %v615 = vpack.c.b16 %v559, %v555
        %v616 = vpack.c.b16 %v560, %v556
        %v617 = vpack.c.b16 %v565, %v561
        %v618 = vpack.c.b16 %v566, %v562
        %v619 = vpack.c.b16 %v567, %v563
        %v620 = vpack.c.b16 %v568, %v564
        %v621 = vpack.c.b16 %v573, %v569
        %v622 = vpack.c.b16 %v574, %v570
        %v623 = vpack.c.b16 %v575, %v571
        %v624 = vpack.c.b16 %v576, %v572
        %v625 = vpack.c.b16 %v581, %v577
        %v626 = vpack.c.b16 %v582, %v578
        %v627 = vpack.c.b16 %v583, %v579
        %v628 = vpack.c.b16 %v584, %v580
        %v629 = vpack.c.b16 %v589, %v585
        %v630 = vpack.c.b16 %v590, %v586
        %v631 = vpack.c.b16 %v591, %v587
        %v632 = vpack.c.b16 %v592, %v588
        %v633 = vpack.c.b16 %v597, %v593
        %v634 = vpack.c.b16 %v598, %v594
        %v635 = vpack.c.b16 %v599, %v595
        %v636 = vpack.c.b16 %v600, %v596
        %v637 = vpack.c.b16 %v605, %v601
        %v638 = vpack.c.b16 %v606, %v602
        %v639 = vpack.c.b16 %v607, %v603
        %v640 = vpack.c.b16 %v608, %v604
        %673 = vmatprep.subr.bf16.mxu0 %v610
        %674 = vmatpush1.bf16.msra.mxu0 %v609
        %675 = vmatprep.subr.bf16.mxu0 %v614
        %676 = vmatpush1.bf16.msra.mxu0 %v613
        %677 = vmatprep.subr.bf16.mxu0 %v618
        %678 = vmatpush1.bf16.msra.mxu0 %v617
        %679 = vmatprep.subr.bf16.mxu0 %v622
        %680 = vmatpush1.bf16.msra.mxu0 %v621
        %681 = vmatprep.subr.bf16.mxu0 %v626
        %682 = vmatpush1.bf16.msra.mxu0 %v625
        %683 = vmatprep.subr.bf16.mxu0 %v630
        %684 = vmatpush1.bf16.msra.mxu0 %v629
        %685 = vmatprep.subr.bf16.mxu0 %v634
        %686 = vmatpush1.bf16.msra.mxu0 %v633
        %687 = vmatprep.subr.bf16.mxu0 %v638
        %688 = vmatpush1.bf16.msra.mxu0 %v637
        %689 = vmatprep.subr.bf16.mxu0 0
        %690 = vmatpush1.bf16.msra.mxu0 0
        %691 = vmatprep.subr.bf16.mxu0 0
        %692 = vmatpush1.bf16.msra.mxu0 0
        %693 = vmatprep.subr.bf16.mxu0 0
        %694 = vmatpush1.bf16.msra.mxu0 0
        %695 = vmatprep.subr.bf16.mxu0 0
        %696 = vmatpush1.bf16.msra.mxu0 0
        %697 = vmatprep.subr.bf16.mxu0 0
        %698 = vmatpush1.bf16.msra.mxu0 0
        %699 = vmatprep.subr.bf16.mxu0 0
        %700 = vmatpush1.bf16.msra.mxu0 0
        %701 = vmatprep.subr.bf16.mxu0 0
        %702 = vmatpush1.bf16.msra.mxu0 0
        %703 = vmatprep.subr.bf16.mxu0 0
        %704 = vmatpush1.bf16.msra.mxu0 0
        %705 = vmatprep.mubr.bf16.mxu0 0
        %706 = vmatmul.mubr.bf16.gmra.mrb[0].mxu0 %v451
        %v707 = vpop.f32.mrb[0].mxu0
        %v708 = vadd.f32 %v496, %v707
        %v709 = vpop.f32.mrb[0].mxu0
        %v710 = vadd.f32 %v500, %v709
        %v711 = vpop.f32.mrb[0].mxu0
        %v712 = vadd.f32 %v496, %v711
        %v713 = vpop.f32.mrb[0].mxu0
        %v714 = vadd.f32 %v500, %v713
        %715 = vmatprep.mubr.bf16.mxu0 0
        %716 = vmatmul.mubr.bf16.gmra.mrb[0].mxu0 %v452
        %v717 = vpop.f32.mrb[0].mxu0
        %v718 = vadd.f32 %v496, %v717
        %v719 = vpop.f32.mrb[0].mxu0
        %v720 = vadd.f32 %v500, %v719
        %v721 = vpop.f32.mrb[0].mxu0
        %v722 = vadd.f32 %v496, %v721
        %v723 = vpop.f32.mrb[0].mxu0
        %v724 = vadd.f32 %v500, %v723
        %725 = vmatprep.mubr.bf16.mxu0 0
        %726 = vmatmul.mubr.bf16.gmra.mrb[0].mxu0 %v453
        %v727 = vpop.f32.mrb[0].mxu0
        %v728 = vadd.f32 %v496, %v727
        %v729 = vpop.f32.mrb[0].mxu0
        %v730 = vadd.f32 %v500, %v729
        %v731 = vpop.f32.mrb[0].mxu0
        %v732 = vadd.f32 %v496, %v731
        %v733 = vpop.f32.mrb[0].mxu0
        %v734 = vadd.f32 %v500, %v733
        %735 = vmatprep.mubr.bf16.mxu0 0
        %736 = vmatmul.mubr.bf16.gmra.mrb[0].mxu0 %v454
        %v737 = vpop.f32.mrb[0].mxu0
        %v738 = vadd.f32 %v496, %v737
        %v739 = vpop.f32.mrb[0].mxu0
        %v740 = vadd.f32 %v500, %v739
        %v741 = vpop.f32.mrb[0].mxu0
        %v742 = vadd.f32 %v496, %v741
        %v743 = vpop.f32.mrb[0].mxu0
        %v744 = vadd.f32 %v500, %v743
        %745 = vmatprep.mubr.bf16.mxu0 0
        %746 = vmatmul.mubr.bf16.gmra.mrb[0].mxu0 %v455
        %v747 = vpop.f32.mrb[0].mxu0
        %v748 = vadd.f32 %v496, %v747
        %v749 = vpop.f32.mrb[0].mxu0
        %v750 = vadd.f32 %v500, %v749
        %v751 = vpop.f32.mrb[0].mxu0
        %v752 = vadd.f32 %v496, %v751
        %v753 = vpop.f32.mrb[0].mxu0
        %v754 = vadd.f32 %v500, %v753
        %755 = vmatprep.mubr.bf16.mxu0 0
        %756 = vmatmul.mubr.bf16.gmra.mrb[0].mxu0 %v456
        %v757 = vpop.f32.mrb[0].mxu0
        %v758 = vadd.f32 %v496, %v757
        %v759 = vpop.f32.mrb[0].mxu0
        %v760 = vadd.f32 %v500, %v759
        %v761 = vpop.f32.mrb[0].mxu0
        %v762 = vadd.f32 %v496, %v761
        %v763 = vpop.f32.mrb[0].mxu0
        %v764 = vadd.f32 %v500, %v763
        %765 = vmatprep.mubr.bf16.mxu0 0
        %766 = vmatmul.mubr.bf16.gmra.mrb[0].mxu0 %v457
        %v767 = vpop.f32.mrb[0].mxu0
        %v768 = vadd.f32 %v496, %v767
        %v769 = vpop.f32.mrb[0].mxu0
        %v770 = vadd.f32 %v500, %v769
        %v771 = vpop.f32.mrb[0].mxu0
        %v772 = vadd.f32 %v496, %v771
        %v773 = vpop.f32.mrb[0].mxu0
        %v774 = vadd.f32 %v500, %v773
        %775 = vmatprep.mubr.bf16.mxu0 0
        %776 = vmatmul.mubr.bf16.gmra.mrb[0].mxu0 %v458
        %v777 = vpop.f32.mrb[0].mxu0
        %v778 = vadd.f32 %v496, %v777
        %v779 = vpop.f32.mrb[0].mxu0
        %v780 = vadd.f32 %v500, %v779
        %v781 = vpop.f32.mrb[0].mxu0
        %v782 = vadd.f32 %v496, %v781
        %v783 = vpop.f32.mrb[0].mxu0
        %v784 = vadd.f32 %v500, %v783
        %785 = vdwg.mxu0
        %786 = vmatprep.subr.bf16.mxu0 %v612
        %787 = vmatpush1.bf16.msra.mxu0 %v611
        %788 = vmatprep.subr.bf16.mxu0 %v616
        %789 = vmatpush1.bf16.msra.mxu0 %v615
        %790 = vmatprep.subr.bf16.mxu0 %v620
        %791 = vmatpush1.bf16.msra.mxu0 %v619
        %792 = vmatprep.subr.bf16.mxu0 %v624
        %793 = vmatpush1.bf16.msra.mxu0 %v623
        %794 = vmatprep.subr.bf16.mxu0 %v628
        %795 = vmatpush1.bf16.msra.mxu0 %v627
        %796 = vmatprep.subr.bf16.mxu0 %v632
        %797 = vmatpush1.bf16.msra.mxu0 %v631
        %798 = vmatprep.subr.bf16.mxu0 %v636
        %799 = vmatpush1.bf16.msra.mxu0 %v635
        %800 = vmatprep.subr.bf16.mxu0 %v640
        %801 = vmatpush1.bf16.msra.mxu0 %v639
        %802 = vmatprep.subr.bf16.mxu0 0
        %803 = vmatpush1.bf16.msra.mxu0 0
        %804 = vmatprep.subr.bf16.mxu0 0
        %805 = vmatpush1.bf16.msra.mxu0 0
        %806 = vmatprep.subr.bf16.mxu0 0
        %807 = vmatpush1.bf16.msra.mxu0 0
        %808 = vmatprep.subr.bf16.mxu0 0
        %809 = vmatpush1.bf16.msra.mxu0 0
        %810 = vmatprep.subr.bf16.mxu0 0
        %811 = vmatpush1.bf16.msra.mxu0 0
        %812 = vmatprep.subr.bf16.mxu0 0
        %813 = vmatpush1.bf16.msra.mxu0 0
        %814 = vmatprep.subr.bf16.mxu0 0
        %815 = vmatpush1.bf16.msra.mxu0 0
        %816 = vmatprep.subr.bf16.mxu0 0
        %817 = vmatpush1.bf16.msra.mxu0 0
        %818 = vmatprep.mubr.bf16.mxu0 0
        %819 = vmatmul.mubr.bf16.gmra.mrb[0].mxu0 %v451
        %v820 = vpop.f32.mrb[0].mxu0
        %v821 = vadd.f32 %v504, %v820
        %v822 = vpop.f32.mrb[0].mxu0
        %v823 = vadd.f32 %v508, %v822
        %v824 = vpop.f32.mrb[0].mxu0
        %v825 = vadd.f32 %v504, %v824
        %v826 = vpop.f32.mrb[0].mxu0
        %v827 = vadd.f32 %v508, %v826
        %828 = vmatprep.mubr.bf16.mxu0 0
        %829 = vmatmul.mubr.bf16.gmra.mrb[0].mxu0 %v452
        %v830 = vpop.f32.mrb[0].mxu0
        %v831 = vadd.f32 %v504, %v830
        %v832 = vpop.f32.mrb[0].mxu0
        %v833 = vadd.f32 %v508, %v832
        %v834 = vpop.f32.mrb[0].mxu0
        %v835 = vadd.f32 %v504, %v834
        %v836 = vpop.f32.mrb[0].mxu0
        %v837 = vadd.f32 %v508, %v836
        %838 = vmatprep.mubr.bf16.mxu0 0
        %839 = vmatmul.mubr.bf16.gmra.mrb[0].mxu0 %v453
        %v840 = vpop.f32.mrb[0].mxu0
        %v841 = vadd.f32 %v504, %v840
        %v842 = vpop.f32.mrb[0].mxu0
        %v843 = vadd.f32 %v508, %v842
        %v844 = vpop.f32.mrb[0].mxu0
        %v845 = vadd.f32 %v504, %v844
        %v846 = vpop.f32.mrb[0].mxu0
        %v847 = vadd.f32 %v508, %v846
        %848 = vmatprep.mubr.bf16.mxu0 0
        %849 = vmatmul.mubr.bf16.gmra.mrb[0].mxu0 %v454
        %v850 = vpop.f32.mrb[0].mxu0
        %v851 = vadd.f32 %v504, %v850
        %v852 = vpop.f32.mrb[0].mxu0
        %v853 = vadd.f32 %v508, %v852
        %v854 = vpop.f32.mrb[0].mxu0
        %v855 = vadd.f32 %v504, %v854
        %v856 = vpop.f32.mrb[0].mxu0
        %v857 = vadd.f32 %v508, %v856
        %858 = vmatprep.mubr.bf16.mxu0 0
        %859 = vmatmul.mubr.bf16.gmra.mrb[0].mxu0 %v455
        %v860 = vpop.f32.mrb[0].mxu0
        %v861 = vadd.f32 %v504, %v860
        %v862 = vpop.f32.mrb[0].mxu0
        %v863 = vadd.f32 %v508, %v862
        %v864 = vpop.f32.mrb[0].mxu0
        %v865 = vadd.f32 %v504, %v864
        %v866 = vpop.f32.mrb[0].mxu0
        %v867 = vadd.f32 %v508, %v866
        %868 = vmatprep.mubr.bf16.mxu0 0
        %869 = vmatmul.mubr.bf16.gmra.mrb[0].mxu0 %v456
        %v870 = vpop.f32.mrb[0].mxu0
        %v871 = vadd.f32 %v504, %v870
        %v872 = vpop.f32.mrb[0].mxu0
        %v873 = vadd.f32 %v508, %v872
        %v874 = vpop.f32.mrb[0].mxu0
        %v875 = vadd.f32 %v504, %v874
        %v876 = vpop.f32.mrb[0].mxu0
        %v877 = vadd.f32 %v508, %v876
        %878 = vmatprep.mubr.bf16.mxu0 0
        %879 = vmatmul.mubr.bf16.gmra.mrb[0].mxu0 %v457
        %v880 = vpop.f32.mrb[0].mxu0
        %v881 = vadd.f32 %v504, %v880
        %v882 = vpop.f32.mrb[0].mxu0
        %v883 = vadd.f32 %v508, %v882
        %v884 = vpop.f32.mrb[0].mxu0
        %v885 = vadd.f32 %v504, %v884
        %v886 = vpop.f32.mrb[0].mxu0
        %v887 = vadd.f32 %v508, %v886
        %888 = vmatprep.mubr.bf16.mxu0 0
        %889 = vmatmul.mubr.bf16.gmra.mrb[0].mxu0 %v458
        %v890 = vpop.f32.mrb[0].mxu0
        %v891 = vadd.f32 %v504, %v890
        %v892 = vpop.f32.mrb[0].mxu0
        %v893 = vadd.f32 %v508, %v892
        %v894 = vpop.f32.mrb[0].mxu0
        %v895 = vadd.f32 %v504, %v894
        %v896 = vpop.f32.mrb[0].mxu0
        %v897 = vadd.f32 %v508, %v896
        %898 = vdwg.mxu0
        %v899 = vpack.c.bf16 %v712, %v708
        %v900 = vpack.c.bf16 %v714, %v710
        %v901 = vpack.c.bf16 %v825, %v821
        %v902 = vpack.c.bf16 %v827, %v823
        %v903 = vpack.c.bf16 %v722, %v718
        %v904 = vpack.c.bf16 %v724, %v720
        %v905 = vpack.c.bf16 %v835, %v831
        %v906 = vpack.c.bf16 %v837, %v833
        %v907 = vpack.c.bf16 %v732, %v728
        %v908 = vpack.c.bf16 %v734, %v730
        %v909 = vpack.c.bf16 %v845, %v841
        %v910 = vpack.c.bf16 %v847, %v843
        %v911 = vpack.c.bf16 %v742, %v738
        %v912 = vpack.c.bf16 %v744, %v740
        %v913 = vpack.c.bf16 %v855, %v851
        %v914 = vpack.c.bf16 %v857, %v853
        %v915 = vpack.c.bf16 %v752, %v748
        %v916 = vpack.c.bf16 %v754, %v750
        %v917 = vpack.c.bf16 %v865, %v861
        %v918 = vpack.c.bf16 %v867, %v863
        %v919 = vpack.c.bf16 %v762, %v758
        %v920 = vpack.c.bf16 %v764, %v760
        %v921 = vpack.c.bf16 %v875, %v871
        %v922 = vpack.c.bf16 %v877, %v873
        %v923 = vpack.c.bf16 %v772, %v768
        %v924 = vpack.c.bf16 %v774, %v770
        %v925 = vpack.c.bf16 %v885, %v881
        %v926 = vpack.c.bf16 %v887, %v883
        %v927 = vpack.c.bf16 %v782, %v778
        %v928 = vpack.c.bf16 %v784, %v780
        %v929 = vpack.c.bf16 %v895, %v891
        %v930 = vpack.c.bf16 %v897, %v893
        %v931 = vmax.bf16 %v899, 0
        %v932 = vmax.bf16 %v900, 0
        %v933 = vmax.bf16 %v901, 0
        %v934 = vmax.bf16 %v902, 0
        %v935 = vmax.bf16 %v903, 0
        %v936 = vmax.bf16 %v904, 0
        %v937 = vmax.bf16 %v905, 0
        %v938 = vmax.bf16 %v906, 0
        %v939 = vmax.bf16 %v907, 0
        %v940 = vmax.bf16 %v908, 0
        %v941 = vmax.bf16 %v909, 0
        %v942 = vmax.bf16 %v910, 0
        %v943 = vmax.bf16 %v911, 0
        %v944 = vmax.bf16 %v912, 0
        %v945 = vmax.bf16 %v913, 0
        %v946 = vmax.bf16 %v914, 0
        %v947 = vmax.bf16 %v915, 0
        %v948 = vmax.bf16 %v916, 0
        %v949 = vmax.bf16 %v917, 0
        %v950 = vmax.bf16 %v918, 0
        %v951 = vmax.bf16 %v919, 0
        %v952 = vmax.bf16 %v920, 0
        %v953 = vmax.bf16 %v921, 0
        %v954 = vmax.bf16 %v922, 0
        %v955 = vmax.bf16 %v923, 0
        %v956 = vmax.bf16 %v924, 0
        %v957 = vmax.bf16 %v925, 0
        %v958 = vmax.bf16 %v926, 0
        %v959 = vmax.bf16 %v927, 0
        %v960 = vmax.bf16 %v928, 0
        %v961 = vmax.bf16 %v929, 0
        %v962 = vmax.bf16 %v930, 0
        %v963 = vld [vmem:[#allocation4] sm:$0xff]
        %v964 = vld [vmem:[#allocation4 + $0x8] sm:$0xff]
        %v965 = vld [vmem:[#allocation4 + $0x10] sm:$0xff]
        %v966 = vld [vmem:[#allocation4 + $0x18] sm:$0xff]
        %v967 = vld [vmem:[#allocation4 + $0x20] sm:$0xff]
        %v968 = vld [vmem:[#allocation4 + $0x28] sm:$0xff]
        %v969 = vld [vmem:[#allocation4 + $0x30] sm:$0xff]
        %v970 = vld [vmem:[#allocation4 + $0x38] sm:$0xff]
        %v971 = vld [vmem:[#allocation4 + $0x40] sm:$0xff]
        %v972 = vld [vmem:[#allocation4 + $0x48] sm:$0xff]
        %v973 = vld [vmem:[#allocation4 + $0x50] sm:$0xff]
        %v974 = vld [vmem:[#allocation4 + $0x58] sm:$0xff]
        %v975 = vld [vmem:[#allocation4 + $0x60] sm:$0xff]
        %v976 = vld [vmem:[#allocation4 + $0x68] sm:$0xff]
        %v977 = vld [vmem:[#allocation4 + $0x70] sm:$0xff]
        %v978 = vld [vmem:[#allocation4 + $0x78] sm:$0xff]
        %v979 = vld [vmem:[#allocation4 + $0x80] sm:$0xff]
        %v980 = vld [vmem:[#allocation4 + $0x88] sm:$0xff]
        %v981 = vld [vmem:[#allocation4 + $0x90] sm:$0xff]
        %v982 = vld [vmem:[#allocation4 + $0x98] sm:$0xff]
        %v983 = vld [vmem:[#allocation4 + $0xa0] sm:$0xff]
        %v984 = vld [vmem:[#allocation4 + $0xa8] sm:$0xff]
        %v985 = vld [vmem:[#allocation4 + $0xb0] sm:$0xff]
        %v986 = vld [vmem:[#allocation4 + $0xb8] sm:$0xff]
        %v987 = vld [vmem:[#allocation4 + $0xc0] sm:$0xff]
        %v988 = vld [vmem:[#allocation4 + $0xc8] sm:$0xff]
        %v989 = vld [vmem:[#allocation4 + $0xd0] sm:$0xff]
        %v990 = vld [vmem:[#allocation4 + $0xd8] sm:$0xff]
        %v991 = vld [vmem:[#allocation4 + $0xe0] sm:$0xff]
        %v992 = vld [vmem:[#allocation4 + $0xe8] sm:$0xff]
        %v993 = vld [vmem:[#allocation4 + $0xf0] sm:$0xff]
        %v994 = vld [vmem:[#allocation4 + $0xf8] sm:$0xff]
        %v995 = vld [vmem:[#allocation4 + $0x100] sm:$0xff]
        %v996 = vld [vmem:[#allocation4 + $0x108] sm:$0xff]
        %v997 = vld [vmem:[#allocation4 + $0x110] sm:$0xff]
        %v998 = vld [vmem:[#allocation4 + $0x118] sm:$0xff]
        %v999 = vld [vmem:[#allocation4 + $0x120] sm:$0xff]
        %v1000 = vld [vmem:[#allocation4 + $0x128] sm:$0xff]
        %v1001 = vld [vmem:[#allocation4 + $0x130] sm:$0xff]
        %v1002 = vld [vmem:[#allocation4 + $0x138] sm:$0xff]
        %v1003 = vld [vmem:[#allocation4 + $0x140] sm:$0xff]
        %v1004 = vld [vmem:[#allocation4 + $0x148] sm:$0xff]
        %v1005 = vld [vmem:[#allocation4 + $0x150] sm:$0xff]
        %v1006 = vld [vmem:[#allocation4 + $0x158] sm:$0xff]
        %v1007 = vld [vmem:[#allocation4 + $0x160] sm:$0xff]
        %v1008 = vld [vmem:[#allocation4 + $0x168] sm:$0xff]
        %v1009 = vld [vmem:[#allocation4 + $0x170] sm:$0xff]
        %v1010 = vld [vmem:[#allocation4 + $0x178] sm:$0xff]
        %v1011 = vld [vmem:[#allocation4 + $0x180] sm:$0xff]
        %v1012 = vld [vmem:[#allocation4 + $0x188] sm:$0xff]
        %v1013 = vld [vmem:[#allocation4 + $0x190] sm:$0xff]
        %v1014 = vld [vmem:[#allocation4 + $0x198] sm:$0xff]
        %v1015 = vld [vmem:[#allocation4 + $0x1a0] sm:$0xff]
        %v1016 = vld [vmem:[#allocation4 + $0x1a8] sm:$0xff]
        %v1017 = vld [vmem:[#allocation4 + $0x1b0] sm:$0xff]
        %v1018 = vld [vmem:[#allocation4 + $0x1b8] sm:$0xff]
        %v1019 = vld [vmem:[#allocation4 + $0x1c0] sm:$0xff]
        %v1020 = vld [vmem:[#allocation4 + $0x1c8] sm:$0xff]
        %v1021 = vld [vmem:[#allocation4 + $0x1d0] sm:$0xff]
        %v1022 = vld [vmem:[#allocation4 + $0x1d8] sm:$0xff]
        %v1023 = vld [vmem:[#allocation4 + $0x1e0] sm:$0xff]
        %v1024 = vld [vmem:[#allocation4 + $0x1e8] sm:$0xff]
        %v1025 = vld [vmem:[#allocation4 + $0x1f0] sm:$0xff]
        %v1026 = vld [vmem:[#allocation4 + $0x1f8] sm:$0xff]
        %v1027 = vld [vmem:[#allocation4 + $0x200] sm:$0xff]
        %v1028 = vld [vmem:[#allocation4 + $0x208] sm:$0xff]
        %v1029 = vld [vmem:[#allocation4 + $0x210] sm:$0xff]
        %v1030 = vld [vmem:[#allocation4 + $0x218] sm:$0xff]
        %v1031 = vld [vmem:[#allocation4 + $0x220] sm:$0xff]
        %v1032 = vld [vmem:[#allocation4 + $0x228] sm:$0xff]
        %v1033 = vld [vmem:[#allocation4 + $0x230] sm:$0xff]
        %v1034 = vld [vmem:[#allocation4 + $0x238] sm:$0xff]
        %v1035 = vld [vmem:[#allocation4 + $0x240] sm:$0xff]
        %v1036 = vld [vmem:[#allocation4 + $0x248] sm:$0xff]
        %v1037 = vld [vmem:[#allocation4 + $0x250] sm:$0xff]
        %v1038 = vld [vmem:[#allocation4 + $0x258] sm:$0xff]
        %v1039 = vld [vmem:[#allocation4 + $0x260] sm:$0xff]
        %v1040 = vld [vmem:[#allocation4 + $0x268] sm:$0xff]
        %v1041 = vld [vmem:[#allocation4 + $0x270] sm:$0xff]
        %v1042 = vld [vmem:[#allocation4 + $0x278] sm:$0xff]
        %v1043 = vld [vmem:[#allocation4 + $0x280] sm:$0xff]
        %v1044 = vld [vmem:[#allocation4 + $0x288] sm:$0xff]
        %v1045 = vld [vmem:[#allocation4 + $0x290] sm:$0xff]
        %v1046 = vld [vmem:[#allocation4 + $0x298] sm:$0xff]
        %v1047 = vld [vmem:[#allocation4 + $0x2a0] sm:$0xff]
        %v1048 = vld [vmem:[#allocation4 + $0x2a8] sm:$0xff]
        %v1049 = vld [vmem:[#allocation4 + $0x2b0] sm:$0xff]
        %v1050 = vld [vmem:[#allocation4 + $0x2b8] sm:$0xff]
        %v1051 = vld [vmem:[#allocation4 + $0x2c0] sm:$0xff]
        %v1052 = vld [vmem:[#allocation4 + $0x2c8] sm:$0xff]
        %v1053 = vld [vmem:[#allocation4 + $0x2d0] sm:$0xff]
        %v1054 = vld [vmem:[#allocation4 + $0x2d8] sm:$0xff]
        %v1055 = vld [vmem:[#allocation4 + $0x2e0] sm:$0xff]
        %v1056 = vld [vmem:[#allocation4 + $0x2e8] sm:$0xff]
        %v1057 = vld [vmem:[#allocation4 + $0x2f0] sm:$0xff]
        %v1058 = vld [vmem:[#allocation4 + $0x2f8] sm:$0xff]
        %v1059 = vld [vmem:[#allocation4 + $0x300] sm:$0xff]
        %v1060 = vld [vmem:[#allocation4 + $0x308] sm:$0xff]
        %v1061 = vld [vmem:[#allocation4 + $0x310] sm:$0xff]
        %v1062 = vld [vmem:[#allocation4 + $0x318] sm:$0xff]
        %v1063 = vld [vmem:[#allocation4 + $0x320] sm:$0xff]
        %v1064 = vld [vmem:[#allocation4 + $0x328] sm:$0xff]
        %v1065 = vld [vmem:[#allocation4 + $0x330] sm:$0xff]
        %v1066 = vld [vmem:[#allocation4 + $0x338] sm:$0xff]
        %v1067 = vld [vmem:[#allocation4 + $0x340] sm:$0xff]
        %v1068 = vld [vmem:[#allocation4 + $0x348] sm:$0xff]
        %v1069 = vld [vmem:[#allocation4 + $0x350] sm:$0xff]
        %v1070 = vld [vmem:[#allocation4 + $0x358] sm:$0xff]
        %v1071 = vld [vmem:[#allocation4 + $0x360] sm:$0xff]
        %v1072 = vld [vmem:[#allocation4 + $0x368] sm:$0xff]
        %v1073 = vld [vmem:[#allocation4 + $0x370] sm:$0xff]
        %v1074 = vld [vmem:[#allocation4 + $0x378] sm:$0xff]
        %v1075 = vld [vmem:[#allocation4 + $0x380] sm:$0xff]
        %v1076 = vld [vmem:[#allocation4 + $0x388] sm:$0xff]
        %v1077 = vld [vmem:[#allocation4 + $0x390] sm:$0xff]
        %v1078 = vld [vmem:[#allocation4 + $0x398] sm:$0xff]
        %v1079 = vld [vmem:[#allocation4 + $0x3a0] sm:$0xff]
        %v1080 = vld [vmem:[#allocation4 + $0x3a8] sm:$0xff]
        %v1081 = vld [vmem:[#allocation4 + $0x3b0] sm:$0xff]
        %v1082 = vld [vmem:[#allocation4 + $0x3b8] sm:$0xff]
        %v1083 = vld [vmem:[#allocation4 + $0x3c0] sm:$0xff]
        %v1084 = vld [vmem:[#allocation4 + $0x3c8] sm:$0xff]
        %v1085 = vld [vmem:[#allocation4 + $0x3d0] sm:$0xff]
        %v1086 = vld [vmem:[#allocation4 + $0x3d8] sm:$0xff]
        %v1087 = vld [vmem:[#allocation4 + $0x3e0] sm:$0xff]
        %v1088 = vld [vmem:[#allocation4 + $0x3e8] sm:$0xff]
        %v1089 = vld [vmem:[#allocation4 + $0x3f0] sm:$0xff]
        %v1090 = vld [vmem:[#allocation4 + $0x3f8] sm:$0xff]
        %v1091 = vld [vmem:[%s4] sm:$0xf]
        %v1093 = vlaneseq
        %v1094 = vshrl.u32 %v1093, 7
        %v1095 = vsub.s32 0, %v1094
        %v1096 = vrot.slane %v1091, %v1095
        %v1097 = vlaneseq
        %v1098 = vshrl.u32 %v1097, 7
        %v1099 = vsub.s32 1, %v1098
        %v1100 = vrot.slane %v1091, %v1099
        %v1101 = vlaneseq
        %v1102 = vshrl.u32 %v1101, 7
        %v1103 = vsub.s32 2, %v1102
        %v1104 = vrot.slane %v1091, %v1103
        %v1105 = vlaneseq
        %v1106 = vshrl.u32 %v1105, 7
        %v1107 = vsub.s32 3, %v1106
        %v1108 = vrot.slane %v1091, %v1107
        %v1241 = vunpack.c.l.b16 %v963
        %v1242 = vunpack.c.h.b16 %v963
        %v1243 = vunpack.c.l.b16 %v964
        %v1244 = vunpack.c.h.b16 %v964
        %v1245 = vunpack.c.l.b16 %v965
        %v1246 = vunpack.c.h.b16 %v965
        %v1247 = vunpack.c.l.b16 %v966
        %v1248 = vunpack.c.h.b16 %v966
        %v1249 = vunpack.c.l.b16 %v967
        %v1250 = vunpack.c.h.b16 %v967
        %v1251 = vunpack.c.l.b16 %v968
        %v1252 = vunpack.c.h.b16 %v968
        %v1253 = vunpack.c.l.b16 %v969
        %v1254 = vunpack.c.h.b16 %v969
        %v1255 = vunpack.c.l.b16 %v970
        %v1256 = vunpack.c.h.b16 %v970
        %v1257 = vunpack.c.l.b16 %v971
        %v1258 = vunpack.c.h.b16 %v971
        %v1259 = vunpack.c.l.b16 %v972
        %v1260 = vunpack.c.h.b16 %v972
        %v1261 = vunpack.c.l.b16 %v973
        %v1262 = vunpack.c.h.b16 %v973
        %v1263 = vunpack.c.l.b16 %v974
        %v1264 = vunpack.c.h.b16 %v974
        %v1265 = vunpack.c.l.b16 %v975
        %v1266 = vunpack.c.h.b16 %v975
        %v1267 = vunpack.c.l.b16 %v976
        %v1268 = vunpack.c.h.b16 %v976
        %v1269 = vunpack.c.l.b16 %v977
        %v1270 = vunpack.c.h.b16 %v977
        %v1271 = vunpack.c.l.b16 %v978
        %v1272 = vunpack.c.h.b16 %v978
        %v1273 = vunpack.c.l.b16 %v979
        %v1274 = vunpack.c.h.b16 %v979
        %v1275 = vunpack.c.l.b16 %v980
        %v1276 = vunpack.c.h.b16 %v980
        %v1277 = vunpack.c.l.b16 %v981
        %v1278 = vunpack.c.h.b16 %v981
        %v1279 = vunpack.c.l.b16 %v982
        %v1280 = vunpack.c.h.b16 %v982
        %v1281 = vunpack.c.l.b16 %v983
        %v1282 = vunpack.c.h.b16 %v983
        %v1283 = vunpack.c.l.b16 %v984
        %v1284 = vunpack.c.h.b16 %v984
        %v1285 = vunpack.c.l.b16 %v985
        %v1286 = vunpack.c.h.b16 %v985
        %v1287 = vunpack.c.l.b16 %v986
        %v1288 = vunpack.c.h.b16 %v986
        %v1289 = vunpack.c.l.b16 %v987
        %v1290 = vunpack.c.h.b16 %v987
        %v1291 = vunpack.c.l.b16 %v988
        %v1292 = vunpack.c.h.b16 %v988
        %v1293 = vunpack.c.l.b16 %v989
        %v1294 = vunpack.c.h.b16 %v989
        %v1295 = vunpack.c.l.b16 %v990
        %v1296 = vunpack.c.h.b16 %v990
        %v1297 = vunpack.c.l.b16 %v991
        %v1298 = vunpack.c.h.b16 %v991
        %v1299 = vunpack.c.l.b16 %v992
        %v1300 = vunpack.c.h.b16 %v992
        %v1301 = vunpack.c.l.b16 %v993
        %v1302 = vunpack.c.h.b16 %v993
        %v1303 = vunpack.c.l.b16 %v994
        %v1304 = vunpack.c.h.b16 %v994
        %v1305 = vunpack.c.l.b16 %v995
        %v1306 = vunpack.c.h.b16 %v995
        %v1307 = vunpack.c.l.b16 %v996
        %v1308 = vunpack.c.h.b16 %v996
        %v1309 = vunpack.c.l.b16 %v997
        %v1310 = vunpack.c.h.b16 %v997
        %v1311 = vunpack.c.l.b16 %v998
        %v1312 = vunpack.c.h.b16 %v998
        %v1313 = vunpack.c.l.b16 %v999
        %v1314 = vunpack.c.h.b16 %v999
        %v1315 = vunpack.c.l.b16 %v1000
        %v1316 = vunpack.c.h.b16 %v1000
        %v1317 = vunpack.c.l.b16 %v1001
        %v1318 = vunpack.c.h.b16 %v1001
        %v1319 = vunpack.c.l.b16 %v1002
        %v1320 = vunpack.c.h.b16 %v1002
        %v1321 = vunpack.c.l.b16 %v1003
        %v1322 = vunpack.c.h.b16 %v1003
        %v1323 = vunpack.c.l.b16 %v1004
        %v1324 = vunpack.c.h.b16 %v1004
        %v1325 = vunpack.c.l.b16 %v1005
        %v1326 = vunpack.c.h.b16 %v1005
        %v1327 = vunpack.c.l.b16 %v1006
        %v1328 = vunpack.c.h.b16 %v1006
        %v1329 = vunpack.c.l.b16 %v1007
        %v1330 = vunpack.c.h.b16 %v1007
        %v1331 = vunpack.c.l.b16 %v1008
        %v1332 = vunpack.c.h.b16 %v1008
        %v1333 = vunpack.c.l.b16 %v1009
        %v1334 = vunpack.c.h.b16 %v1009
        %v1335 = vunpack.c.l.b16 %v1010
        %v1336 = vunpack.c.h.b16 %v1010
        %v1337 = vunpack.c.l.b16 %v1011
        %v1338 = vunpack.c.h.b16 %v1011
        %v1339 = vunpack.c.l.b16 %v1012
        %v1340 = vunpack.c.h.b16 %v1012
        %v1341 = vunpack.c.l.b16 %v1013
        %v1342 = vunpack.c.h.b16 %v1013
        %v1343 = vunpack.c.l.b16 %v1014
        %v1344 = vunpack.c.h.b16 %v1014
        %v1345 = vunpack.c.l.b16 %v1015
        %v1346 = vunpack.c.h.b16 %v1015
        %v1347 = vunpack.c.l.b16 %v1016
        %v1348 = vunpack.c.h.b16 %v1016
        %v1349 = vunpack.c.l.b16 %v1017
        %v1350 = vunpack.c.h.b16 %v1017
        %v1351 = vunpack.c.l.b16 %v1018
        %v1352 = vunpack.c.h.b16 %v1018
        %v1353 = vunpack.c.l.b16 %v1019
        %v1354 = vunpack.c.h.b16 %v1019
        %v1355 = vunpack.c.l.b16 %v1020
        %v1356 = vunpack.c.h.b16 %v1020
        %v1357 = vunpack.c.l.b16 %v1021
        %v1358 = vunpack.c.h.b16 %v1021
        %v1359 = vunpack.c.l.b16 %v1022
        %v1360 = vunpack.c.h.b16 %v1022
        %v1361 = vunpack.c.l.b16 %v1023
        %v1362 = vunpack.c.h.b16 %v1023
        %v1363 = vunpack.c.l.b16 %v1024
        %v1364 = vunpack.c.h.b16 %v1024
        %v1365 = vunpack.c.l.b16 %v1025
        %v1366 = vunpack.c.h.b16 %v1025
        %v1367 = vunpack.c.l.b16 %v1026
        %v1368 = vunpack.c.h.b16 %v1026
        %v1369 = vunpack.c.l.b16 %v1027
        %v1370 = vunpack.c.h.b16 %v1027
        %v1371 = vunpack.c.l.b16 %v1028
        %v1372 = vunpack.c.h.b16 %v1028
        %v1373 = vunpack.c.l.b16 %v1029
        %v1374 = vunpack.c.h.b16 %v1029
        %v1375 = vunpack.c.l.b16 %v1030
        %v1376 = vunpack.c.h.b16 %v1030
        %v1377 = vunpack.c.l.b16 %v1031
        %v1378 = vunpack.c.h.b16 %v1031
        %v1379 = vunpack.c.l.b16 %v1032
        %v1380 = vunpack.c.h.b16 %v1032
        %v1381 = vunpack.c.l.b16 %v1033
        %v1382 = vunpack.c.h.b16 %v1033
        %v1383 = vunpack.c.l.b16 %v1034
        %v1384 = vunpack.c.h.b16 %v1034
        %v1385 = vunpack.c.l.b16 %v1035
        %v1386 = vunpack.c.h.b16 %v1035
        %v1387 = vunpack.c.l.b16 %v1036
        %v1388 = vunpack.c.h.b16 %v1036
        %v1389 = vunpack.c.l.b16 %v1037
        %v1390 = vunpack.c.h.b16 %v1037
        %v1391 = vunpack.c.l.b16 %v1038
        %v1392 = vunpack.c.h.b16 %v1038
        %v1393 = vunpack.c.l.b16 %v1039
        %v1394 = vunpack.c.h.b16 %v1039
        %v1395 = vunpack.c.l.b16 %v1040
        %v1396 = vunpack.c.h.b16 %v1040
        %v1397 = vunpack.c.l.b16 %v1041
        %v1398 = vunpack.c.h.b16 %v1041
        %v1399 = vunpack.c.l.b16 %v1042
        %v1400 = vunpack.c.h.b16 %v1042
        %v1401 = vunpack.c.l.b16 %v1043
        %v1402 = vunpack.c.h.b16 %v1043
        %v1403 = vunpack.c.l.b16 %v1044
        %v1404 = vunpack.c.h.b16 %v1044
        %v1405 = vunpack.c.l.b16 %v1045
        %v1406 = vunpack.c.h.b16 %v1045
        %v1407 = vunpack.c.l.b16 %v1046
        %v1408 = vunpack.c.h.b16 %v1046
        %v1409 = vunpack.c.l.b16 %v1047
        %v1410 = vunpack.c.h.b16 %v1047
        %v1411 = vunpack.c.l.b16 %v1048
        %v1412 = vunpack.c.h.b16 %v1048
        %v1413 = vunpack.c.l.b16 %v1049
        %v1414 = vunpack.c.h.b16 %v1049
        %v1415 = vunpack.c.l.b16 %v1050
        %v1416 = vunpack.c.h.b16 %v1050
        %v1417 = vunpack.c.l.b16 %v1051
        %v1418 = vunpack.c.h.b16 %v1051
        %v1419 = vunpack.c.l.b16 %v1052
        %v1420 = vunpack.c.h.b16 %v1052
        %v1421 = vunpack.c.l.b16 %v1053
        %v1422 = vunpack.c.h.b16 %v1053
        %v1423 = vunpack.c.l.b16 %v1054
        %v1424 = vunpack.c.h.b16 %v1054
        %v1425 = vunpack.c.l.b16 %v1055
        %v1426 = vunpack.c.h.b16 %v1055
        %v1427 = vunpack.c.l.b16 %v1056
        %v1428 = vunpack.c.h.b16 %v1056
        %v1429 = vunpack.c.l.b16 %v1057
        %v1430 = vunpack.c.h.b16 %v1057
        %v1431 = vunpack.c.l.b16 %v1058
        %v1432 = vunpack.c.h.b16 %v1058
        %v1433 = vunpack.c.l.b16 %v1059
        %v1434 = vunpack.c.h.b16 %v1059
        %v1435 = vunpack.c.l.b16 %v1060
        %v1436 = vunpack.c.h.b16 %v1060
        %v1437 = vunpack.c.l.b16 %v1061
        %v1438 = vunpack.c.h.b16 %v1061
        %v1439 = vunpack.c.l.b16 %v1062
        %v1440 = vunpack.c.h.b16 %v1062
        %v1441 = vunpack.c.l.b16 %v1063
        %v1442 = vunpack.c.h.b16 %v1063
        %v1443 = vunpack.c.l.b16 %v1064
        %v1444 = vunpack.c.h.b16 %v1064
        %v1445 = vunpack.c.l.b16 %v1065
        %v1446 = vunpack.c.h.b16 %v1065
        %v1447 = vunpack.c.l.b16 %v1066
        %v1448 = vunpack.c.h.b16 %v1066
        %v1449 = vunpack.c.l.b16 %v1067
        %v1450 = vunpack.c.h.b16 %v1067
        %v1451 = vunpack.c.l.b16 %v1068
        %v1452 = vunpack.c.h.b16 %v1068
        %v1453 = vunpack.c.l.b16 %v1069
        %v1454 = vunpack.c.h.b16 %v1069
        %v1455 = vunpack.c.l.b16 %v1070
        %v1456 = vunpack.c.h.b16 %v1070
        %v1457 = vunpack.c.l.b16 %v1071
        %v1458 = vunpack.c.h.b16 %v1071
        %v1459 = vunpack.c.l.b16 %v1072
        %v1460 = vunpack.c.h.b16 %v1072
        %v1461 = vunpack.c.l.b16 %v1073
        %v1462 = vunpack.c.h.b16 %v1073
        %v1463 = vunpack.c.l.b16 %v1074
        %v1464 = vunpack.c.h.b16 %v1074
        %v1465 = vunpack.c.l.b16 %v1075
        %v1466 = vunpack.c.h.b16 %v1075
        %v1467 = vunpack.c.l.b16 %v1076
        %v1468 = vunpack.c.h.b16 %v1076
        %v1469 = vunpack.c.l.b16 %v1077
        %v1470 = vunpack.c.h.b16 %v1077
        %v1471 = vunpack.c.l.b16 %v1078
        %v1472 = vunpack.c.h.b16 %v1078
        %v1473 = vunpack.c.l.b16 %v1079
        %v1474 = vunpack.c.h.b16 %v1079
        %v1475 = vunpack.c.l.b16 %v1080
        %v1476 = vunpack.c.h.b16 %v1080
        %v1477 = vunpack.c.l.b16 %v1081
        %v1478 = vunpack.c.h.b16 %v1081
        %v1479 = vunpack.c.l.b16 %v1082
        %v1480 = vunpack.c.h.b16 %v1082
        %v1481 = vunpack.c.l.b16 %v1083
        %v1482 = vunpack.c.h.b16 %v1083
        %v1483 = vunpack.c.l.b16 %v1084
        %v1484 = vunpack.c.h.b16 %v1084
        %v1485 = vunpack.c.l.b16 %v1085
        %v1486 = vunpack.c.h.b16 %v1085
        %v1487 = vunpack.c.l.b16 %v1086
        %v1488 = vunpack.c.h.b16 %v1086
        %v1489 = vunpack.c.l.b16 %v1087
        %v1490 = vunpack.c.h.b16 %v1087
        %v1491 = vunpack.c.l.b16 %v1088
        %v1492 = vunpack.c.h.b16 %v1088
        %v1493 = vunpack.c.l.b16 %v1089
        %v1494 = vunpack.c.h.b16 %v1089
        %v1495 = vunpack.c.l.b16 %v1090
        %v1496 = vunpack.c.h.b16 %v1090
        %v1497 = vpack.c.b16 %v1245, %v1241
        %v1498 = vpack.c.b16 %v1246, %v1242
        %v1499 = vpack.c.b16 %v1247, %v1243
        %v1500 = vpack.c.b16 %v1248, %v1244
        %v1501 = vpack.c.b16 %v1253, %v1249
        %v1502 = vpack.c.b16 %v1254, %v1250
        %v1503 = vpack.c.b16 %v1255, %v1251
        %v1504 = vpack.c.b16 %v1256, %v1252
        %v1505 = vpack.c.b16 %v1261, %v1257
        %v1506 = vpack.c.b16 %v1262, %v1258
        %v1507 = vpack.c.b16 %v1263, %v1259
        %v1508 = vpack.c.b16 %v1264, %v1260
        %v1509 = vpack.c.b16 %v1269, %v1265
        %v1510 = vpack.c.b16 %v1270, %v1266
        %v1511 = vpack.c.b16 %v1271, %v1267
        %v1512 = vpack.c.b16 %v1272, %v1268
        %v1513 = vpack.c.b16 %v1277, %v1273
        %v1514 = vpack.c.b16 %v1278, %v1274
        %v1515 = vpack.c.b16 %v1279, %v1275
        %v1516 = vpack.c.b16 %v1280, %v1276
        %v1517 = vpack.c.b16 %v1285, %v1281
        %v1518 = vpack.c.b16 %v1286, %v1282
        %v1519 = vpack.c.b16 %v1287, %v1283
        %v1520 = vpack.c.b16 %v1288, %v1284
        %v1521 = vpack.c.b16 %v1293, %v1289
        %v1522 = vpack.c.b16 %v1294, %v1290
        %v1523 = vpack.c.b16 %v1295, %v1291
        %v1524 = vpack.c.b16 %v1296, %v1292
        %v1525 = vpack.c.b16 %v1301, %v1297
        %v1526 = vpack.c.b16 %v1302, %v1298
        %v1527 = vpack.c.b16 %v1303, %v1299
        %v1528 = vpack.c.b16 %v1304, %v1300
        %v1529 = vpack.c.b16 %v1309, %v1305
        %v1530 = vpack.c.b16 %v1310, %v1306
        %v1531 = vpack.c.b16 %v1311, %v1307
        %v1532 = vpack.c.b16 %v1312, %v1308
        %v1533 = vpack.c.b16 %v1317, %v1313
        %v1534 = vpack.c.b16 %v1318, %v1314
        %v1535 = vpack.c.b16 %v1319, %v1315
        %v1536 = vpack.c.b16 %v1320, %v1316
        %v1537 = vpack.c.b16 %v1325, %v1321
        %v1538 = vpack.c.b16 %v1326, %v1322
        %v1539 = vpack.c.b16 %v1327, %v1323
        %v1540 = vpack.c.b16 %v1328, %v1324
        %v1541 = vpack.c.b16 %v1333, %v1329
        %v1542 = vpack.c.b16 %v1334, %v1330
        %v1543 = vpack.c.b16 %v1335, %v1331
        %v1544 = vpack.c.b16 %v1336, %v1332
        %v1545 = vpack.c.b16 %v1341, %v1337
        %v1546 = vpack.c.b16 %v1342, %v1338
        %v1547 = vpack.c.b16 %v1343, %v1339
        %v1548 = vpack.c.b16 %v1344, %v1340
        %v1549 = vpack.c.b16 %v1349, %v1345
        %v1550 = vpack.c.b16 %v1350, %v1346
        %v1551 = vpack.c.b16 %v1351, %v1347
        %v1552 = vpack.c.b16 %v1352, %v1348
        %v1553 = vpack.c.b16 %v1357, %v1353
        %v1554 = vpack.c.b16 %v1358, %v1354
        %v1555 = vpack.c.b16 %v1359, %v1355
        %v1556 = vpack.c.b16 %v1360, %v1356
        %v1557 = vpack.c.b16 %v1365, %v1361
        %v1558 = vpack.c.b16 %v1366, %v1362
        %v1559 = vpack.c.b16 %v1367, %v1363
        %v1560 = vpack.c.b16 %v1368, %v1364
        %v1561 = vpack.c.b16 %v1373, %v1369
        %v1562 = vpack.c.b16 %v1374, %v1370
        %v1563 = vpack.c.b16 %v1375, %v1371
        %v1564 = vpack.c.b16 %v1376, %v1372
        %v1565 = vpack.c.b16 %v1381, %v1377
        %v1566 = vpack.c.b16 %v1382, %v1378
        %v1567 = vpack.c.b16 %v1383, %v1379
        %v1568 = vpack.c.b16 %v1384, %v1380
        %v1569 = vpack.c.b16 %v1389, %v1385
        %v1570 = vpack.c.b16 %v1390, %v1386
        %v1571 = vpack.c.b16 %v1391, %v1387
        %v1572 = vpack.c.b16 %v1392, %v1388
        %v1573 = vpack.c.b16 %v1397, %v1393
        %v1574 = vpack.c.b16 %v1398, %v1394
        %v1575 = vpack.c.b16 %v1399, %v1395
        %v1576 = vpack.c.b16 %v1400, %v1396
        %v1577 = vpack.c.b16 %v1405, %v1401
        %v1578 = vpack.c.b16 %v1406, %v1402
        %v1579 = vpack.c.b16 %v1407, %v1403
        %v1580 = vpack.c.b16 %v1408, %v1404
        %v1581 = vpack.c.b16 %v1413, %v1409
        %v1582 = vpack.c.b16 %v1414, %v1410
        %v1583 = vpack.c.b16 %v1415, %v1411
        %v1584 = vpack.c.b16 %v1416, %v1412
        %v1585 = vpack.c.b16 %v1421, %v1417
        %v1586 = vpack.c.b16 %v1422, %v1418
        %v1587 = vpack.c.b16 %v1423, %v1419
        %v1588 = vpack.c.b16 %v1424, %v1420
        %v1589 = vpack.c.b16 %v1429, %v1425
        %v1590 = vpack.c.b16 %v1430, %v1426
        %v1591 = vpack.c.b16 %v1431, %v1427
        %v1592 = vpack.c.b16 %v1432, %v1428
        %v1593 = vpack.c.b16 %v1437, %v1433
        %v1594 = vpack.c.b16 %v1438, %v1434
        %v1595 = vpack.c.b16 %v1439, %v1435
        %v1596 = vpack.c.b16 %v1440, %v1436
        %v1597 = vpack.c.b16 %v1445, %v1441
        %v1598 = vpack.c.b16 %v1446, %v1442
        %v1599 = vpack.c.b16 %v1447, %v1443
        %v1600 = vpack.c.b16 %v1448, %v1444
        %v1601 = vpack.c.b16 %v1453, %v1449
        %v1602 = vpack.c.b16 %v1454, %v1450
        %v1603 = vpack.c.b16 %v1455, %v1451
        %v1604 = vpack.c.b16 %v1456, %v1452
        %v1605 = vpack.c.b16 %v1461, %v1457
        %v1606 = vpack.c.b16 %v1462, %v1458
        %v1607 = vpack.c.b16 %v1463, %v1459
        %v1608 = vpack.c.b16 %v1464, %v1460
        %v1609 = vpack.c.b16 %v1469, %v1465
        %v1610 = vpack.c.b16 %v1470, %v1466
        %v1611 = vpack.c.b16 %v1471, %v1467
        %v1612 = vpack.c.b16 %v1472, %v1468
        %v1613 = vpack.c.b16 %v1477, %v1473
        %v1614 = vpack.c.b16 %v1478, %v1474
        %v1615 = vpack.c.b16 %v1479, %v1475
        %v1616 = vpack.c.b16 %v1480, %v1476
        %v1617 = vpack.c.b16 %v1485, %v1481
        %v1618 = vpack.c.b16 %v1486, %v1482
        %v1619 = vpack.c.b16 %v1487, %v1483
        %v1620 = vpack.c.b16 %v1488, %v1484
        %v1621 = vpack.c.b16 %v1493, %v1489
        %v1622 = vpack.c.b16 %v1494, %v1490
        %v1623 = vpack.c.b16 %v1495, %v1491
        %v1624 = vpack.c.b16 %v1496, %v1492
        %1753 = vmatprep.subr.bf16.mxu0 %v1498
        %1754 = vmatpush1.bf16.msra.mxu0 %v1497
        %1755 = vmatprep.subr.bf16.mxu0 %v1502
        %1756 = vmatpush1.bf16.msra.mxu0 %v1501
        %1757 = vmatprep.subr.bf16.mxu0 %v1506
        %1758 = vmatpush1.bf16.msra.mxu0 %v1505
        %1759 = vmatprep.subr.bf16.mxu0 %v1510
        %1760 = vmatpush1.bf16.msra.mxu0 %v1509
        %1761 = vmatprep.subr.bf16.mxu0 %v1514
        %1762 = vmatpush1.bf16.msra.mxu0 %v1513
        %1763 = vmatprep.subr.bf16.mxu0 %v1518
        %1764 = vmatpush1.bf16.msra.mxu0 %v1517
        %1765 = vmatprep.subr.bf16.mxu0 %v1522
        %1766 = vmatpush1.bf16.msra.mxu0 %v1521
        %1767 = vmatprep.subr.bf16.mxu0 %v1526
        %1768 = vmatpush1.bf16.msra.mxu0 %v1525
        %1769 = vmatprep.subr.bf16.mxu0 %v1530
        %1770 = vmatpush1.bf16.msra.mxu0 %v1529
        %1771 = vmatprep.subr.bf16.mxu0 %v1534
        %1772 = vmatpush1.bf16.msra.mxu0 %v1533
        %1773 = vmatprep.subr.bf16.mxu0 %v1538
        %1774 = vmatpush1.bf16.msra.mxu0 %v1537
        %1775 = vmatprep.subr.bf16.mxu0 %v1542
        %1776 = vmatpush1.bf16.msra.mxu0 %v1541
        %1777 = vmatprep.subr.bf16.mxu0 %v1546
        %1778 = vmatpush1.bf16.msra.mxu0 %v1545
        %1779 = vmatprep.subr.bf16.mxu0 %v1550
        %1780 = vmatpush1.bf16.msra.mxu0 %v1549
        %1781 = vmatprep.subr.bf16.mxu0 %v1554
        %1782 = vmatpush1.bf16.msra.mxu0 %v1553
        %1783 = vmatprep.subr.bf16.mxu0 %v1558
        %1784 = vmatpush1.bf16.msra.mxu0 %v1557
        %1785 = vmatprep.mubr.bf16.mxu0 %v932
        %1786 = vmatmul.mubr.bf16.gmra.mrb[0].mxu0 %v931
        %v1787 = vpop.f32.mrb[0].mxu0
        %v1788 = vadd.f32 %v1096, %v1787
        %v1789 = vpop.f32.mrb[0].mxu0
        %v1790 = vadd.f32 %v1100, %v1789
        %v1791 = vpop.f32.mrb[0].mxu0
        %v1792 = vadd.f32 %v1096, %v1791
        %v1793 = vpop.f32.mrb[0].mxu0
        %v1794 = vadd.f32 %v1100, %v1793
        %1795 = vmatprep.mubr.bf16.mxu0 %v936
        %1796 = vmatmul.mubr.bf16.gmra.mrb[0].mxu0 %v935
        %v1797 = vpop.f32.mrb[0].mxu0
        %v1798 = vadd.f32 %v1096, %v1797
        %v1799 = vpop.f32.mrb[0].mxu0
        %v1800 = vadd.f32 %v1100, %v1799
        %v1801 = vpop.f32.mrb[0].mxu0
        %v1802 = vadd.f32 %v1096, %v1801
        %v1803 = vpop.f32.mrb[0].mxu0
        %v1804 = vadd.f32 %v1100, %v1803
        %1805 = vmatprep.mubr.bf16.mxu0 %v940
        %1806 = vmatmul.mubr.bf16.gmra.mrb[0].mxu0 %v939
        %v1807 = vpop.f32.mrb[0].mxu0
        %v1808 = vadd.f32 %v1096, %v1807
        %v1809 = vpop.f32.mrb[0].mxu0
        %v1810 = vadd.f32 %v1100, %v1809
        %v1811 = vpop.f32.mrb[0].mxu0
        %v1812 = vadd.f32 %v1096, %v1811
        %v1813 = vpop.f32.mrb[0].mxu0
        %v1814 = vadd.f32 %v1100, %v1813
        %1815 = vmatprep.mubr.bf16.mxu0 %v944
        %1816 = vmatmul.mubr.bf16.gmra.mrb[0].mxu0 %v943
        %v1817 = vpop.f32.mrb[0].mxu0
        %v1818 = vadd.f32 %v1096, %v1817
        %v1819 = vpop.f32.mrb[0].mxu0
        %v1820 = vadd.f32 %v1100, %v1819
        %v1821 = vpop.f32.mrb[0].mxu0
        %v1822 = vadd.f32 %v1096, %v1821
        %v1823 = vpop.f32.mrb[0].mxu0
        %v1824 = vadd.f32 %v1100, %v1823
        %1825 = vmatprep.mubr.bf16.mxu0 %v948
        %1826 = vmatmul.mubr.bf16.gmra.mrb[0].mxu0 %v947
        %v1827 = vpop.f32.mrb[0].mxu0
        %v1828 = vadd.f32 %v1096, %v1827
        %v1829 = vpop.f32.mrb[0].mxu0
        %v1830 = vadd.f32 %v1100, %v1829
        %v1831 = vpop.f32.mrb[0].mxu0
        %v1832 = vadd.f32 %v1096, %v1831
        %v1833 = vpop.f32.mrb[0].mxu0
        %v1834 = vadd.f32 %v1100, %v1833
        %1835 = vmatprep.mubr.bf16.mxu0 %v952
        %1836 = vmatmul.mubr.bf16.gmra.mrb[0].mxu0 %v951
        %v1837 = vpop.f32.mrb[0].mxu0
        %v1838 = vadd.f32 %v1096, %v1837
        %v1839 = vpop.f32.mrb[0].mxu0
        %v1840 = vadd.f32 %v1100, %v1839
        %v1841 = vpop.f32.mrb[0].mxu0
        %v1842 = vadd.f32 %v1096, %v1841
        %v1843 = vpop.f32.mrb[0].mxu0
        %v1844 = vadd.f32 %v1100, %v1843
        %1845 = vmatprep.mubr.bf16.mxu0 %v956
        %1846 = vmatmul.mubr.bf16.gmra.mrb[0].mxu0 %v955
        %v1847 = vpop.f32.mrb[0].mxu0
        %v1848 = vadd.f32 %v1096, %v1847
        %v1849 = vpop.f32.mrb[0].mxu0
        %v1850 = vadd.f32 %v1100, %v1849
        %v1851 = vpop.f32.mrb[0].mxu0
        %v1852 = vadd.f32 %v1096, %v1851
        %v1853 = vpop.f32.mrb[0].mxu0
        %v1854 = vadd.f32 %v1100, %v1853
        %1855 = vmatprep.mubr.bf16.mxu0 %v960
        %1856 = vmatmul.mubr.bf16.gmra.mrb[0].mxu0 %v959
        %v1857 = vpop.f32.mrb[0].mxu0
        %v1858 = vadd.f32 %v1096, %v1857
        %v1859 = vpop.f32.mrb[0].mxu0
        %v1860 = vadd.f32 %v1100, %v1859
        %v1861 = vpop.f32.mrb[0].mxu0
        %v1862 = vadd.f32 %v1096, %v1861
        %v1863 = vpop.f32.mrb[0].mxu0
        %v1864 = vadd.f32 %v1100, %v1863
        %1865 = vdwg.mxu0
        %1866 = vmatprep.subr.bf16.mxu0 %v1562
        %1867 = vmatpush1.bf16.msra.mxu0 %v1561
        %1868 = vmatprep.subr.bf16.mxu0 %v1566
        %1869 = vmatpush1.bf16.msra.mxu0 %v1565
        %1870 = vmatprep.subr.bf16.mxu0 %v1570
        %1871 = vmatpush1.bf16.msra.mxu0 %v1569
        %1872 = vmatprep.subr.bf16.mxu0 %v1574
        %1873 = vmatpush1.bf16.msra.mxu0 %v1573
        %1874 = vmatprep.subr.bf16.mxu0 %v1578
        %1875 = vmatpush1.bf16.msra.mxu0 %v1577
        %1876 = vmatprep.subr.bf16.mxu0 %v1582
        %1877 = vmatpush1.bf16.msra.mxu0 %v1581
        %1878 = vmatprep.subr.bf16.mxu0 %v1586
        %1879 = vmatpush1.bf16.msra.mxu0 %v1585
        %1880 = vmatprep.subr.bf16.mxu0 %v1590
        %1881 = vmatpush1.bf16.msra.mxu0 %v1589
        %1882 = vmatprep.subr.bf16.mxu0 %v1594
        %1883 = vmatpush1.bf16.msra.mxu0 %v1593
        %1884 = vmatprep.subr.bf16.mxu0 %v1598
        %1885 = vmatpush1.bf16.msra.mxu0 %v1597
        %1886 = vmatprep.subr.bf16.mxu0 %v1602
        %1887 = vmatpush1.bf16.msra.mxu0 %v1601
        %1888 = vmatprep.subr.bf16.mxu0 %v1606
        %1889 = vmatpush1.bf16.msra.mxu0 %v1605
        %1890 = vmatprep.subr.bf16.mxu0 %v1610
        %1891 = vmatpush1.bf16.msra.mxu0 %v1609
        %1892 = vmatprep.subr.bf16.mxu0 %v1614
        %1893 = vmatpush1.bf16.msra.mxu0 %v1613
        %1894 = vmatprep.subr.bf16.mxu0 %v1618
        %1895 = vmatpush1.bf16.msra.mxu0 %v1617
        %1896 = vmatprep.subr.bf16.mxu0 %v1622
        %1897 = vmatpush1.bf16.msra.mxu0 %v1621
        %1898 = vmatprep.mubr.bf16.mxu0 %v934
        %1899 = vmatmul.mubr.bf16.gmra.mrb[0].mxu0 %v933
        %v1900 = vpop.f32.mrb[0].mxu0
        %v1901 = vadd.f32 %v1788, %v1900
        %v1902 = vpop.f32.mrb[0].mxu0
        %v1903 = vadd.f32 %v1790, %v1902
        %v1904 = vpop.f32.mrb[0].mxu0
        %v1905 = vadd.f32 %v1792, %v1904
        %v1906 = vpop.f32.mrb[0].mxu0
        %v1907 = vadd.f32 %v1794, %v1906
        %1908 = vmatprep.mubr.bf16.mxu0 %v938
        %1909 = vmatmul.mubr.bf16.gmra.mrb[0].mxu0 %v937
        %v1910 = vpop.f32.mrb[0].mxu0
        %v1911 = vadd.f32 %v1798, %v1910
        %v1912 = vpop.f32.mrb[0].mxu0
        %v1913 = vadd.f32 %v1800, %v1912
        %v1914 = vpop.f32.mrb[0].mxu0
        %v1915 = vadd.f32 %v1802, %v1914
        %v1916 = vpop.f32.mrb[0].mxu0
        %v1917 = vadd.f32 %v1804, %v1916
        %1918 = vmatprep.mubr.bf16.mxu0 %v942
        %1919 = vmatmul.mubr.bf16.gmra.mrb[0].mxu0 %v941
        %v1920 = vpop.f32.mrb[0].mxu0
        %v1921 = vadd.f32 %v1808, %v1920
        %v1922 = vpop.f32.mrb[0].mxu0
        %v1923 = vadd.f32 %v1810, %v1922
        %v1924 = vpop.f32.mrb[0].mxu0
        %v1925 = vadd.f32 %v1812, %v1924
        %v1926 = vpop.f32.mrb[0].mxu0
        %v1927 = vadd.f32 %v1814, %v1926
        %1928 = vmatprep.mubr.bf16.mxu0 %v946
        %1929 = vmatmul.mubr.bf16.gmra.mrb[0].mxu0 %v945
        %v1930 = vpop.f32.mrb[0].mxu0
        %v1931 = vadd.f32 %v1818, %v1930
        %v1932 = vpop.f32.mrb[0].mxu0
        %v1933 = vadd.f32 %v1820, %v1932
        %v1934 = vpop.f32.mrb[0].mxu0
        %v1935 = vadd.f32 %v1822, %v1934
        %v1936 = vpop.f32.mrb[0].mxu0
        %v1937 = vadd.f32 %v1824, %v1936
        %1938 = vmatprep.mubr.bf16.mxu0 %v950
        %1939 = vmatmul.mubr.bf16.gmra.mrb[0].mxu0 %v949
        %v1940 = vpop.f32.mrb[0].mxu0
        %v1941 = vadd.f32 %v1828, %v1940
        %v1942 = vpop.f32.mrb[0].mxu0
        %v1943 = vadd.f32 %v1830, %v1942
        %v1944 = vpop.f32.mrb[0].mxu0
        %v1945 = vadd.f32 %v1832, %v1944
        %v1946 = vpop.f32.mrb[0].mxu0
        %v1947 = vadd.f32 %v1834, %v1946
        %1948 = vmatprep.mubr.bf16.mxu0 %v954
        %1949 = vmatmul.mubr.bf16.gmra.mrb[0].mxu0 %v953
        %v1950 = vpop.f32.mrb[0].mxu0
        %v1951 = vadd.f32 %v1838, %v1950
        %v1952 = vpop.f32.mrb[0].mxu0
        %v1953 = vadd.f32 %v1840, %v1952
        %v1954 = vpop.f32.mrb[0].mxu0
        %v1955 = vadd.f32 %v1842, %v1954
        %v1956 = vpop.f32.mrb[0].mxu0
        %v1957 = vadd.f32 %v1844, %v1956
        %1958 = vmatprep.mubr.bf16.mxu0 %v958
        %1959 = vmatmul.mubr.bf16.gmra.mrb[0].mxu0 %v957
        %v1960 = vpop.f32.mrb[0].mxu0
        %v1961 = vadd.f32 %v1848, %v1960
        %v1962 = vpop.f32.mrb[0].mxu0
        %v1963 = vadd.f32 %v1850, %v1962
        %v1964 = vpop.f32.mrb[0].mxu0
        %v1965 = vadd.f32 %v1852, %v1964
        %v1966 = vpop.f32.mrb[0].mxu0
        %v1967 = vadd.f32 %v1854, %v1966
        %1968 = vmatprep.mubr.bf16.mxu0 %v962
        %1969 = vmatmul.mubr.bf16.gmra.mrb[0].mxu0 %v961
        %v1970 = vpop.f32.mrb[0].mxu0
        %v1971 = vadd.f32 %v1858, %v1970
        %v1972 = vpop.f32.mrb[0].mxu0
        %v1973 = vadd.f32 %v1860, %v1972
        %v1974 = vpop.f32.mrb[0].mxu0
        %v1975 = vadd.f32 %v1862, %v1974
        %v1976 = vpop.f32.mrb[0].mxu0
        %v1977 = vadd.f32 %v1864, %v1976
        %1978 = vdwg.mxu0
        %1979 = vmatprep.subr.bf16.mxu0 %v1500
        %1980 = vmatpush1.bf16.msra.mxu0 %v1499
        %1981 = vmatprep.subr.bf16.mxu0 %v1504
        %1982 = vmatpush1.bf16.msra.mxu0 %v1503
        %1983 = vmatprep.subr.bf16.mxu0 %v1508
        %1984 = vmatpush1.bf16.msra.mxu0 %v1507
        %1985 = vmatprep.subr.bf16.mxu0 %v1512
        %1986 = vmatpush1.bf16.msra.mxu0 %v1511
        %1987 = vmatprep.subr.bf16.mxu0 %v1516
        %1988 = vmatpush1.bf16.msra.mxu0 %v1515
        %1989 = vmatprep.subr.bf16.mxu0 %v1520
        %1990 = vmatpush1.bf16.msra.mxu0 %v1519
        %1991 = vmatprep.subr.bf16.mxu0 %v1524
        %1992 = vmatpush1.bf16.msra.mxu0 %v1523
        %1993 = vmatprep.subr.bf16.mxu0 %v1528
        %1994 = vmatpush1.bf16.msra.mxu0 %v1527
        %1995 = vmatprep.subr.bf16.mxu0 %v1532
        %1996 = vmatpush1.bf16.msra.mxu0 %v1531
        %1997 = vmatprep.subr.bf16.mxu0 %v1536
        %1998 = vmatpush1.bf16.msra.mxu0 %v1535
        %1999 = vmatprep.subr.bf16.mxu0 %v1540
        %2000 = vmatpush1.bf16.msra.mxu0 %v1539
        %2001 = vmatprep.subr.bf16.mxu0 %v1544
        %2002 = vmatpush1.bf16.msra.mxu0 %v1543
        %2003 = vmatprep.subr.bf16.mxu0 %v1548
        %2004 = vmatpush1.bf16.msra.mxu0 %v1547
        %2005 = vmatprep.subr.bf16.mxu0 %v1552
        %2006 = vmatpush1.bf16.msra.mxu0 %v1551
        %2007 = vmatprep.subr.bf16.mxu0 %v1556
        %2008 = vmatpush1.bf16.msra.mxu0 %v1555
        %2009 = vmatprep.subr.bf16.mxu0 %v1560
        %2010 = vmatpush1.bf16.msra.mxu0 %v1559
        %2011 = vmatprep.mubr.bf16.mxu0 %v932
        %2012 = vmatmul.mubr.bf16.gmra.mrb[0].mxu0 %v931
        %v2013 = vpop.f32.mrb[0].mxu0
        %v2014 = vadd.f32 %v1104, %v2013
        %v2015 = vpop.f32.mrb[0].mxu0
        %v2016 = vadd.f32 %v1108, %v2015
        %v2017 = vpop.f32.mrb[0].mxu0
        %v2018 = vadd.f32 %v1104, %v2017
        %v2019 = vpop.f32.mrb[0].mxu0
        %v2020 = vadd.f32 %v1108, %v2019
        %2021 = vmatprep.mubr.bf16.mxu0 %v936
        %2022 = vmatmul.mubr.bf16.gmra.mrb[0].mxu0 %v935
        %v2023 = vpop.f32.mrb[0].mxu0
        %v2024 = vadd.f32 %v1104, %v2023
        %v2025 = vpop.f32.mrb[0].mxu0
        %v2026 = vadd.f32 %v1108, %v2025
        %v2027 = vpop.f32.mrb[0].mxu0
        %v2028 = vadd.f32 %v1104, %v2027
        %v2029 = vpop.f32.mrb[0].mxu0
        %v2030 = vadd.f32 %v1108, %v2029
        %2031 = vmatprep.mubr.bf16.mxu0 %v940
        %2032 = vmatmul.mubr.bf16.gmra.mrb[0].mxu0 %v939
        %v2033 = vpop.f32.mrb[0].mxu0
        %v2034 = vadd.f32 %v1104, %v2033
        %v2035 = vpop.f32.mrb[0].mxu0
        %v2036 = vadd.f32 %v1108, %v2035
        %v2037 = vpop.f32.mrb[0].mxu0
        %v2038 = vadd.f32 %v1104, %v2037
        %v2039 = vpop.f32.mrb[0].mxu0
        %v2040 = vadd.f32 %v1108, %v2039
        %2041 = vmatprep.mubr.bf16.mxu0 %v944
        %2042 = vmatmul.mubr.bf16.gmra.mrb[0].mxu0 %v943
        %v2043 = vpop.f32.mrb[0].mxu0
        %v2044 = vadd.f32 %v1104, %v2043
        %v2045 = vpop.f32.mrb[0].mxu0
        %v2046 = vadd.f32 %v1108, %v2045
        %v2047 = vpop.f32.mrb[0].mxu0
        %v2048 = vadd.f32 %v1104, %v2047
        %v2049 = vpop.f32.mrb[0].mxu0
        %v2050 = vadd.f32 %v1108, %v2049
        %2051 = vmatprep.mubr.bf16.mxu0 %v948
        %2052 = vmatmul.mubr.bf16.gmra.mrb[0].mxu0 %v947
        %v2053 = vpop.f32.mrb[0].mxu0
        %v2054 = vadd.f32 %v1104, %v2053
        %v2055 = vpop.f32.mrb[0].mxu0
        %v2056 = vadd.f32 %v1108, %v2055
        %v2057 = vpop.f32.mrb[0].mxu0
        %v2058 = vadd.f32 %v1104, %v2057
        %v2059 = vpop.f32.mrb[0].mxu0
        %v2060 = vadd.f32 %v1108, %v2059
        %2061 = vmatprep.mubr.bf16.mxu0 %v952
        %2062 = vmatmul.mubr.bf16.gmra.mrb[0].mxu0 %v951
        %v2063 = vpop.f32.mrb[0].mxu0
        %v2064 = vadd.f32 %v1104, %v2063
        %v2065 = vpop.f32.mrb[0].mxu0
        %v2066 = vadd.f32 %v1108, %v2065
        %v2067 = vpop.f32.mrb[0].mxu0
        %v2068 = vadd.f32 %v1104, %v2067
        %v2069 = vpop.f32.mrb[0].mxu0
        %v2070 = vadd.f32 %v1108, %v2069
        %2071 = vmatprep.mubr.bf16.mxu0 %v956
        %2072 = vmatmul.mubr.bf16.gmra.mrb[0].mxu0 %v955
        %v2073 = vpop.f32.mrb[0].mxu0
        %v2074 = vadd.f32 %v1104, %v2073
        %v2075 = vpop.f32.mrb[0].mxu0
        %v2076 = vadd.f32 %v1108, %v2075
        %v2077 = vpop.f32.mrb[0].mxu0
        %v2078 = vadd.f32 %v1104, %v2077
        %v2079 = vpop.f32.mrb[0].mxu0
        %v2080 = vadd.f32 %v1108, %v2079
        %2081 = vmatprep.mubr.bf16.mxu0 %v960
        %2082 = vmatmul.mubr.bf16.gmra.mrb[0].mxu0 %v959
        %v2083 = vpop.f32.mrb[0].mxu0
        %v2084 = vadd.f32 %v1104, %v2083
        %v2085 = vpop.f32.mrb[0].mxu0
        %v2086 = vadd.f32 %v1108, %v2085
        %v2087 = vpop.f32.mrb[0].mxu0
        %v2088 = vadd.f32 %v1104, %v2087
        %v2089 = vpop.f32.mrb[0].mxu0
        %v2090 = vadd.f32 %v1108, %v2089
        %2091 = vdwg.mxu0
        %2092 = vmatprep.subr.bf16.mxu0 %v1564
        %2093 = vmatpush1.bf16.msra.mxu0 %v1563
        %2094 = vmatprep.subr.bf16.mxu0 %v1568
        %2095 = vmatpush1.bf16.msra.mxu0 %v1567
        %2096 = vmatprep.subr.bf16.mxu0 %v1572
        %2097 = vmatpush1.bf16.msra.mxu0 %v1571
        %2098 = vmatprep.subr.bf16.mxu0 %v1576
        %2099 = vmatpush1.bf16.msra.mxu0 %v1575
        %2100 = vmatprep.subr.bf16.mxu0 %v1580
        %2101 = vmatpush1.bf16.msra.mxu0 %v1579
        %2102 = vmatprep.subr.bf16.mxu0 %v1584
        %2103 = vmatpush1.bf16.msra.mxu0 %v1583
        %2104 = vmatprep.subr.bf16.mxu0 %v1588
        %2105 = vmatpush1.bf16.msra.mxu0 %v1587
        %2106 = vmatprep.subr.bf16.mxu0 %v1592
        %2107 = vmatpush1.bf16.msra.mxu0 %v1591
        %2108 = vmatprep.subr.bf16.mxu0 %v1596
        %2109 = vmatpush1.bf16.msra.mxu0 %v1595
        %2110 = vmatprep.subr.bf16.mxu0 %v1600
        %2111 = vmatpush1.bf16.msra.mxu0 %v1599
        %2112 = vmatprep.subr.bf16.mxu0 %v1604
        %2113 = vmatpush1.bf16.msra.mxu0 %v1603
        %2114 = vmatprep.subr.bf16.mxu0 %v1608
        %2115 = vmatpush1.bf16.msra.mxu0 %v1607
        %2116 = vmatprep.subr.bf16.mxu0 %v1612
        %2117 = vmatpush1.bf16.msra.mxu0 %v1611
        %2118 = vmatprep.subr.bf16.mxu0 %v1616
        %2119 = vmatpush1.bf16.msra.mxu0 %v1615
        %2120 = vmatprep.subr.bf16.mxu0 %v1620
        %2121 = vmatpush1.bf16.msra.mxu0 %v1619
        %2122 = vmatprep.subr.bf16.mxu0 %v1624
        %2123 = vmatpush1.bf16.msra.mxu0 %v1623
        %2124 = vmatprep.mubr.bf16.mxu0 %v934
        %2125 = vmatmul.mubr.bf16.gmra.mrb[0].mxu0 %v933
        %v2126 = vpop.f32.mrb[0].mxu0
        %v2127 = vadd.f32 %v2014, %v2126
        %v2128 = vpop.f32.mrb[0].mxu0
        %v2129 = vadd.f32 %v2016, %v2128
        %v2130 = vpop.f32.mrb[0].mxu0
        %v2131 = vadd.f32 %v2018, %v2130
        %v2132 = vpop.f32.mrb[0].mxu0
        %v2133 = vadd.f32 %v2020, %v2132
        %2134 = vmatprep.mubr.bf16.mxu0 %v938
        %2135 = vmatmul.mubr.bf16.gmra.mrb[0].mxu0 %v937
        %v2136 = vpop.f32.mrb[0].mxu0
        %v2137 = vadd.f32 %v2024, %v2136
        %v2138 = vpop.f32.mrb[0].mxu0
        %v2139 = vadd.f32 %v2026, %v2138
        %v2140 = vpop.f32.mrb[0].mxu0
        %v2141 = vadd.f32 %v2028, %v2140
        %v2142 = vpop.f32.mrb[0].mxu0
        %v2143 = vadd.f32 %v2030, %v2142
        %2144 = vmatprep.mubr.bf16.mxu0 %v942
        %2145 = vmatmul.mubr.bf16.gmra.mrb[0].mxu0 %v941
        %v2146 = vpop.f32.mrb[0].mxu0
        %v2147 = vadd.f32 %v2034, %v2146
        %v2148 = vpop.f32.mrb[0].mxu0
        %v2149 = vadd.f32 %v2036, %v2148
        %v2150 = vpop.f32.mrb[0].mxu0
        %v2151 = vadd.f32 %v2038, %v2150
        %v2152 = vpop.f32.mrb[0].mxu0
        %v2153 = vadd.f32 %v2040, %v2152
        %2154 = vmatprep.mubr.bf16.mxu0 %v946
        %2155 = vmatmul.mubr.bf16.gmra.mrb[0].mxu0 %v945
        %v2156 = vpop.f32.mrb[0].mxu0
        %v2157 = vadd.f32 %v2044, %v2156
        %v2158 = vpop.f32.mrb[0].mxu0
        %v2159 = vadd.f32 %v2046, %v2158
        %v2160 = vpop.f32.mrb[0].mxu0
        %v2161 = vadd.f32 %v2048, %v2160
        %v2162 = vpop.f32.mrb[0].mxu0
        %v2163 = vadd.f32 %v2050, %v2162
        %2164 = vmatprep.mubr.bf16.mxu0 %v950
        %2165 = vmatmul.mubr.bf16.gmra.mrb[0].mxu0 %v949
        %v2166 = vpop.f32.mrb[0].mxu0
        %v2167 = vadd.f32 %v2054, %v2166
        %v2168 = vpop.f32.mrb[0].mxu0
        %v2169 = vadd.f32 %v2056, %v2168
        %v2170 = vpop.f32.mrb[0].mxu0
        %v2171 = vadd.f32 %v2058, %v2170
        %v2172 = vpop.f32.mrb[0].mxu0
        %v2173 = vadd.f32 %v2060, %v2172
        %2174 = vmatprep.mubr.bf16.mxu0 %v954
        %2175 = vmatmul.mubr.bf16.gmra.mrb[0].mxu0 %v953
        %v2176 = vpop.f32.mrb[0].mxu0
        %v2177 = vadd.f32 %v2064, %v2176
        %v2178 = vpop.f32.mrb[0].mxu0
        %v2179 = vadd.f32 %v2066, %v2178
        %v2180 = vpop.f32.mrb[0].mxu0
        %v2181 = vadd.f32 %v2068, %v2180
        %v2182 = vpop.f32.mrb[0].mxu0
        %v2183 = vadd.f32 %v2070, %v2182
        %2184 = vmatprep.mubr.bf16.mxu0 %v958
        %2185 = vmatmul.mubr.bf16.gmra.mrb[0].mxu0 %v957
        %v2186 = vpop.f32.mrb[0].mxu0
        %v2187 = vadd.f32 %v2074, %v2186
        %v2188 = vpop.f32.mrb[0].mxu0
        %v2189 = vadd.f32 %v2076, %v2188
        %v2190 = vpop.f32.mrb[0].mxu0
        %v2191 = vadd.f32 %v2078, %v2190
        %v2192 = vpop.f32.mrb[0].mxu0
        %v2193 = vadd.f32 %v2080, %v2192
        %2194 = vmatprep.mubr.bf16.mxu0 %v962
        %2195 = vmatmul.mubr.bf16.gmra.mrb[0].mxu0 %v961
        %v2196 = vpop.f32.mrb[0].mxu0
        %v2197 = vadd.f32 %v2084, %v2196
        %v2198 = vpop.f32.mrb[0].mxu0
        %v2199 = vadd.f32 %v2086, %v2198
        %v2200 = vpop.f32.mrb[0].mxu0
        %v2201 = vadd.f32 %v2088, %v2200
        %v2202 = vpop.f32.mrb[0].mxu0
        %v2203 = vadd.f32 %v2090, %v2202
        %2204 = vdwg.mxu0
        %v2205 = vpack.c.bf16 %v1905, %v1901
        %v2206 = vpack.c.bf16 %v1907, %v1903
        %v2207 = vpack.c.bf16 %v2131, %v2127
        %v2208 = vpack.c.bf16 %v2133, %v2129
        %v2209 = vpack.c.bf16 %v1915, %v1911
        %v2210 = vpack.c.bf16 %v1917, %v1913
        %v2211 = vpack.c.bf16 %v2141, %v2137
        %v2212 = vpack.c.bf16 %v2143, %v2139
        %v2213 = vpack.c.bf16 %v1925, %v1921
        %v2214 = vpack.c.bf16 %v1927, %v1923
        %v2215 = vpack.c.bf16 %v2151, %v2147
        %v2216 = vpack.c.bf16 %v2153, %v2149
        %v2217 = vpack.c.bf16 %v1935, %v1931
        %v2218 = vpack.c.bf16 %v1937, %v1933
        %v2219 = vpack.c.bf16 %v2161, %v2157
        %v2220 = vpack.c.bf16 %v2163, %v2159
        %v2221 = vpack.c.bf16 %v1945, %v1941
        %v2222 = vpack.c.bf16 %v1947, %v1943
        %v2223 = vpack.c.bf16 %v2171, %v2167
        %v2224 = vpack.c.bf16 %v2173, %v2169
        %v2225 = vpack.c.bf16 %v1955, %v1951
        %v2226 = vpack.c.bf16 %v1957, %v1953
        %v2227 = vpack.c.bf16 %v2181, %v2177
        %v2228 = vpack.c.bf16 %v2183, %v2179
        %v2229 = vpack.c.bf16 %v1965, %v1961
        %v2230 = vpack.c.bf16 %v1967, %v1963
        %v2231 = vpack.c.bf16 %v2191, %v2187
        %v2232 = vpack.c.bf16 %v2193, %v2189
        %v2233 = vpack.c.bf16 %v1975, %v1971
        %v2234 = vpack.c.bf16 %v1977, %v1973
        %v2235 = vpack.c.bf16 %v2201, %v2197
        %v2236 = vpack.c.bf16 %v2203, %v2199
        %v2237 = vmax.bf16 %v2205, 0
        %v2238 = vmax.bf16 %v2206, 0
        %v2239 = vmax.bf16 %v2207, 0
        %v2240 = vmax.bf16 %v2208, 0
        %v2241 = vmax.bf16 %v2209, 0
        %v2242 = vmax.bf16 %v2210, 0
        %v2243 = vmax.bf16 %v2211, 0
        %v2244 = vmax.bf16 %v2212, 0
        %v2245 = vmax.bf16 %v2213, 0
        %v2246 = vmax.bf16 %v2214, 0
        %v2247 = vmax.bf16 %v2215, 0
        %v2248 = vmax.bf16 %v2216, 0
        %v2249 = vmax.bf16 %v2217, 0
        %v2250 = vmax.bf16 %v2218, 0
        %v2251 = vmax.bf16 %v2219, 0
        %v2252 = vmax.bf16 %v2220, 0
        %v2253 = vmax.bf16 %v2221, 0
        %v2254 = vmax.bf16 %v2222, 0
        %v2255 = vmax.bf16 %v2223, 0
        %v2256 = vmax.bf16 %v2224, 0
        %v2257 = vmax.bf16 %v2225, 0
        %v2258 = vmax.bf16 %v2226, 0
        %v2259 = vmax.bf16 %v2227, 0
        %v2260 = vmax.bf16 %v2228, 0
        %v2261 = vmax.bf16 %v2229, 0
        %v2262 = vmax.bf16 %v2230, 0
        %v2263 = vmax.bf16 %v2231, 0
        %v2264 = vmax.bf16 %v2232, 0
        %v2265 = vmax.bf16 %v2233, 0
        %v2266 = vmax.bf16 %v2234, 0
        %v2267 = vmax.bf16 %v2235, 0
        %v2268 = vmax.bf16 %v2236, 0
        %v2269 = vld [vmem:[#allocation6] sm:$0xff]
        %v2270 = vld [vmem:[#allocation6 + $0x8] sm:$0xff]
        %v2271 = vld [vmem:[#allocation6 + $0x10] sm:$0xff]
        %v2272 = vld [vmem:[#allocation6 + $0x18] sm:$0xff]
        %v2273 = vld [vmem:[#allocation6 + $0x20] sm:$0xff]
        %v2274 = vld [vmem:[#allocation6 + $0x28] sm:$0xff]
        %v2275 = vld [vmem:[#allocation6 + $0x30] sm:$0xff]
        %v2276 = vld [vmem:[#allocation6 + $0x38] sm:$0xff]
        %v2277 = vld [vmem:[#allocation6 + $0x40] sm:$0xff]
        %v2278 = vld [vmem:[#allocation6 + $0x48] sm:$0xff]
        %v2279 = vld [vmem:[#allocation6 + $0x50] sm:$0xff]
        %v2280 = vld [vmem:[#allocation6 + $0x58] sm:$0xff]
        %v2281 = vld [vmem:[#allocation6 + $0x60] sm:$0xff]
        %v2282 = vld [vmem:[#allocation6 + $0x68] sm:$0xff]
        %v2283 = vld [vmem:[#allocation6 + $0x70] sm:$0xff]
        %v2284 = vld [vmem:[#allocation6 + $0x78] sm:$0xff]
        %v2285 = vld [vmem:[#allocation6 + $0x80] sm:$0xff]
        %v2286 = vld [vmem:[#allocation6 + $0x88] sm:$0xff]
        %v2287 = vld [vmem:[#allocation6 + $0x90] sm:$0xff]
        %v2288 = vld [vmem:[#allocation6 + $0x98] sm:$0xff]
        %v2289 = vld [vmem:[#allocation6 + $0xa0] sm:$0xff]
        %v2290 = vld [vmem:[#allocation6 + $0xa8] sm:$0xff]
        %v2291 = vld [vmem:[#allocation6 + $0xb0] sm:$0xff]
        %v2292 = vld [vmem:[#allocation6 + $0xb8] sm:$0xff]
        %v2293 = vld [vmem:[#allocation6 + $0xc0] sm:$0xff]
        %v2294 = vld [vmem:[#allocation6 + $0xc8] sm:$0xff]
        %v2295 = vld [vmem:[#allocation6 + $0xd0] sm:$0xff]
        %v2296 = vld [vmem:[#allocation6 + $0xd8] sm:$0xff]
        %v2297 = vld [vmem:[#allocation6 + $0xe0] sm:$0xff]
        %v2298 = vld [vmem:[#allocation6 + $0xe8] sm:$0xff]
        %v2299 = vld [vmem:[#allocation6 + $0xf0] sm:$0xff]
        %v2300 = vld [vmem:[#allocation6 + $0xf8] sm:$0xff]
        %v2301 = vld [vmem:[#allocation6 + $0x100] sm:$0xff]
        %v2302 = vld [vmem:[#allocation6 + $0x108] sm:$0xff]
        %v2303 = vld [vmem:[#allocation6 + $0x110] sm:$0xff]
        %v2304 = vld [vmem:[#allocation6 + $0x118] sm:$0xff]
        %v2305 = vld [vmem:[#allocation6 + $0x120] sm:$0xff]
        %v2306 = vld [vmem:[#allocation6 + $0x128] sm:$0xff]
        %v2307 = vld [vmem:[#allocation6 + $0x130] sm:$0xff]
        %v2308 = vld [vmem:[#allocation6 + $0x138] sm:$0xff]
        %v2309 = vld [vmem:[#allocation6 + $0x140] sm:$0xff]
        %v2310 = vld [vmem:[#allocation6 + $0x148] sm:$0xff]
        %v2311 = vld [vmem:[#allocation6 + $0x150] sm:$0xff]
        %v2312 = vld [vmem:[#allocation6 + $0x158] sm:$0xff]
        %v2313 = vld [vmem:[#allocation6 + $0x160] sm:$0xff]
        %v2314 = vld [vmem:[#allocation6 + $0x168] sm:$0xff]
        %v2315 = vld [vmem:[#allocation6 + $0x170] sm:$0xff]
        %v2316 = vld [vmem:[#allocation6 + $0x178] sm:$0xff]
        %v2317 = vld [vmem:[#allocation6 + $0x180] sm:$0xff]
        %v2318 = vld [vmem:[#allocation6 + $0x188] sm:$0xff]
        %v2319 = vld [vmem:[#allocation6 + $0x190] sm:$0xff]
        %v2320 = vld [vmem:[#allocation6 + $0x198] sm:$0xff]
        %v2321 = vld [vmem:[#allocation6 + $0x1a0] sm:$0xff]
        %v2322 = vld [vmem:[#allocation6 + $0x1a8] sm:$0xff]
        %v2323 = vld [vmem:[#allocation6 + $0x1b0] sm:$0xff]
        %v2324 = vld [vmem:[#allocation6 + $0x1b8] sm:$0xff]
        %v2325 = vld [vmem:[#allocation6 + $0x1c0] sm:$0xff]
        %v2326 = vld [vmem:[#allocation6 + $0x1c8] sm:$0xff]
        %v2327 = vld [vmem:[#allocation6 + $0x1d0] sm:$0xff]
        %v2328 = vld [vmem:[#allocation6 + $0x1d8] sm:$0xff]
        %v2329 = vld [vmem:[#allocation6 + $0x1e0] sm:$0xff]
        %v2330 = vld [vmem:[#allocation6 + $0x1e8] sm:$0xff]
        %v2331 = vld [vmem:[#allocation6 + $0x1f0] sm:$0xff]
        %v2332 = vld [vmem:[#allocation6 + $0x1f8] sm:$0xff]
        %v2333 = vld [vmem:[#allocation6 + $0x200] sm:$0xff]
        %v2334 = vld [vmem:[#allocation6 + $0x208] sm:$0xff]
        %v2335 = vld [vmem:[#allocation6 + $0x210] sm:$0xff]
        %v2336 = vld [vmem:[#allocation6 + $0x218] sm:$0xff]
        %v2337 = vld [vmem:[#allocation6 + $0x220] sm:$0xff]
        %v2338 = vld [vmem:[#allocation6 + $0x228] sm:$0xff]
        %v2339 = vld [vmem:[#allocation6 + $0x230] sm:$0xff]
        %v2340 = vld [vmem:[#allocation6 + $0x238] sm:$0xff]
        %v2341 = vld [vmem:[#allocation6 + $0x240] sm:$0xff]
        %v2342 = vld [vmem:[#allocation6 + $0x248] sm:$0xff]
        %v2343 = vld [vmem:[#allocation6 + $0x250] sm:$0xff]
        %v2344 = vld [vmem:[#allocation6 + $0x258] sm:$0xff]
        %v2345 = vld [vmem:[#allocation6 + $0x260] sm:$0xff]
        %v2346 = vld [vmem:[#allocation6 + $0x268] sm:$0xff]
        %v2347 = vld [vmem:[#allocation6 + $0x270] sm:$0xff]
        %v2348 = vld [vmem:[#allocation6 + $0x278] sm:$0xff]
        %v2349 = vld [vmem:[#allocation6 + $0x280] sm:$0xff]
        %v2350 = vld [vmem:[#allocation6 + $0x288] sm:$0xff]
        %v2351 = vld [vmem:[#allocation6 + $0x290] sm:$0xff]
        %v2352 = vld [vmem:[#allocation6 + $0x298] sm:$0xff]
        %v2353 = vld [vmem:[#allocation6 + $0x2a0] sm:$0xff]
        %v2354 = vld [vmem:[#allocation6 + $0x2a8] sm:$0xff]
        %v2355 = vld [vmem:[#allocation6 + $0x2b0] sm:$0xff]
        %v2356 = vld [vmem:[#allocation6 + $0x2b8] sm:$0xff]
        %v2357 = vld [vmem:[#allocation6 + $0x2c0] sm:$0xff]
        %v2358 = vld [vmem:[#allocation6 + $0x2c8] sm:$0xff]
        %v2359 = vld [vmem:[#allocation6 + $0x2d0] sm:$0xff]
        %v2360 = vld [vmem:[#allocation6 + $0x2d8] sm:$0xff]
        %v2361 = vld [vmem:[#allocation6 + $0x2e0] sm:$0xff]
        %v2362 = vld [vmem:[#allocation6 + $0x2e8] sm:$0xff]
        %v2363 = vld [vmem:[#allocation6 + $0x2f0] sm:$0xff]
        %v2364 = vld [vmem:[#allocation6 + $0x2f8] sm:$0xff]
        %v2365 = vld [vmem:[#allocation6 + $0x300] sm:$0xff]
        %v2366 = vld [vmem:[#allocation6 + $0x308] sm:$0xff]
        %v2367 = vld [vmem:[#allocation6 + $0x310] sm:$0xff]
        %v2368 = vld [vmem:[#allocation6 + $0x318] sm:$0xff]
        %v2369 = vld [vmem:[#allocation6 + $0x320] sm:$0xff]
        %v2370 = vld [vmem:[#allocation6 + $0x328] sm:$0xff]
        %v2371 = vld [vmem:[#allocation6 + $0x330] sm:$0xff]
        %v2372 = vld [vmem:[#allocation6 + $0x338] sm:$0xff]
        %v2373 = vld [vmem:[#allocation6 + $0x340] sm:$0xff]
        %v2374 = vld [vmem:[#allocation6 + $0x348] sm:$0xff]
        %v2375 = vld [vmem:[#allocation6 + $0x350] sm:$0xff]
        %v2376 = vld [vmem:[#allocation6 + $0x358] sm:$0xff]
        %v2377 = vld [vmem:[#allocation6 + $0x360] sm:$0xff]
        %v2378 = vld [vmem:[#allocation6 + $0x368] sm:$0xff]
        %v2379 = vld [vmem:[#allocation6 + $0x370] sm:$0xff]
        %v2380 = vld [vmem:[#allocation6 + $0x378] sm:$0xff]
        %v2381 = vld [vmem:[#allocation6 + $0x380] sm:$0xff]
        %v2382 = vld [vmem:[#allocation6 + $0x388] sm:$0xff]
        %v2383 = vld [vmem:[#allocation6 + $0x390] sm:$0xff]
        %v2384 = vld [vmem:[#allocation6 + $0x398] sm:$0xff]
        %v2385 = vld [vmem:[#allocation6 + $0x3a0] sm:$0xff]
        %v2386 = vld [vmem:[#allocation6 + $0x3a8] sm:$0xff]
        %v2387 = vld [vmem:[#allocation6 + $0x3b0] sm:$0xff]
        %v2388 = vld [vmem:[#allocation6 + $0x3b8] sm:$0xff]
        %v2389 = vld [vmem:[#allocation6 + $0x3c0] sm:$0xff]
        %v2390 = vld [vmem:[#allocation6 + $0x3c8] sm:$0xff]
        %v2391 = vld [vmem:[#allocation6 + $0x3d0] sm:$0xff]
        %v2392 = vld [vmem:[#allocation6 + $0x3d8] sm:$0xff]
        %v2393 = vld [vmem:[#allocation6 + $0x3e0] sm:$0xff]
        %v2394 = vld [vmem:[#allocation6 + $0x3e8] sm:$0xff]
        %v2395 = vld [vmem:[#allocation6 + $0x3f0] sm:$0xff]
        %v2396 = vld [vmem:[#allocation6 + $0x3f8] sm:$0xff]
        %v2397 = vld [vmem:[%s6] sm:$0xf]
        %v2399 = vlaneseq
        %v2400 = vshrl.u32 %v2399, 7
        %v2401 = vsub.s32 0, %v2400
        %v2402 = vrot.slane %v2397, %v2401
        %v2403 = vlaneseq
        %v2404 = vshrl.u32 %v2403, 7
        %v2405 = vsub.s32 1, %v2404
        %v2406 = vrot.slane %v2397, %v2405
        %v2407 = vlaneseq
        %v2408 = vshrl.u32 %v2407, 7
        %v2409 = vsub.s32 2, %v2408
        %v2410 = vrot.slane %v2397, %v2409
        %v2411 = vlaneseq
        %v2412 = vshrl.u32 %v2411, 7
        %v2413 = vsub.s32 3, %v2412
        %v2414 = vrot.slane %v2397, %v2413
        %v2547 = vunpack.c.l.b16 %v2269
        %v2548 = vunpack.c.h.b16 %v2269
        %v2549 = vunpack.c.l.b16 %v2270
        %v2550 = vunpack.c.h.b16 %v2270
        %v2551 = vunpack.c.l.b16 %v2271
        %v2552 = vunpack.c.h.b16 %v2271
        %v2553 = vunpack.c.l.b16 %v2272
        %v2554 = vunpack.c.h.b16 %v2272
        %v2555 = vunpack.c.l.b16 %v2273
        %v2556 = vunpack.c.h.b16 %v2273
        %v2557 = vunpack.c.l.b16 %v2274
        %v2558 = vunpack.c.h.b16 %v2274
        %v2559 = vunpack.c.l.b16 %v2275
        %v2560 = vunpack.c.h.b16 %v2275
        %v2561 = vunpack.c.l.b16 %v2276
        %v2562 = vunpack.c.h.b16 %v2276
        %v2563 = vunpack.c.l.b16 %v2277
        %v2564 = vunpack.c.h.b16 %v2277
        %v2565 = vunpack.c.l.b16 %v2278
        %v2566 = vunpack.c.h.b16 %v2278
        %v2567 = vunpack.c.l.b16 %v2279
        %v2568 = vunpack.c.h.b16 %v2279
        %v2569 = vunpack.c.l.b16 %v2280
        %v2570 = vunpack.c.h.b16 %v2280
        %v2571 = vunpack.c.l.b16 %v2281
        %v2572 = vunpack.c.h.b16 %v2281
        %v2573 = vunpack.c.l.b16 %v2282
        %v2574 = vunpack.c.h.b16 %v2282
        %v2575 = vunpack.c.l.b16 %v2283
        %v2576 = vunpack.c.h.b16 %v2283
        %v2577 = vunpack.c.l.b16 %v2284
        %v2578 = vunpack.c.h.b16 %v2284
        %v2579 = vunpack.c.l.b16 %v2285
        %v2580 = vunpack.c.h.b16 %v2285
        %v2581 = vunpack.c.l.b16 %v2286
        %v2582 = vunpack.c.h.b16 %v2286
        %v2583 = vunpack.c.l.b16 %v2287
        %v2584 = vunpack.c.h.b16 %v2287
        %v2585 = vunpack.c.l.b16 %v2288
        %v2586 = vunpack.c.h.b16 %v2288
        %v2587 = vunpack.c.l.b16 %v2289
        %v2588 = vunpack.c.h.b16 %v2289
        %v2589 = vunpack.c.l.b16 %v2290
        %v2590 = vunpack.c.h.b16 %v2290
        %v2591 = vunpack.c.l.b16 %v2291
        %v2592 = vunpack.c.h.b16 %v2291
        %v2593 = vunpack.c.l.b16 %v2292
        %v2594 = vunpack.c.h.b16 %v2292
        %v2595 = vunpack.c.l.b16 %v2293
        %v2596 = vunpack.c.h.b16 %v2293
        %v2597 = vunpack.c.l.b16 %v2294
        %v2598 = vunpack.c.h.b16 %v2294
        %v2599 = vunpack.c.l.b16 %v2295
        %v2600 = vunpack.c.h.b16 %v2295
        %v2601 = vunpack.c.l.b16 %v2296
        %v2602 = vunpack.c.h.b16 %v2296
        %v2603 = vunpack.c.l.b16 %v2297
        %v2604 = vunpack.c.h.b16 %v2297
        %v2605 = vunpack.c.l.b16 %v2298
        %v2606 = vunpack.c.h.b16 %v2298
        %v2607 = vunpack.c.l.b16 %v2299
        %v2608 = vunpack.c.h.b16 %v2299
        %v2609 = vunpack.c.l.b16 %v2300
        %v2610 = vunpack.c.h.b16 %v2300
        %v2611 = vunpack.c.l.b16 %v2301
        %v2612 = vunpack.c.h.b16 %v2301
        %v2613 = vunpack.c.l.b16 %v2302
        %v2614 = vunpack.c.h.b16 %v2302
        %v2615 = vunpack.c.l.b16 %v2303
        %v2616 = vunpack.c.h.b16 %v2303
        %v2617 = vunpack.c.l.b16 %v2304
        %v2618 = vunpack.c.h.b16 %v2304
        %v2619 = vunpack.c.l.b16 %v2305
        %v2620 = vunpack.c.h.b16 %v2305
        %v2621 = vunpack.c.l.b16 %v2306
        %v2622 = vunpack.c.h.b16 %v2306
        %v2623 = vunpack.c.l.b16 %v2307
        %v2624 = vunpack.c.h.b16 %v2307
        %v2625 = vunpack.c.l.b16 %v2308
        %v2626 = vunpack.c.h.b16 %v2308
        %v2627 = vunpack.c.l.b16 %v2309
        %v2628 = vunpack.c.h.b16 %v2309
        %v2629 = vunpack.c.l.b16 %v2310
        %v2630 = vunpack.c.h.b16 %v2310
        %v2631 = vunpack.c.l.b16 %v2311
        %v2632 = vunpack.c.h.b16 %v2311
        %v2633 = vunpack.c.l.b16 %v2312
        %v2634 = vunpack.c.h.b16 %v2312
        %v2635 = vunpack.c.l.b16 %v2313
        %v2636 = vunpack.c.h.b16 %v2313
        %v2637 = vunpack.c.l.b16 %v2314
        %v2638 = vunpack.c.h.b16 %v2314
        %v2639 = vunpack.c.l.b16 %v2315
        %v2640 = vunpack.c.h.b16 %v2315
        %v2641 = vunpack.c.l.b16 %v2316
        %v2642 = vunpack.c.h.b16 %v2316
        %v2643 = vunpack.c.l.b16 %v2317
        %v2644 = vunpack.c.h.b16 %v2317
        %v2645 = vunpack.c.l.b16 %v2318
        %v2646 = vunpack.c.h.b16 %v2318
        %v2647 = vunpack.c.l.b16 %v2319
        %v2648 = vunpack.c.h.b16 %v2319
        %v2649 = vunpack.c.l.b16 %v2320
        %v2650 = vunpack.c.h.b16 %v2320
        %v2651 = vunpack.c.l.b16 %v2321
        %v2652 = vunpack.c.h.b16 %v2321
        %v2653 = vunpack.c.l.b16 %v2322
        %v2654 = vunpack.c.h.b16 %v2322
        %v2655 = vunpack.c.l.b16 %v2323
        %v2656 = vunpack.c.h.b16 %v2323
        %v2657 = vunpack.c.l.b16 %v2324
        %v2658 = vunpack.c.h.b16 %v2324
        %v2659 = vunpack.c.l.b16 %v2325
        %v2660 = vunpack.c.h.b16 %v2325
        %v2661 = vunpack.c.l.b16 %v2326
        %v2662 = vunpack.c.h.b16 %v2326
        %v2663 = vunpack.c.l.b16 %v2327
        %v2664 = vunpack.c.h.b16 %v2327
        %v2665 = vunpack.c.l.b16 %v2328
        %v2666 = vunpack.c.h.b16 %v2328
        %v2667 = vunpack.c.l.b16 %v2329
        %v2668 = vunpack.c.h.b16 %v2329
        %v2669 = vunpack.c.l.b16 %v2330
        %v2670 = vunpack.c.h.b16 %v2330
        %v2671 = vunpack.c.l.b16 %v2331
        %v2672 = vunpack.c.h.b16 %v2331
        %v2673 = vunpack.c.l.b16 %v2332
        %v2674 = vunpack.c.h.b16 %v2332
        %v2675 = vunpack.c.l.b16 %v2333
        %v2676 = vunpack.c.h.b16 %v2333
        %v2677 = vunpack.c.l.b16 %v2334
        %v2678 = vunpack.c.h.b16 %v2334
        %v2679 = vunpack.c.l.b16 %v2335
        %v2680 = vunpack.c.h.b16 %v2335
        %v2681 = vunpack.c.l.b16 %v2336
        %v2682 = vunpack.c.h.b16 %v2336
        %v2683 = vunpack.c.l.b16 %v2337
        %v2684 = vunpack.c.h.b16 %v2337
        %v2685 = vunpack.c.l.b16 %v2338
        %v2686 = vunpack.c.h.b16 %v2338
        %v2687 = vunpack.c.l.b16 %v2339
        %v2688 = vunpack.c.h.b16 %v2339
        %v2689 = vunpack.c.l.b16 %v2340
        %v2690 = vunpack.c.h.b16 %v2340
        %v2691 = vunpack.c.l.b16 %v2341
        %v2692 = vunpack.c.h.b16 %v2341
        %v2693 = vunpack.c.l.b16 %v2342
        %v2694 = vunpack.c.h.b16 %v2342
        %v2695 = vunpack.c.l.b16 %v2343
        %v2696 = vunpack.c.h.b16 %v2343
        %v2697 = vunpack.c.l.b16 %v2344
        %v2698 = vunpack.c.h.b16 %v2344
        %v2699 = vunpack.c.l.b16 %v2345
        %v2700 = vunpack.c.h.b16 %v2345
        %v2701 = vunpack.c.l.b16 %v2346
        %v2702 = vunpack.c.h.b16 %v2346
        %v2703 = vunpack.c.l.b16 %v2347
        %v2704 = vunpack.c.h.b16 %v2347
        %v2705 = vunpack.c.l.b16 %v2348
        %v2706 = vunpack.c.h.b16 %v2348
        %v2707 = vunpack.c.l.b16 %v2349
        %v2708 = vunpack.c.h.b16 %v2349
        %v2709 = vunpack.c.l.b16 %v2350
        %v2710 = vunpack.c.h.b16 %v2350
        %v2711 = vunpack.c.l.b16 %v2351
        %v2712 = vunpack.c.h.b16 %v2351
        %v2713 = vunpack.c.l.b16 %v2352
        %v2714 = vunpack.c.h.b16 %v2352
        %v2715 = vunpack.c.l.b16 %v2353
        %v2716 = vunpack.c.h.b16 %v2353
        %v2717 = vunpack.c.l.b16 %v2354
        %v2718 = vunpack.c.h.b16 %v2354
        %v2719 = vunpack.c.l.b16 %v2355
        %v2720 = vunpack.c.h.b16 %v2355
        %v2721 = vunpack.c.l.b16 %v2356
        %v2722 = vunpack.c.h.b16 %v2356
        %v2723 = vunpack.c.l.b16 %v2357
        %v2724 = vunpack.c.h.b16 %v2357
        %v2725 = vunpack.c.l.b16 %v2358
        %v2726 = vunpack.c.h.b16 %v2358
        %v2727 = vunpack.c.l.b16 %v2359
        %v2728 = vunpack.c.h.b16 %v2359
        %v2729 = vunpack.c.l.b16 %v2360
        %v2730 = vunpack.c.h.b16 %v2360
        %v2731 = vunpack.c.l.b16 %v2361
        %v2732 = vunpack.c.h.b16 %v2361
        %v2733 = vunpack.c.l.b16 %v2362
        %v2734 = vunpack.c.h.b16 %v2362
        %v2735 = vunpack.c.l.b16 %v2363
        %v2736 = vunpack.c.h.b16 %v2363
        %v2737 = vunpack.c.l.b16 %v2364
        %v2738 = vunpack.c.h.b16 %v2364
        %v2739 = vunpack.c.l.b16 %v2365
        %v2740 = vunpack.c.h.b16 %v2365
        %v2741 = vunpack.c.l.b16 %v2366
        %v2742 = vunpack.c.h.b16 %v2366
        %v2743 = vunpack.c.l.b16 %v2367
        %v2744 = vunpack.c.h.b16 %v2367
        %v2745 = vunpack.c.l.b16 %v2368
        %v2746 = vunpack.c.h.b16 %v2368
        %v2747 = vunpack.c.l.b16 %v2369
        %v2748 = vunpack.c.h.b16 %v2369
        %v2749 = vunpack.c.l.b16 %v2370
        %v2750 = vunpack.c.h.b16 %v2370
        %v2751 = vunpack.c.l.b16 %v2371
        %v2752 = vunpack.c.h.b16 %v2371
        %v2753 = vunpack.c.l.b16 %v2372
        %v2754 = vunpack.c.h.b16 %v2372
        %v2755 = vunpack.c.l.b16 %v2373
        %v2756 = vunpack.c.h.b16 %v2373
        %v2757 = vunpack.c.l.b16 %v2374
        %v2758 = vunpack.c.h.b16 %v2374
        %v2759 = vunpack.c.l.b16 %v2375
        %v2760 = vunpack.c.h.b16 %v2375
        %v2761 = vunpack.c.l.b16 %v2376
        %v2762 = vunpack.c.h.b16 %v2376
        %v2763 = vunpack.c.l.b16 %v2377
        %v2764 = vunpack.c.h.b16 %v2377
        %v2765 = vunpack.c.l.b16 %v2378
        %v2766 = vunpack.c.h.b16 %v2378
        %v2767 = vunpack.c.l.b16 %v2379
        %v2768 = vunpack.c.h.b16 %v2379
        %v2769 = vunpack.c.l.b16 %v2380
        %v2770 = vunpack.c.h.b16 %v2380
        %v2771 = vunpack.c.l.b16 %v2381
        %v2772 = vunpack.c.h.b16 %v2381
        %v2773 = vunpack.c.l.b16 %v2382
        %v2774 = vunpack.c.h.b16 %v2382
        %v2775 = vunpack.c.l.b16 %v2383
        %v2776 = vunpack.c.h.b16 %v2383
        %v2777 = vunpack.c.l.b16 %v2384
        %v2778 = vunpack.c.h.b16 %v2384
        %v2779 = vunpack.c.l.b16 %v2385
        %v2780 = vunpack.c.h.b16 %v2385
        %v2781 = vunpack.c.l.b16 %v2386
        %v2782 = vunpack.c.h.b16 %v2386
        %v2783 = vunpack.c.l.b16 %v2387
        %v2784 = vunpack.c.h.b16 %v2387
        %v2785 = vunpack.c.l.b16 %v2388
        %v2786 = vunpack.c.h.b16 %v2388
        %v2787 = vunpack.c.l.b16 %v2389
        %v2788 = vunpack.c.h.b16 %v2389
        %v2789 = vunpack.c.l.b16 %v2390
        %v2790 = vunpack.c.h.b16 %v2390
        %v2791 = vunpack.c.l.b16 %v2391
        %v2792 = vunpack.c.h.b16 %v2391
        %v2793 = vunpack.c.l.b16 %v2392
        %v2794 = vunpack.c.h.b16 %v2392
        %v2795 = vunpack.c.l.b16 %v2393
        %v2796 = vunpack.c.h.b16 %v2393
        %v2797 = vunpack.c.l.b16 %v2394
        %v2798 = vunpack.c.h.b16 %v2394
        %v2799 = vunpack.c.l.b16 %v2395
        %v2800 = vunpack.c.h.b16 %v2395
        %v2801 = vunpack.c.l.b16 %v2396
        %v2802 = vunpack.c.h.b16 %v2396
        %v2803 = vpack.c.b16 %v2551, %v2547
        %v2804 = vpack.c.b16 %v2552, %v2548
        %v2805 = vpack.c.b16 %v2553, %v2549
        %v2806 = vpack.c.b16 %v2554, %v2550
        %v2807 = vpack.c.b16 %v2559, %v2555
        %v2808 = vpack.c.b16 %v2560, %v2556
        %v2809 = vpack.c.b16 %v2561, %v2557
        %v2810 = vpack.c.b16 %v2562, %v2558
        %v2811 = vpack.c.b16 %v2567, %v2563
        %v2812 = vpack.c.b16 %v2568, %v2564
        %v2813 = vpack.c.b16 %v2569, %v2565
        %v2814 = vpack.c.b16 %v2570, %v2566
        %v2815 = vpack.c.b16 %v2575, %v2571
        %v2816 = vpack.c.b16 %v2576, %v2572
        %v2817 = vpack.c.b16 %v2577, %v2573
        %v2818 = vpack.c.b16 %v2578, %v2574
        %v2819 = vpack.c.b16 %v2583, %v2579
        %v2820 = vpack.c.b16 %v2584, %v2580
        %v2821 = vpack.c.b16 %v2585, %v2581
        %v2822 = vpack.c.b16 %v2586, %v2582
        %v2823 = vpack.c.b16 %v2591, %v2587
        %v2824 = vpack.c.b16 %v2592, %v2588
        %v2825 = vpack.c.b16 %v2593, %v2589
        %v2826 = vpack.c.b16 %v2594, %v2590
        %v2827 = vpack.c.b16 %v2599, %v2595
        %v2828 = vpack.c.b16 %v2600, %v2596
        %v2829 = vpack.c.b16 %v2601, %v2597
        %v2830 = vpack.c.b16 %v2602, %v2598
        %v2831 = vpack.c.b16 %v2607, %v2603
        %v2832 = vpack.c.b16 %v2608, %v2604
        %v2833 = vpack.c.b16 %v2609, %v2605
        %v2834 = vpack.c.b16 %v2610, %v2606
        %v2835 = vpack.c.b16 %v2615, %v2611
        %v2836 = vpack.c.b16 %v2616, %v2612
        %v2837 = vpack.c.b16 %v2617, %v2613
        %v2838 = vpack.c.b16 %v2618, %v2614
        %v2839 = vpack.c.b16 %v2623, %v2619
        %v2840 = vpack.c.b16 %v2624, %v2620
        %v2841 = vpack.c.b16 %v2625, %v2621
        %v2842 = vpack.c.b16 %v2626, %v2622
        %v2843 = vpack.c.b16 %v2631, %v2627
        %v2844 = vpack.c.b16 %v2632, %v2628
        %v2845 = vpack.c.b16 %v2633, %v2629
        %v2846 = vpack.c.b16 %v2634, %v2630
        %v2847 = vpack.c.b16 %v2639, %v2635
        %v2848 = vpack.c.b16 %v2640, %v2636
        %v2849 = vpack.c.b16 %v2641, %v2637
        %v2850 = vpack.c.b16 %v2642, %v2638
        %v2851 = vpack.c.b16 %v2647, %v2643
        %v2852 = vpack.c.b16 %v2648, %v2644
        %v2853 = vpack.c.b16 %v2649, %v2645
        %v2854 = vpack.c.b16 %v2650, %v2646
        %v2855 = vpack.c.b16 %v2655, %v2651
        %v2856 = vpack.c.b16 %v2656, %v2652
        %v2857 = vpack.c.b16 %v2657, %v2653
        %v2858 = vpack.c.b16 %v2658, %v2654
        %v2859 = vpack.c.b16 %v2663, %v2659
        %v2860 = vpack.c.b16 %v2664, %v2660
        %v2861 = vpack.c.b16 %v2665, %v2661
        %v2862 = vpack.c.b16 %v2666, %v2662
        %v2863 = vpack.c.b16 %v2671, %v2667
        %v2864 = vpack.c.b16 %v2672, %v2668
        %v2865 = vpack.c.b16 %v2673, %v2669
        %v2866 = vpack.c.b16 %v2674, %v2670
        %v2867 = vpack.c.b16 %v2679, %v2675
        %v2868 = vpack.c.b16 %v2680, %v2676
        %v2869 = vpack.c.b16 %v2681, %v2677
        %v2870 = vpack.c.b16 %v2682, %v2678
        %v2871 = vpack.c.b16 %v2687, %v2683
        %v2872 = vpack.c.b16 %v2688, %v2684
        %v2873 = vpack.c.b16 %v2689, %v2685
        %v2874 = vpack.c.b16 %v2690, %v2686
        %v2875 = vpack.c.b16 %v2695, %v2691
        %v2876 = vpack.c.b16 %v2696, %v2692
        %v2877 = vpack.c.b16 %v2697, %v2693
        %v2878 = vpack.c.b16 %v2698, %v2694
        %v2879 = vpack.c.b16 %v2703, %v2699
        %v2880 = vpack.c.b16 %v2704, %v2700
        %v2881 = vpack.c.b16 %v2705, %v2701
        %v2882 = vpack.c.b16 %v2706, %v2702
        %v2883 = vpack.c.b16 %v2711, %v2707
        %v2884 = vpack.c.b16 %v2712, %v2708
        %v2885 = vpack.c.b16 %v2713, %v2709
        %v2886 = vpack.c.b16 %v2714, %v2710
        %v2887 = vpack.c.b16 %v2719, %v2715
        %v2888 = vpack.c.b16 %v2720, %v2716
        %v2889 = vpack.c.b16 %v2721, %v2717
        %v2890 = vpack.c.b16 %v2722, %v2718
        %v2891 = vpack.c.b16 %v2727, %v2723
        %v2892 = vpack.c.b16 %v2728, %v2724
        %v2893 = vpack.c.b16 %v2729, %v2725
        %v2894 = vpack.c.b16 %v2730, %v2726
        %v2895 = vpack.c.b16 %v2735, %v2731
        %v2896 = vpack.c.b16 %v2736, %v2732
        %v2897 = vpack.c.b16 %v2737, %v2733
        %v2898 = vpack.c.b16 %v2738, %v2734
        %v2899 = vpack.c.b16 %v2743, %v2739
        %v2900 = vpack.c.b16 %v2744, %v2740
        %v2901 = vpack.c.b16 %v2745, %v2741
        %v2902 = vpack.c.b16 %v2746, %v2742
        %v2903 = vpack.c.b16 %v2751, %v2747
        %v2904 = vpack.c.b16 %v2752, %v2748
        %v2905 = vpack.c.b16 %v2753, %v2749
        %v2906 = vpack.c.b16 %v2754, %v2750
        %v2907 = vpack.c.b16 %v2759, %v2755
        %v2908 = vpack.c.b16 %v2760, %v2756
        %v2909 = vpack.c.b16 %v2761, %v2757
        %v2910 = vpack.c.b16 %v2762, %v2758
        %v2911 = vpack.c.b16 %v2767, %v2763
        %v2912 = vpack.c.b16 %v2768, %v2764
        %v2913 = vpack.c.b16 %v2769, %v2765
        %v2914 = vpack.c.b16 %v2770, %v2766
        %v2915 = vpack.c.b16 %v2775, %v2771
        %v2916 = vpack.c.b16 %v2776, %v2772
        %v2917 = vpack.c.b16 %v2777, %v2773
        %v2918 = vpack.c.b16 %v2778, %v2774
        %v2919 = vpack.c.b16 %v2783, %v2779
        %v2920 = vpack.c.b16 %v2784, %v2780
        %v2921 = vpack.c.b16 %v2785, %v2781
        %v2922 = vpack.c.b16 %v2786, %v2782
        %v2923 = vpack.c.b16 %v2791, %v2787
        %v2924 = vpack.c.b16 %v2792, %v2788
        %v2925 = vpack.c.b16 %v2793, %v2789
        %v2926 = vpack.c.b16 %v2794, %v2790
        %v2927 = vpack.c.b16 %v2799, %v2795
        %v2928 = vpack.c.b16 %v2800, %v2796
        %v2929 = vpack.c.b16 %v2801, %v2797
        %v2930 = vpack.c.b16 %v2802, %v2798
        %3059 = vmatprep.subr.bf16.mxu0 %v2804
        %3060 = vmatpush1.bf16.msra.mxu0 %v2803
        %3061 = vmatprep.subr.bf16.mxu0 %v2808
        %3062 = vmatpush1.bf16.msra.mxu0 %v2807
        %3063 = vmatprep.subr.bf16.mxu0 %v2812
        %3064 = vmatpush1.bf16.msra.mxu0 %v2811
        %3065 = vmatprep.subr.bf16.mxu0 %v2816
        %3066 = vmatpush1.bf16.msra.mxu0 %v2815
        %3067 = vmatprep.subr.bf16.mxu0 %v2820
        %3068 = vmatpush1.bf16.msra.mxu0 %v2819
        %3069 = vmatprep.subr.bf16.mxu0 %v2824
        %3070 = vmatpush1.bf16.msra.mxu0 %v2823
        %3071 = vmatprep.subr.bf16.mxu0 %v2828
        %3072 = vmatpush1.bf16.msra.mxu0 %v2827
        %3073 = vmatprep.subr.bf16.mxu0 %v2832
        %3074 = vmatpush1.bf16.msra.mxu0 %v2831
        %3075 = vmatprep.subr.bf16.mxu0 %v2836
        %3076 = vmatpush1.bf16.msra.mxu0 %v2835
        %3077 = vmatprep.subr.bf16.mxu0 %v2840
        %3078 = vmatpush1.bf16.msra.mxu0 %v2839
        %3079 = vmatprep.subr.bf16.mxu0 %v2844
        %3080 = vmatpush1.bf16.msra.mxu0 %v2843
        %3081 = vmatprep.subr.bf16.mxu0 %v2848
        %3082 = vmatpush1.bf16.msra.mxu0 %v2847
        %3083 = vmatprep.subr.bf16.mxu0 %v2852
        %3084 = vmatpush1.bf16.msra.mxu0 %v2851
        %3085 = vmatprep.subr.bf16.mxu0 %v2856
        %3086 = vmatpush1.bf16.msra.mxu0 %v2855
        %3087 = vmatprep.subr.bf16.mxu0 %v2860
        %3088 = vmatpush1.bf16.msra.mxu0 %v2859
        %3089 = vmatprep.subr.bf16.mxu0 %v2864
        %3090 = vmatpush1.bf16.msra.mxu0 %v2863
        %3091 = vmatprep.mubr.bf16.mxu0 %v2238
        %3092 = vmatmul.mubr.bf16.gmra.mrb[0].mxu0 %v2237
        %v3093 = vpop.f32.mrb[0].mxu0
        %v3094 = vadd.f32 %v2402, %v3093
        %v3095 = vpop.f32.mrb[0].mxu0
        %v3096 = vadd.f32 %v2406, %v3095
        %v3097 = vpop.f32.mrb[0].mxu0
        %v3098 = vadd.f32 %v2402, %v3097
        %v3099 = vpop.f32.mrb[0].mxu0
        %v3100 = vadd.f32 %v2406, %v3099
        %3101 = vmatprep.mubr.bf16.mxu0 %v2242
        %3102 = vmatmul.mubr.bf16.gmra.mrb[0].mxu0 %v2241
        %v3103 = vpop.f32.mrb[0].mxu0
        %v3104 = vadd.f32 %v2402, %v3103
        %v3105 = vpop.f32.mrb[0].mxu0
        %v3106 = vadd.f32 %v2406, %v3105
        %v3107 = vpop.f32.mrb[0].mxu0
        %v3108 = vadd.f32 %v2402, %v3107
        %v3109 = vpop.f32.mrb[0].mxu0
        %v3110 = vadd.f32 %v2406, %v3109
        %3111 = vmatprep.mubr.bf16.mxu0 %v2246
        %3112 = vmatmul.mubr.bf16.gmra.mrb[0].mxu0 %v2245
        %v3113 = vpop.f32.mrb[0].mxu0
        %v3114 = vadd.f32 %v2402, %v3113
        %v3115 = vpop.f32.mrb[0].mxu0
        %v3116 = vadd.f32 %v2406, %v3115
        %v3117 = vpop.f32.mrb[0].mxu0
        %v3118 = vadd.f32 %v2402, %v3117
        %v3119 = vpop.f32.mrb[0].mxu0
        %v3120 = vadd.f32 %v2406, %v3119
        %3121 = vmatprep.mubr.bf16.mxu0 %v2250
        %3122 = vmatmul.mubr.bf16.gmra.mrb[0].mxu0 %v2249
        %v3123 = vpop.f32.mrb[0].mxu0
        %v3124 = vadd.f32 %v2402, %v3123
        %v3125 = vpop.f32.mrb[0].mxu0
        %v3126 = vadd.f32 %v2406, %v3125
        %v3127 = vpop.f32.mrb[0].mxu0
        %v3128 = vadd.f32 %v2402, %v3127
        %v3129 = vpop.f32.mrb[0].mxu0
        %v3130 = vadd.f32 %v2406, %v3129
        %3131 = vmatprep.mubr.bf16.mxu0 %v2254
        %3132 = vmatmul.mubr.bf16.gmra.mrb[0].mxu0 %v2253
        %v3133 = vpop.f32.mrb[0].mxu0
        %v3134 = vadd.f32 %v2402, %v3133
        %v3135 = vpop.f32.mrb[0].mxu0
        %v3136 = vadd.f32 %v2406, %v3135
        %v3137 = vpop.f32.mrb[0].mxu0
        %v3138 = vadd.f32 %v2402, %v3137
        %v3139 = vpop.f32.mrb[0].mxu0
        %v3140 = vadd.f32 %v2406, %v3139
        %3141 = vmatprep.mubr.bf16.mxu0 %v2258
        %3142 = vmatmul.mubr.bf16.gmra.mrb[0].mxu0 %v2257
        %v3143 = vpop.f32.mrb[0].mxu0
        %v3144 = vadd.f32 %v2402, %v3143
        %v3145 = vpop.f32.mrb[0].mxu0
        %v3146 = vadd.f32 %v2406, %v3145
        %v3147 = vpop.f32.mrb[0].mxu0
        %v3148 = vadd.f32 %v2402, %v3147
        %v3149 = vpop.f32.mrb[0].mxu0
        %v3150 = vadd.f32 %v2406, %v3149
        %3151 = vmatprep.mubr.bf16.mxu0 %v2262
        %3152 = vmatmul.mubr.bf16.gmra.mrb[0].mxu0 %v2261
        %v3153 = vpop.f32.mrb[0].mxu0
        %v3154 = vadd.f32 %v2402, %v3153
        %v3155 = vpop.f32.mrb[0].mxu0
        %v3156 = vadd.f32 %v2406, %v3155
        %v3157 = vpop.f32.mrb[0].mxu0
        %v3158 = vadd.f32 %v2402, %v3157
        %v3159 = vpop.f32.mrb[0].mxu0
        %v3160 = vadd.f32 %v2406, %v3159
        %3161 = vmatprep.mubr.bf16.mxu0 %v2266
        %3162 = vmatmul.mubr.bf16.gmra.mrb[0].mxu0 %v2265
        %v3163 = vpop.f32.mrb[0].mxu0
        %v3164 = vadd.f32 %v2402, %v3163
        %v3165 = vpop.f32.mrb[0].mxu0
        %v3166 = vadd.f32 %v2406, %v3165
        %v3167 = vpop.f32.mrb[0].mxu0
        %v3168 = vadd.f32 %v2402, %v3167
        %v3169 = vpop.f32.mrb[0].mxu0
        %v3170 = vadd.f32 %v2406, %v3169
        %3171 = vdwg.mxu0
        %3172 = vmatprep.subr.bf16.mxu0 %v2868
        %3173 = vmatpush1.bf16.msra.mxu0 %v2867
        %3174 = vmatprep.subr.bf16.mxu0 %v2872
        %3175 = vmatpush1.bf16.msra.mxu0 %v2871
        %3176 = vmatprep.subr.bf16.mxu0 %v2876
        %3177 = vmatpush1.bf16.msra.mxu0 %v2875
        %3178 = vmatprep.subr.bf16.mxu0 %v2880
        %3179 = vmatpush1.bf16.msra.mxu0 %v2879
        %3180 = vmatprep.subr.bf16.mxu0 %v2884
        %3181 = vmatpush1.bf16.msra.mxu0 %v2883
        %3182 = vmatprep.subr.bf16.mxu0 %v2888
        %3183 = vmatpush1.bf16.msra.mxu0 %v2887
        %3184 = vmatprep.subr.bf16.mxu0 %v2892
        %3185 = vmatpush1.bf16.msra.mxu0 %v2891
        %3186 = vmatprep.subr.bf16.mxu0 %v2896
        %3187 = vmatpush1.bf16.msra.mxu0 %v2895
        %3188 = vmatprep.subr.bf16.mxu0 %v2900
        %3189 = vmatpush1.bf16.msra.mxu0 %v2899
        %3190 = vmatprep.subr.bf16.mxu0 %v2904
        %3191 = vmatpush1.bf16.msra.mxu0 %v2903
        %3192 = vmatprep.subr.bf16.mxu0 %v2908
        %3193 = vmatpush1.bf16.msra.mxu0 %v2907
        %3194 = vmatprep.subr.bf16.mxu0 %v2912
        %3195 = vmatpush1.bf16.msra.mxu0 %v2911
        %3196 = vmatprep.subr.bf16.mxu0 %v2916
        %3197 = vmatpush1.bf16.msra.mxu0 %v2915
        %3198 = vmatprep.subr.bf16.mxu0 %v2920
        %3199 = vmatpush1.bf16.msra.mxu0 %v2919
        %3200 = vmatprep.subr.bf16.mxu0 %v2924
        %3201 = vmatpush1.bf16.msra.mxu0 %v2923
        %3202 = vmatprep.subr.bf16.mxu0 %v2928
        %3203 = vmatpush1.bf16.msra.mxu0 %v2927
        %3204 = vmatprep.mubr.bf16.mxu0 %v2240
        %3205 = vmatmul.mubr.bf16.gmra.mrb[0].mxu0 %v2239
        %v3206 = vpop.f32.mrb[0].mxu0
        %v3207 = vadd.f32 %v3094, %v3206
        %v3208 = vpop.f32.mrb[0].mxu0
        %v3209 = vadd.f32 %v3096, %v3208
        %v3210 = vpop.f32.mrb[0].mxu0
        %v3211 = vadd.f32 %v3098, %v3210
        %v3212 = vpop.f32.mrb[0].mxu0
        %v3213 = vadd.f32 %v3100, %v3212
        %3214 = vmatprep.mubr.bf16.mxu0 %v2244
        %3215 = vmatmul.mubr.bf16.gmra.mrb[0].mxu0 %v2243
        %v3216 = vpop.f32.mrb[0].mxu0
        %v3217 = vadd.f32 %v3104, %v3216
        %v3218 = vpop.f32.mrb[0].mxu0
        %v3219 = vadd.f32 %v3106, %v3218
        %v3220 = vpop.f32.mrb[0].mxu0
        %v3221 = vadd.f32 %v3108, %v3220
        %v3222 = vpop.f32.mrb[0].mxu0
        %v3223 = vadd.f32 %v3110, %v3222
        %3224 = vmatprep.mubr.bf16.mxu0 %v2248
        %3225 = vmatmul.mubr.bf16.gmra.mrb[0].mxu0 %v2247
        %v3226 = vpop.f32.mrb[0].mxu0
        %v3227 = vadd.f32 %v3114, %v3226
        %v3228 = vpop.f32.mrb[0].mxu0
        %v3229 = vadd.f32 %v3116, %v3228
        %v3230 = vpop.f32.mrb[0].mxu0
        %v3231 = vadd.f32 %v3118, %v3230
        %v3232 = vpop.f32.mrb[0].mxu0
        %v3233 = vadd.f32 %v3120, %v3232
        %3234 = vmatprep.mubr.bf16.mxu0 %v2252
        %3235 = vmatmul.mubr.bf16.gmra.mrb[0].mxu0 %v2251
        %v3236 = vpop.f32.mrb[0].mxu0
        %v3237 = vadd.f32 %v3124, %v3236
        %v3238 = vpop.f32.mrb[0].mxu0
        %v3239 = vadd.f32 %v3126, %v3238
        %v3240 = vpop.f32.mrb[0].mxu0
        %v3241 = vadd.f32 %v3128, %v3240
        %v3242 = vpop.f32.mrb[0].mxu0
        %v3243 = vadd.f32 %v3130, %v3242
        %3244 = vmatprep.mubr.bf16.mxu0 %v2256
        %3245 = vmatmul.mubr.bf16.gmra.mrb[0].mxu0 %v2255
        %v3246 = vpop.f32.mrb[0].mxu0
        %v3247 = vadd.f32 %v3134, %v3246
        %v3248 = vpop.f32.mrb[0].mxu0
        %v3249 = vadd.f32 %v3136, %v3248
        %v3250 = vpop.f32.mrb[0].mxu0
        %v3251 = vadd.f32 %v3138, %v3250
        %v3252 = vpop.f32.mrb[0].mxu0
        %v3253 = vadd.f32 %v3140, %v3252
        %3254 = vmatprep.mubr.bf16.mxu0 %v2260
        %3255 = vmatmul.mubr.bf16.gmra.mrb[0].mxu0 %v2259
        %v3256 = vpop.f32.mrb[0].mxu0
        %v3257 = vadd.f32 %v3144, %v3256
        %v3258 = vpop.f32.mrb[0].mxu0
        %v3259 = vadd.f32 %v3146, %v3258
        %v3260 = vpop.f32.mrb[0].mxu0
        %v3261 = vadd.f32 %v3148, %v3260
        %v3262 = vpop.f32.mrb[0].mxu0
        %v3263 = vadd.f32 %v3150, %v3262
        %3264 = vmatprep.mubr.bf16.mxu0 %v2264
        %3265 = vmatmul.mubr.bf16.gmra.mrb[0].mxu0 %v2263
        %v3266 = vpop.f32.mrb[0].mxu0
        %v3267 = vadd.f32 %v3154, %v3266
        %v3268 = vpop.f32.mrb[0].mxu0
        %v3269 = vadd.f32 %v3156, %v3268
        %v3270 = vpop.f32.mrb[0].mxu0
        %v3271 = vadd.f32 %v3158, %v3270
        %v3272 = vpop.f32.mrb[0].mxu0
        %v3273 = vadd.f32 %v3160, %v3272
        %3274 = vmatprep.mubr.bf16.mxu0 %v2268
        %3275 = vmatmul.mubr.bf16.gmra.mrb[0].mxu0 %v2267
        %v3276 = vpop.f32.mrb[0].mxu0
        %v3277 = vadd.f32 %v3164, %v3276
        %v3278 = vpop.f32.mrb[0].mxu0
        %v3279 = vadd.f32 %v3166, %v3278
        %v3280 = vpop.f32.mrb[0].mxu0
        %v3281 = vadd.f32 %v3168, %v3280
        %v3282 = vpop.f32.mrb[0].mxu0
        %v3283 = vadd.f32 %v3170, %v3282
        %3284 = vdwg.mxu0
        %3285 = vmatprep.subr.bf16.mxu0 %v2806
        %3286 = vmatpush1.bf16.msra.mxu0 %v2805
        %3287 = vmatprep.subr.bf16.mxu0 %v2810
        %3288 = vmatpush1.bf16.msra.mxu0 %v2809
        %3289 = vmatprep.subr.bf16.mxu0 %v2814
        %3290 = vmatpush1.bf16.msra.mxu0 %v2813
        %3291 = vmatprep.subr.bf16.mxu0 %v2818
        %3292 = vmatpush1.bf16.msra.mxu0 %v2817
        %3293 = vmatprep.subr.bf16.mxu0 %v2822
        %3294 = vmatpush1.bf16.msra.mxu0 %v2821
        %3295 = vmatprep.subr.bf16.mxu0 %v2826
        %3296 = vmatpush1.bf16.msra.mxu0 %v2825
        %3297 = vmatprep.subr.bf16.mxu0 %v2830
        %3298 = vmatpush1.bf16.msra.mxu0 %v2829
        %3299 = vmatprep.subr.bf16.mxu0 %v2834
        %3300 = vmatpush1.bf16.msra.mxu0 %v2833
        %3301 = vmatprep.subr.bf16.mxu0 %v2838
        %3302 = vmatpush1.bf16.msra.mxu0 %v2837
        %3303 = vmatprep.subr.bf16.mxu0 %v2842
        %3304 = vmatpush1.bf16.msra.mxu0 %v2841
        %3305 = vmatprep.subr.bf16.mxu0 %v2846
        %3306 = vmatpush1.bf16.msra.mxu0 %v2845
        %3307 = vmatprep.subr.bf16.mxu0 %v2850
        %3308 = vmatpush1.bf16.msra.mxu0 %v2849
        %3309 = vmatprep.subr.bf16.mxu0 %v2854
        %3310 = vmatpush1.bf16.msra.mxu0 %v2853
        %3311 = vmatprep.subr.bf16.mxu0 %v2858
        %3312 = vmatpush1.bf16.msra.mxu0 %v2857
        %3313 = vmatprep.subr.bf16.mxu0 %v2862
        %3314 = vmatpush1.bf16.msra.mxu0 %v2861
        %3315 = vmatprep.subr.bf16.mxu0 %v2866
        %3316 = vmatpush1.bf16.msra.mxu0 %v2865
        %3317 = vmatprep.mubr.bf16.mxu0 %v2238
        %3318 = vmatmul.mubr.bf16.gmra.mrb[0].mxu0 %v2237
        %v3319 = vpop.f32.mrb[0].mxu0
        %v3320 = vadd.f32 %v2410, %v3319
        %v3321 = vpop.f32.mrb[0].mxu0
        %v3322 = vadd.f32 %v2414, %v3321
        %v3323 = vpop.f32.mrb[0].mxu0
        %v3324 = vadd.f32 %v2410, %v3323
        %v3325 = vpop.f32.mrb[0].mxu0
        %v3326 = vadd.f32 %v2414, %v3325
        %3327 = vmatprep.mubr.bf16.mxu0 %v2242
        %3328 = vmatmul.mubr.bf16.gmra.mrb[0].mxu0 %v2241
        %v3329 = vpop.f32.mrb[0].mxu0
        %v3330 = vadd.f32 %v2410, %v3329
        %v3331 = vpop.f32.mrb[0].mxu0
        %v3332 = vadd.f32 %v2414, %v3331
        %v3333 = vpop.f32.mrb[0].mxu0
        %v3334 = vadd.f32 %v2410, %v3333
        %v3335 = vpop.f32.mrb[0].mxu0
        %v3336 = vadd.f32 %v2414, %v3335
        %3337 = vmatprep.mubr.bf16.mxu0 %v2246
        %3338 = vmatmul.mubr.bf16.gmra.mrb[0].mxu0 %v2245
        %v3339 = vpop.f32.mrb[0].mxu0
        %v3340 = vadd.f32 %v2410, %v3339
        %v3341 = vpop.f32.mrb[0].mxu0
        %v3342 = vadd.f32 %v2414, %v3341
        %v3343 = vpop.f32.mrb[0].mxu0
        %v3344 = vadd.f32 %v2410, %v3343
        %v3345 = vpop.f32.mrb[0].mxu0
        %v3346 = vadd.f32 %v2414, %v3345
        %3347 = vmatprep.mubr.bf16.mxu0 %v2250
        %3348 = vmatmul.mubr.bf16.gmra.mrb[0].mxu0 %v2249
        %v3349 = vpop.f32.mrb[0].mxu0
        %v3350 = vadd.f32 %v2410, %v3349
        %v3351 = vpop.f32.mrb[0].mxu0
        %v3352 = vadd.f32 %v2414, %v3351
        %v3353 = vpop.f32.mrb[0].mxu0
        %v3354 = vadd.f32 %v2410, %v3353
        %v3355 = vpop.f32.mrb[0].mxu0
        %v3356 = vadd.f32 %v2414, %v3355
        %3357 = vmatprep.mubr.bf16.mxu0 %v2254
        %3358 = vmatmul.mubr.bf16.gmra.mrb[0].mxu0 %v2253
        %v3359 = vpop.f32.mrb[0].mxu0
        %v3360 = vadd.f32 %v2410, %v3359
        %v3361 = vpop.f32.mrb[0].mxu0
        %v3362 = vadd.f32 %v2414, %v3361
        %v3363 = vpop.f32.mrb[0].mxu0
        %v3364 = vadd.f32 %v2410, %v3363
        %v3365 = vpop.f32.mrb[0].mxu0
        %v3366 = vadd.f32 %v2414, %v3365
        %3367 = vmatprep.mubr.bf16.mxu0 %v2258
        %3368 = vmatmul.mubr.bf16.gmra.mrb[0].mxu0 %v2257
        %v3369 = vpop.f32.mrb[0].mxu0
        %v3370 = vadd.f32 %v2410, %v3369
        %v3371 = vpop.f32.mrb[0].mxu0
        %v3372 = vadd.f32 %v2414, %v3371
        %v3373 = vpop.f32.mrb[0].mxu0
        %v3374 = vadd.f32 %v2410, %v3373
        %v3375 = vpop.f32.mrb[0].mxu0
        %v3376 = vadd.f32 %v2414, %v3375
        %3377 = vmatprep.mubr.bf16.mxu0 %v2262
        %3378 = vmatmul.mubr.bf16.gmra.mrb[0].mxu0 %v2261
        %v3379 = vpop.f32.mrb[0].mxu0
        %v3380 = vadd.f32 %v2410, %v3379
        %v3381 = vpop.f32.mrb[0].mxu0
        %v3382 = vadd.f32 %v2414, %v3381
        %v3383 = vpop.f32.mrb[0].mxu0
        %v3384 = vadd.f32 %v2410, %v3383
        %v3385 = vpop.f32.mrb[0].mxu0
        %v3386 = vadd.f32 %v2414, %v3385
        %3387 = vmatprep.mubr.bf16.mxu0 %v2266
        %3388 = vmatmul.mubr.bf16.gmra.mrb[0].mxu0 %v2265
        %v3389 = vpop.f32.mrb[0].mxu0
        %v3390 = vadd.f32 %v2410, %v3389
        %v3391 = vpop.f32.mrb[0].mxu0
        %v3392 = vadd.f32 %v2414, %v3391
        %v3393 = vpop.f32.mrb[0].mxu0
        %v3394 = vadd.f32 %v2410, %v3393
        %v3395 = vpop.f32.mrb[0].mxu0
        %v3396 = vadd.f32 %v2414, %v3395
        %3397 = vdwg.mxu0
        %3398 = vmatprep.subr.bf16.mxu0 %v2870
        %3399 = vmatpush1.bf16.msra.mxu0 %v2869
        %3400 = vmatprep.subr.bf16.mxu0 %v2874
        %3401 = vmatpush1.bf16.msra.mxu0 %v2873
        %3402 = vmatprep.subr.bf16.mxu0 %v2878
        %3403 = vmatpush1.bf16.msra.mxu0 %v2877
        %3404 = vmatprep.subr.bf16.mxu0 %v2882
        %3405 = vmatpush1.bf16.msra.mxu0 %v2881
        %3406 = vmatprep.subr.bf16.mxu0 %v2886
        %3407 = vmatpush1.bf16.msra.mxu0 %v2885
        %3408 = vmatprep.subr.bf16.mxu0 %v2890
        %3409 = vmatpush1.bf16.msra.mxu0 %v2889
        %3410 = vmatprep.subr.bf16.mxu0 %v2894
        %3411 = vmatpush1.bf16.msra.mxu0 %v2893
        %3412 = vmatprep.subr.bf16.mxu0 %v2898
        %3413 = vmatpush1.bf16.msra.mxu0 %v2897
        %3414 = vmatprep.subr.bf16.mxu0 %v2902
        %3415 = vmatpush1.bf16.msra.mxu0 %v2901
        %3416 = vmatprep.subr.bf16.mxu0 %v2906
        %3417 = vmatpush1.bf16.msra.mxu0 %v2905
        %3418 = vmatprep.subr.bf16.mxu0 %v2910
        %3419 = vmatpush1.bf16.msra.mxu0 %v2909
        %3420 = vmatprep.subr.bf16.mxu0 %v2914
        %3421 = vmatpush1.bf16.msra.mxu0 %v2913
        %3422 = vmatprep.subr.bf16.mxu0 %v2918
        %3423 = vmatpush1.bf16.msra.mxu0 %v2917
        %3424 = vmatprep.subr.bf16.mxu0 %v2922
        %3425 = vmatpush1.bf16.msra.mxu0 %v2921
        %3426 = vmatprep.subr.bf16.mxu0 %v2926
        %3427 = vmatpush1.bf16.msra.mxu0 %v2925
        %3428 = vmatprep.subr.bf16.mxu0 %v2930
        %3429 = vmatpush1.bf16.msra.mxu0 %v2929
        %3430 = vmatprep.mubr.bf16.mxu0 %v2240
        %3431 = vmatmul.mubr.bf16.gmra.mrb[0].mxu0 %v2239
        %v3432 = vpop.f32.mrb[0].mxu0
        %v3433 = vadd.f32 %v3320, %v3432
        %v3434 = vpop.f32.mrb[0].mxu0
        %v3435 = vadd.f32 %v3322, %v3434
        %v3436 = vpop.f32.mrb[0].mxu0
        %v3437 = vadd.f32 %v3324, %v3436
        %v3438 = vpop.f32.mrb[0].mxu0
        %v3439 = vadd.f32 %v3326, %v3438
        %3440 = vmatprep.mubr.bf16.mxu0 %v2244
        %3441 = vmatmul.mubr.bf16.gmra.mrb[0].mxu0 %v2243
        %v3442 = vpop.f32.mrb[0].mxu0
        %v3443 = vadd.f32 %v3330, %v3442
        %v3444 = vpop.f32.mrb[0].mxu0
        %v3445 = vadd.f32 %v3332, %v3444
        %v3446 = vpop.f32.mrb[0].mxu0
        %v3447 = vadd.f32 %v3334, %v3446
        %v3448 = vpop.f32.mrb[0].mxu0
        %v3449 = vadd.f32 %v3336, %v3448
        %3450 = vmatprep.mubr.bf16.mxu0 %v2248
        %3451 = vmatmul.mubr.bf16.gmra.mrb[0].mxu0 %v2247
        %v3452 = vpop.f32.mrb[0].mxu0
        %v3453 = vadd.f32 %v3340, %v3452
        %v3454 = vpop.f32.mrb[0].mxu0
        %v3455 = vadd.f32 %v3342, %v3454
        %v3456 = vpop.f32.mrb[0].mxu0
        %v3457 = vadd.f32 %v3344, %v3456
        %v3458 = vpop.f32.mrb[0].mxu0
        %v3459 = vadd.f32 %v3346, %v3458
        %3460 = vmatprep.mubr.bf16.mxu0 %v2252
        %3461 = vmatmul.mubr.bf16.gmra.mrb[0].mxu0 %v2251
        %v3462 = vpop.f32.mrb[0].mxu0
        %v3463 = vadd.f32 %v3350, %v3462
        %v3464 = vpop.f32.mrb[0].mxu0
        %v3465 = vadd.f32 %v3352, %v3464
        %v3466 = vpop.f32.mrb[0].mxu0
        %v3467 = vadd.f32 %v3354, %v3466
        %v3468 = vpop.f32.mrb[0].mxu0
        %v3469 = vadd.f32 %v3356, %v3468
        %3470 = vmatprep.mubr.bf16.mxu0 %v2256
        %3471 = vmatmul.mubr.bf16.gmra.mrb[0].mxu0 %v2255
        %v3472 = vpop.f32.mrb[0].mxu0
        %v3473 = vadd.f32 %v3360, %v3472
        %v3474 = vpop.f32.mrb[0].mxu0
        %v3475 = vadd.f32 %v3362, %v3474
        %v3476 = vpop.f32.mrb[0].mxu0
        %v3477 = vadd.f32 %v3364, %v3476
        %v3478 = vpop.f32.mrb[0].mxu0
        %v3479 = vadd.f32 %v3366, %v3478
        %3480 = vmatprep.mubr.bf16.mxu0 %v2260
        %3481 = vmatmul.mubr.bf16.gmra.mrb[0].mxu0 %v2259
        %v3482 = vpop.f32.mrb[0].mxu0
        %v3483 = vadd.f32 %v3370, %v3482
        %v3484 = vpop.f32.mrb[0].mxu0
        %v3485 = vadd.f32 %v3372, %v3484
        %v3486 = vpop.f32.mrb[0].mxu0
        %v3487 = vadd.f32 %v3374, %v3486
        %v3488 = vpop.f32.mrb[0].mxu0
        %v3489 = vadd.f32 %v3376, %v3488
        %3490 = vmatprep.mubr.bf16.mxu0 %v2264
        %3491 = vmatmul.mubr.bf16.gmra.mrb[0].mxu0 %v2263
        %v3492 = vpop.f32.mrb[0].mxu0
        %v3493 = vadd.f32 %v3380, %v3492
        %v3494 = vpop.f32.mrb[0].mxu0
        %v3495 = vadd.f32 %v3382, %v3494
        %v3496 = vpop.f32.mrb[0].mxu0
        %v3497 = vadd.f32 %v3384, %v3496
        %v3498 = vpop.f32.mrb[0].mxu0
        %v3499 = vadd.f32 %v3386, %v3498
        %3500 = vmatprep.mubr.bf16.mxu0 %v2268
        %3501 = vmatmul.mubr.bf16.gmra.mrb[0].mxu0 %v2267
        %v3502 = vpop.f32.mrb[0].mxu0
        %v3503 = vadd.f32 %v3390, %v3502
        %v3504 = vpop.f32.mrb[0].mxu0
        %v3505 = vadd.f32 %v3392, %v3504
        %v3506 = vpop.f32.mrb[0].mxu0
        %v3507 = vadd.f32 %v3394, %v3506
        %v3508 = vpop.f32.mrb[0].mxu0
        %v3509 = vadd.f32 %v3396, %v3508
        %3510 = vdwg.mxu0
        %v3511 = vpack.c.bf16 %v3211, %v3207
        %v3512 = vpack.c.bf16 %v3213, %v3209
        %v3513 = vpack.c.bf16 %v3437, %v3433
        %v3514 = vpack.c.bf16 %v3439, %v3435
        %v3515 = vpack.c.bf16 %v3221, %v3217
        %v3516 = vpack.c.bf16 %v3223, %v3219
        %v3517 = vpack.c.bf16 %v3447, %v3443
        %v3518 = vpack.c.bf16 %v3449, %v3445
        %v3519 = vpack.c.bf16 %v3231, %v3227
        %v3520 = vpack.c.bf16 %v3233, %v3229
        %v3521 = vpack.c.bf16 %v3457, %v3453
        %v3522 = vpack.c.bf16 %v3459, %v3455
        %v3523 = vpack.c.bf16 %v3241, %v3237
        %v3524 = vpack.c.bf16 %v3243, %v3239
        %v3525 = vpack.c.bf16 %v3467, %v3463
        %v3526 = vpack.c.bf16 %v3469, %v3465
        %v3527 = vpack.c.bf16 %v3251, %v3247
        %v3528 = vpack.c.bf16 %v3253, %v3249
        %v3529 = vpack.c.bf16 %v3477, %v3473
        %v3530 = vpack.c.bf16 %v3479, %v3475
        %v3531 = vpack.c.bf16 %v3261, %v3257
        %v3532 = vpack.c.bf16 %v3263, %v3259
        %v3533 = vpack.c.bf16 %v3487, %v3483
        %v3534 = vpack.c.bf16 %v3489, %v3485
        %v3535 = vpack.c.bf16 %v3271, %v3267
        %v3536 = vpack.c.bf16 %v3273, %v3269
        %v3537 = vpack.c.bf16 %v3497, %v3493
        %v3538 = vpack.c.bf16 %v3499, %v3495
        %v3539 = vpack.c.bf16 %v3281, %v3277
        %v3540 = vpack.c.bf16 %v3283, %v3279
        %v3541 = vpack.c.bf16 %v3507, %v3503
        %v3542 = vpack.c.bf16 %v3509, %v3505
        %v3543 = vmax.bf16 %v3511, 0
        %v3544 = vmax.bf16 %v3512, 0
        %v3545 = vmax.bf16 %v3513, 0
        %v3546 = vmax.bf16 %v3514, 0
        %v3547 = vmax.bf16 %v3515, 0
        %v3548 = vmax.bf16 %v3516, 0
        %v3549 = vmax.bf16 %v3517, 0
        %v3550 = vmax.bf16 %v3518, 0
        %v3551 = vmax.bf16 %v3519, 0
        %v3552 = vmax.bf16 %v3520, 0
        %v3553 = vmax.bf16 %v3521, 0
        %v3554 = vmax.bf16 %v3522, 0
        %v3555 = vmax.bf16 %v3523, 0
        %v3556 = vmax.bf16 %v3524, 0
        %v3557 = vmax.bf16 %v3525, 0
        %v3558 = vmax.bf16 %v3526, 0
        %v3559 = vmax.bf16 %v3527, 0
        %v3560 = vmax.bf16 %v3528, 0
        %v3561 = vmax.bf16 %v3529, 0
        %v3562 = vmax.bf16 %v3530, 0
        %v3563 = vmax.bf16 %v3531, 0
        %v3564 = vmax.bf16 %v3532, 0
        %v3565 = vmax.bf16 %v3533, 0
        %v3566 = vmax.bf16 %v3534, 0
        %v3567 = vmax.bf16 %v3535, 0
        %v3568 = vmax.bf16 %v3536, 0
        %v3569 = vmax.bf16 %v3537, 0
        %v3570 = vmax.bf16 %v3538, 0
        %v3571 = vmax.bf16 %v3539, 0
        %v3572 = vmax.bf16 %v3540, 0
        %v3573 = vmax.bf16 %v3541, 0
        %v3574 = vmax.bf16 %v3542, 0
        %v3575 = vld [vmem:[%s7] sm:$0xff]
        %v3576 = vld [vmem:[%s7 + $0x8] sm:$0xff]
        %v3577 = vld [vmem:[%s7 + $0x10] sm:$0xff]
        %v3578 = vld [vmem:[%s7 + $0x18] sm:$0xff]
        %v3579 = vld [vmem:[%s7 + $0x20] sm:$0xff]
        %v3580 = vld [vmem:[%s7 + $0x28] sm:$0xff]
        %v3581 = vld [vmem:[%s7 + $0x30] sm:$0xff]
        %v3582 = vld [vmem:[%s7 + $0x38] sm:$0xff]
        %v3583 = vld [vmem:[%s7 + $0x40] sm:$0xff]
        %v3584 = vld [vmem:[%s7 + $0x48] sm:$0xff]
        %v3585 = vld [vmem:[%s7 + $0x50] sm:$0xff]
        %v3586 = vld [vmem:[%s7 + $0x58] sm:$0xff]
        %v3587 = vld [vmem:[%s7 + $0x60] sm:$0xff]
        %v3588 = vld [vmem:[%s7 + $0x68] sm:$0xff]
        %v3589 = vld [vmem:[%s7 + $0x70] sm:$0xff]
        %v3590 = vld [vmem:[%s7 + $0x78] sm:$0xff]
        %v3591 = vld [vmem:[%s7 + $0x80] sm:$0xff]
        %v3592 = vld [vmem:[%s7 + $0x88] sm:$0xff]
        %v3593 = vld [vmem:[%s7 + $0x90] sm:$0xff]
        %v3594 = vld [vmem:[%s7 + $0x98] sm:$0xff]
        %v3595 = vld [vmem:[%s7 + $0xa0] sm:$0xff]
        %v3596 = vld [vmem:[%s7 + $0xa8] sm:$0xff]
        %v3597 = vld [vmem:[%s7 + $0xb0] sm:$0xff]
        %v3598 = vld [vmem:[%s7 + $0xb8] sm:$0xff]
        %v3599 = vld [vmem:[%s7 + $0xc0] sm:$0xff]
        %v3600 = vld [vmem:[%s7 + $0xc8] sm:$0xff]
        %v3601 = vld [vmem:[%s7 + $0xd0] sm:$0xff]
        %v3602 = vld [vmem:[%s7 + $0xd8] sm:$0xff]
        %v3603 = vld [vmem:[%s7 + $0xe0] sm:$0xff]
        %v3604 = vld [vmem:[%s7 + $0xe8] sm:$0xff]
        %v3605 = vld [vmem:[%s7 + $0xf0] sm:$0xff]
        %v3606 = vld [vmem:[%s7 + $0xf8] sm:$0xff]
        %v3607 = vld [vmem:[%s7 + $0x100] sm:$0xff]
        %v3608 = vld [vmem:[%s7 + $0x108] sm:$0xff]
        %v3609 = vld [vmem:[%s7 + $0x110] sm:$0xff]
        %v3610 = vld [vmem:[%s7 + $0x118] sm:$0xff]
        %v3611 = vld [vmem:[%s7 + $0x120] sm:$0xff]
        %v3612 = vld [vmem:[%s7 + $0x128] sm:$0xff]
        %v3613 = vld [vmem:[%s7 + $0x130] sm:$0xff]
        %v3614 = vld [vmem:[%s7 + $0x138] sm:$0xff]
        %v3615 = vld [vmem:[%s7 + $0x140] sm:$0xff]
        %v3616 = vld [vmem:[%s7 + $0x148] sm:$0xff]
        %v3617 = vld [vmem:[%s7 + $0x150] sm:$0xff]
        %v3618 = vld [vmem:[%s7 + $0x158] sm:$0xff]
        %v3619 = vld [vmem:[%s7 + $0x160] sm:$0xff]
        %v3620 = vld [vmem:[%s7 + $0x168] sm:$0xff]
        %v3621 = vld [vmem:[%s7 + $0x170] sm:$0xff]
        %v3622 = vld [vmem:[%s7 + $0x178] sm:$0xff]
        %v3623 = vld [vmem:[%s7 + $0x180] sm:$0xff]
        %v3624 = vld [vmem:[%s7 + $0x188] sm:$0xff]
        %v3625 = vld [vmem:[%s7 + $0x190] sm:$0xff]
        %v3626 = vld [vmem:[%s7 + $0x198] sm:$0xff]
        %v3627 = vld [vmem:[%s7 + $0x1a0] sm:$0xff]
        %v3628 = vld [vmem:[%s7 + $0x1a8] sm:$0xff]
        %v3629 = vld [vmem:[%s7 + $0x1b0] sm:$0xff]
        %v3630 = vld [vmem:[%s7 + $0x1b8] sm:$0xff]
        %v3631 = vld [vmem:[%s7 + $0x1c0] sm:$0xff]
        %v3632 = vld [vmem:[%s7 + $0x1c8] sm:$0xff]
        %v3633 = vld [vmem:[%s7 + $0x1d0] sm:$0xff]
        %v3634 = vld [vmem:[%s7 + $0x1d8] sm:$0xff]
        %v3635 = vld [vmem:[%s7 + $0x1e0] sm:$0xff]
        %v3636 = vld [vmem:[%s7 + $0x1e8] sm:$0xff]
        %v3637 = vld [vmem:[%s7 + $0x1f0] sm:$0xff]
        %v3638 = vld [vmem:[%s7 + $0x1f8] sm:$0xff]
        %v3639 = vld [vmem:[%s8] sm:$0x3]
        %v3641 = vlaneseq
        %v3642 = vshrl.u32 %v3641, 7
        %v3643 = vsub.s32 0, %v3642
        %v3644 = vrot.slane %v3639, %v3643
        %v3645 = vlaneseq
        %v3646 = vshrl.u32 %v3645, 7
        %v3647 = vsub.s32 1, %v3646
        %v3648 = vrot.slane %v3639, %v3647
        %v3715 = vunpack.c.l.b16 %v3575
        %v3716 = vunpack.c.h.b16 %v3575
        %v3717 = vunpack.c.l.b16 %v3576
        %v3718 = vunpack.c.h.b16 %v3576
        %v3719 = vunpack.c.l.b16 %v3577
        %v3720 = vunpack.c.h.b16 %v3577
        %v3721 = vunpack.c.l.b16 %v3578
        %v3722 = vunpack.c.h.b16 %v3578
        %v3723 = vunpack.c.l.b16 %v3579
        %v3724 = vunpack.c.h.b16 %v3579
        %v3725 = vunpack.c.l.b16 %v3580
        %v3726 = vunpack.c.h.b16 %v3580
        %v3727 = vunpack.c.l.b16 %v3581
        %v3728 = vunpack.c.h.b16 %v3581
        %v3729 = vunpack.c.l.b16 %v3582
        %v3730 = vunpack.c.h.b16 %v3582
        %v3731 = vunpack.c.l.b16 %v3583
        %v3732 = vunpack.c.h.b16 %v3583
        %v3733 = vunpack.c.l.b16 %v3584
        %v3734 = vunpack.c.h.b16 %v3584
        %v3735 = vunpack.c.l.b16 %v3585
        %v3736 = vunpack.c.h.b16 %v3585
        %v3737 = vunpack.c.l.b16 %v3586
        %v3738 = vunpack.c.h.b16 %v3586
        %v3739 = vunpack.c.l.b16 %v3587
        %v3740 = vunpack.c.h.b16 %v3587
        %v3741 = vunpack.c.l.b16 %v3588
        %v3742 = vunpack.c.h.b16 %v3588
        %v3743 = vunpack.c.l.b16 %v3589
        %v3744 = vunpack.c.h.b16 %v3589
        %v3745 = vunpack.c.l.b16 %v3590
        %v3746 = vunpack.c.h.b16 %v3590
        %v3747 = vunpack.c.l.b16 %v3591
        %v3748 = vunpack.c.h.b16 %v3591
        %v3749 = vunpack.c.l.b16 %v3592
        %v3750 = vunpack.c.h.b16 %v3592
        %v3751 = vunpack.c.l.b16 %v3593
        %v3752 = vunpack.c.h.b16 %v3593
        %v3753 = vunpack.c.l.b16 %v3594
        %v3754 = vunpack.c.h.b16 %v3594
        %v3755 = vunpack.c.l.b16 %v3595
        %v3756 = vunpack.c.h.b16 %v3595
        %v3757 = vunpack.c.l.b16 %v3596
        %v3758 = vunpack.c.h.b16 %v3596
        %v3759 = vunpack.c.l.b16 %v3597
        %v3760 = vunpack.c.h.b16 %v3597
        %v3761 = vunpack.c.l.b16 %v3598
        %v3762 = vunpack.c.h.b16 %v3598
        %v3763 = vunpack.c.l.b16 %v3599
        %v3764 = vunpack.c.h.b16 %v3599
        %v3765 = vunpack.c.l.b16 %v3600
        %v3766 = vunpack.c.h.b16 %v3600
        %v3767 = vunpack.c.l.b16 %v3601
        %v3768 = vunpack.c.h.b16 %v3601
        %v3769 = vunpack.c.l.b16 %v3602
        %v3770 = vunpack.c.h.b16 %v3602
        %v3771 = vunpack.c.l.b16 %v3603
        %v3772 = vunpack.c.h.b16 %v3603
        %v3773 = vunpack.c.l.b16 %v3604
        %v3774 = vunpack.c.h.b16 %v3604
        %v3775 = vunpack.c.l.b16 %v3605
        %v3776 = vunpack.c.h.b16 %v3605
        %v3777 = vunpack.c.l.b16 %v3606
        %v3778 = vunpack.c.h.b16 %v3606
        %v3779 = vunpack.c.l.b16 %v3607
        %v3780 = vunpack.c.h.b16 %v3607
        %v3781 = vunpack.c.l.b16 %v3608
        %v3782 = vunpack.c.h.b16 %v3608
        %v3783 = vunpack.c.l.b16 %v3609
        %v3784 = vunpack.c.h.b16 %v3609
        %v3785 = vunpack.c.l.b16 %v3610
        %v3786 = vunpack.c.h.b16 %v3610
        %v3787 = vunpack.c.l.b16 %v3611
        %v3788 = vunpack.c.h.b16 %v3611
        %v3789 = vunpack.c.l.b16 %v3612
        %v3790 = vunpack.c.h.b16 %v3612
        %v3791 = vunpack.c.l.b16 %v3613
        %v3792 = vunpack.c.h.b16 %v3613
        %v3793 = vunpack.c.l.b16 %v3614
        %v3794 = vunpack.c.h.b16 %v3614
        %v3795 = vunpack.c.l.b16 %v3615
        %v3796 = vunpack.c.h.b16 %v3615
        %v3797 = vunpack.c.l.b16 %v3616
        %v3798 = vunpack.c.h.b16 %v3616
        %v3799 = vunpack.c.l.b16 %v3617
        %v3800 = vunpack.c.h.b16 %v3617
        %v3801 = vunpack.c.l.b16 %v3618
        %v3802 = vunpack.c.h.b16 %v3618
        %v3803 = vunpack.c.l.b16 %v3619
        %v3804 = vunpack.c.h.b16 %v3619
        %v3805 = vunpack.c.l.b16 %v3620
        %v3806 = vunpack.c.h.b16 %v3620
        %v3807 = vunpack.c.l.b16 %v3621
        %v3808 = vunpack.c.h.b16 %v3621
        %v3809 = vunpack.c.l.b16 %v3622
        %v3810 = vunpack.c.h.b16 %v3622
        %v3811 = vunpack.c.l.b16 %v3623
        %v3812 = vunpack.c.h.b16 %v3623
        %v3813 = vunpack.c.l.b16 %v3624
        %v3814 = vunpack.c.h.b16 %v3624
        %v3815 = vunpack.c.l.b16 %v3625
        %v3816 = vunpack.c.h.b16 %v3625
        %v3817 = vunpack.c.l.b16 %v3626
        %v3818 = vunpack.c.h.b16 %v3626
        %v3819 = vunpack.c.l.b16 %v3627
        %v3820 = vunpack.c.h.b16 %v3627
        %v3821 = vunpack.c.l.b16 %v3628
        %v3822 = vunpack.c.h.b16 %v3628
        %v3823 = vunpack.c.l.b16 %v3629
        %v3824 = vunpack.c.h.b16 %v3629
        %v3825 = vunpack.c.l.b16 %v3630
        %v3826 = vunpack.c.h.b16 %v3630
        %v3827 = vunpack.c.l.b16 %v3631
        %v3828 = vunpack.c.h.b16 %v3631
        %v3829 = vunpack.c.l.b16 %v3632
        %v3830 = vunpack.c.h.b16 %v3632
        %v3831 = vunpack.c.l.b16 %v3633
        %v3832 = vunpack.c.h.b16 %v3633
        %v3833 = vunpack.c.l.b16 %v3634
        %v3834 = vunpack.c.h.b16 %v3634
        %v3835 = vunpack.c.l.b16 %v3635
        %v3836 = vunpack.c.h.b16 %v3635
        %v3837 = vunpack.c.l.b16 %v3636
        %v3838 = vunpack.c.h.b16 %v3636
        %v3839 = vunpack.c.l.b16 %v3637
        %v3840 = vunpack.c.h.b16 %v3637
        %v3841 = vunpack.c.l.b16 %v3638
        %v3842 = vunpack.c.h.b16 %v3638
        %v3843 = vpack.c.b16 %v3717, %v3715
        %v3844 = vpack.c.b16 %v3718, %v3716
        %v3845 = vpack.c.b16 %v3721, %v3719
        %v3846 = vpack.c.b16 %v3722, %v3720
        %v3847 = vpack.c.b16 %v3725, %v3723
        %v3848 = vpack.c.b16 %v3726, %v3724
        %v3849 = vpack.c.b16 %v3729, %v3727
        %v3850 = vpack.c.b16 %v3730, %v3728
        %v3851 = vpack.c.b16 %v3733, %v3731
        %v3852 = vpack.c.b16 %v3734, %v3732
        %v3853 = vpack.c.b16 %v3737, %v3735
        %v3854 = vpack.c.b16 %v3738, %v3736
        %v3855 = vpack.c.b16 %v3741, %v3739
        %v3856 = vpack.c.b16 %v3742, %v3740
        %v3857 = vpack.c.b16 %v3745, %v3743
        %v3858 = vpack.c.b16 %v3746, %v3744
        %v3859 = vpack.c.b16 %v3749, %v3747
        %v3860 = vpack.c.b16 %v3750, %v3748
        %v3861 = vpack.c.b16 %v3753, %v3751
        %v3862 = vpack.c.b16 %v3754, %v3752
        %v3863 = vpack.c.b16 %v3757, %v3755
        %v3864 = vpack.c.b16 %v3758, %v3756
        %v3865 = vpack.c.b16 %v3761, %v3759
        %v3866 = vpack.c.b16 %v3762, %v3760
        %v3867 = vpack.c.b16 %v3765, %v3763
        %v3868 = vpack.c.b16 %v3766, %v3764
        %v3869 = vpack.c.b16 %v3769, %v3767
        %v3870 = vpack.c.b16 %v3770, %v3768
        %v3871 = vpack.c.b16 %v3773, %v3771
        %v3872 = vpack.c.b16 %v3774, %v3772
        %v3873 = vpack.c.b16 %v3777, %v3775
        %v3874 = vpack.c.b16 %v3778, %v3776
        %v3875 = vpack.c.b16 %v3781, %v3779
        %v3876 = vpack.c.b16 %v3782, %v3780
        %v3877 = vpack.c.b16 %v3785, %v3783
        %v3878 = vpack.c.b16 %v3786, %v3784
        %v3879 = vpack.c.b16 %v3789, %v3787
        %v3880 = vpack.c.b16 %v3790, %v3788
        %v3881 = vpack.c.b16 %v3793, %v3791
        %v3882 = vpack.c.b16 %v3794, %v3792
        %v3883 = vpack.c.b16 %v3797, %v3795
        %v3884 = vpack.c.b16 %v3798, %v3796
        %v3885 = vpack.c.b16 %v3801, %v3799
        %v3886 = vpack.c.b16 %v3802, %v3800
        %v3887 = vpack.c.b16 %v3805, %v3803
        %v3888 = vpack.c.b16 %v3806, %v3804
        %v3889 = vpack.c.b16 %v3809, %v3807
        %v3890 = vpack.c.b16 %v3810, %v3808
        %v3891 = vpack.c.b16 %v3813, %v3811
        %v3892 = vpack.c.b16 %v3814, %v3812
        %v3893 = vpack.c.b16 %v3817, %v3815
        %v3894 = vpack.c.b16 %v3818, %v3816
        %v3895 = vpack.c.b16 %v3821, %v3819
        %v3896 = vpack.c.b16 %v3822, %v3820
        %v3897 = vpack.c.b16 %v3825, %v3823
        %v3898 = vpack.c.b16 %v3826, %v3824
        %v3899 = vpack.c.b16 %v3829, %v3827
        %v3900 = vpack.c.b16 %v3830, %v3828
        %v3901 = vpack.c.b16 %v3833, %v3831
        %v3902 = vpack.c.b16 %v3834, %v3832
        %v3903 = vpack.c.b16 %v3837, %v3835
        %v3904 = vpack.c.b16 %v3838, %v3836
        %v3905 = vpack.c.b16 %v3841, %v3839
        %v3906 = vpack.c.b16 %v3842, %v3840
        %3971 = vmatprep.subr.bf16.mxu0 %v3844
        %3972 = vmatpush1.bf16.msra.mxu0 %v3843
        %3973 = vmatprep.subr.bf16.mxu0 %v3846
        %3974 = vmatpush1.bf16.msra.mxu0 %v3845
        %3975 = vmatprep.subr.bf16.mxu0 %v3848
        %3976 = vmatpush1.bf16.msra.mxu0 %v3847
        %3977 = vmatprep.subr.bf16.mxu0 %v3850
        %3978 = vmatpush1.bf16.msra.mxu0 %v3849
        %3979 = vmatprep.subr.bf16.mxu0 %v3852
        %3980 = vmatpush1.bf16.msra.mxu0 %v3851
        %3981 = vmatprep.subr.bf16.mxu0 %v3854
        %3982 = vmatpush1.bf16.msra.mxu0 %v3853
        %3983 = vmatprep.subr.bf16.mxu0 %v3856
        %3984 = vmatpush1.bf16.msra.mxu0 %v3855
        %3985 = vmatprep.subr.bf16.mxu0 %v3858
        %3986 = vmatpush1.bf16.msra.mxu0 %v3857
        %3987 = vmatprep.subr.bf16.mxu0 %v3860
        %3988 = vmatpush1.bf16.msra.mxu0 %v3859
        %3989 = vmatprep.subr.bf16.mxu0 %v3862
        %3990 = vmatpush1.bf16.msra.mxu0 %v3861
        %3991 = vmatprep.subr.bf16.mxu0 %v3864
        %3992 = vmatpush1.bf16.msra.mxu0 %v3863
        %3993 = vmatprep.subr.bf16.mxu0 %v3866
        %3994 = vmatpush1.bf16.msra.mxu0 %v3865
        %3995 = vmatprep.subr.bf16.mxu0 %v3868
        %3996 = vmatpush1.bf16.msra.mxu0 %v3867
        %3997 = vmatprep.subr.bf16.mxu0 %v3870
        %3998 = vmatpush1.bf16.msra.mxu0 %v3869
        %3999 = vmatprep.subr.bf16.mxu0 %v3872
        %4000 = vmatpush1.bf16.msra.mxu0 %v3871
        %4001 = vmatprep.subr.bf16.mxu0 %v3874
        %4002 = vmatpush1.bf16.msra.mxu0 %v3873
        %4003 = vmatprep.mubr.bf16.mxu0 %v3544
        %4004 = vmatmul.mubr.bf16.gmra.mrb[0].mxu0 %v3543
        %v4005 = vpop.f32.mrb[0].mxu0
        %v4006 = vadd.f32 %v3644, %v4005
        %v4007 = vpop.f32.mrb[0].mxu0
        %v4008 = vadd.f32 %v3648, %v4007
        %v4009 = vpop.f32.mrb[0].mxu0
        %v4010 = vadd.f32 %v3644, %v4009
        %v4011 = vpop.f32.mrb[0].mxu0
        %v4012 = vadd.f32 %v3648, %v4011
        %4013 = vmatprep.mubr.bf16.mxu0 %v3548
        %4014 = vmatmul.mubr.bf16.gmra.mrb[0].mxu0 %v3547
        %v4015 = vpop.f32.mrb[0].mxu0
        %v4016 = vadd.f32 %v3644, %v4015
        %v4017 = vpop.f32.mrb[0].mxu0
        %v4018 = vadd.f32 %v3648, %v4017
        %v4019 = vpop.f32.mrb[0].mxu0
        %v4020 = vadd.f32 %v3644, %v4019
        %v4021 = vpop.f32.mrb[0].mxu0
        %v4022 = vadd.f32 %v3648, %v4021
        %4023 = vmatprep.mubr.bf16.mxu0 %v3552
        %4024 = vmatmul.mubr.bf16.gmra.mrb[0].mxu0 %v3551
        %v4025 = vpop.f32.mrb[0].mxu0
        %v4026 = vadd.f32 %v3644, %v4025
        %v4027 = vpop.f32.mrb[0].mxu0
        %v4028 = vadd.f32 %v3648, %v4027
        %v4029 = vpop.f32.mrb[0].mxu0
        %v4030 = vadd.f32 %v3644, %v4029
        %v4031 = vpop.f32.mrb[0].mxu0
        %v4032 = vadd.f32 %v3648, %v4031
        %4033 = vmatprep.mubr.bf16.mxu0 %v3556
        %4034 = vmatmul.mubr.bf16.gmra.mrb[0].mxu0 %v3555
        %v4035 = vpop.f32.mrb[0].mxu0
        %v4036 = vadd.f32 %v3644, %v4035
        %v4037 = vpop.f32.mrb[0].mxu0
        %v4038 = vadd.f32 %v3648, %v4037
        %v4039 = vpop.f32.mrb[0].mxu0
        %v4040 = vadd.f32 %v3644, %v4039
        %v4041 = vpop.f32.mrb[0].mxu0
        %v4042 = vadd.f32 %v3648, %v4041
        %4043 = vmatprep.mubr.bf16.mxu0 %v3560
        %4044 = vmatmul.mubr.bf16.gmra.mrb[0].mxu0 %v3559
        %v4045 = vpop.f32.mrb[0].mxu0
        %v4046 = vadd.f32 %v3644, %v4045
        %v4047 = vpop.f32.mrb[0].mxu0
        %v4048 = vadd.f32 %v3648, %v4047
        %v4049 = vpop.f32.mrb[0].mxu0
        %v4050 = vadd.f32 %v3644, %v4049
        %v4051 = vpop.f32.mrb[0].mxu0
        %v4052 = vadd.f32 %v3648, %v4051
        %4053 = vmatprep.mubr.bf16.mxu0 %v3564
        %4054 = vmatmul.mubr.bf16.gmra.mrb[0].mxu0 %v3563
        %v4055 = vpop.f32.mrb[0].mxu0
        %v4056 = vadd.f32 %v3644, %v4055
        %v4057 = vpop.f32.mrb[0].mxu0
        %v4058 = vadd.f32 %v3648, %v4057
        %v4059 = vpop.f32.mrb[0].mxu0
        %v4060 = vadd.f32 %v3644, %v4059
        %v4061 = vpop.f32.mrb[0].mxu0
        %v4062 = vadd.f32 %v3648, %v4061
        %4063 = vmatprep.mubr.bf16.mxu0 %v3568
        %4064 = vmatmul.mubr.bf16.gmra.mrb[0].mxu0 %v3567
        %v4065 = vpop.f32.mrb[0].mxu0
        %v4066 = vadd.f32 %v3644, %v4065
        %v4067 = vpop.f32.mrb[0].mxu0
        %v4068 = vadd.f32 %v3648, %v4067
        %v4069 = vpop.f32.mrb[0].mxu0
        %v4070 = vadd.f32 %v3644, %v4069
        %v4071 = vpop.f32.mrb[0].mxu0
        %v4072 = vadd.f32 %v3648, %v4071
        %4073 = vmatprep.mubr.bf16.mxu0 %v3572
        %4074 = vmatmul.mubr.bf16.gmra.mrb[0].mxu0 %v3571
        %v4075 = vpop.f32.mrb[0].mxu0
        %v4076 = vadd.f32 %v3644, %v4075
        %v4077 = vpop.f32.mrb[0].mxu0
        %v4078 = vadd.f32 %v3648, %v4077
        %v4079 = vpop.f32.mrb[0].mxu0
        %v4080 = vadd.f32 %v3644, %v4079
        %v4081 = vpop.f32.mrb[0].mxu0
        %v4082 = vadd.f32 %v3648, %v4081
        %4083 = vdwg.mxu0
        %4084 = vmatprep.subr.bf16.mxu0 %v3876
        %4085 = vmatpush1.bf16.msra.mxu0 %v3875
        %4086 = vmatprep.subr.bf16.mxu0 %v3878
        %4087 = vmatpush1.bf16.msra.mxu0 %v3877
        %4088 = vmatprep.subr.bf16.mxu0 %v3880
        %4089 = vmatpush1.bf16.msra.mxu0 %v3879
        %4090 = vmatprep.subr.bf16.mxu0 %v3882
        %4091 = vmatpush1.bf16.msra.mxu0 %v3881
        %4092 = vmatprep.subr.bf16.mxu0 %v3884
        %4093 = vmatpush1.bf16.msra.mxu0 %v3883
        %4094 = vmatprep.subr.bf16.mxu0 %v3886
        %4095 = vmatpush1.bf16.msra.mxu0 %v3885
        %4096 = vmatprep.subr.bf16.mxu0 %v3888
        %4097 = vmatpush1.bf16.msra.mxu0 %v3887
        %4098 = vmatprep.subr.bf16.mxu0 %v3890
        %4099 = vmatpush1.bf16.msra.mxu0 %v3889
        %4100 = vmatprep.subr.bf16.mxu0 %v3892
        %4101 = vmatpush1.bf16.msra.mxu0 %v3891
        %4102 = vmatprep.subr.bf16.mxu0 %v3894
        %4103 = vmatpush1.bf16.msra.mxu0 %v3893
        %4104 = vmatprep.subr.bf16.mxu0 %v3896
        %4105 = vmatpush1.bf16.msra.mxu0 %v3895
        %4106 = vmatprep.subr.bf16.mxu0 %v3898
        %4107 = vmatpush1.bf16.msra.mxu0 %v3897
        %4108 = vmatprep.subr.bf16.mxu0 %v3900
        %4109 = vmatpush1.bf16.msra.mxu0 %v3899
        %4110 = vmatprep.subr.bf16.mxu0 %v3902
        %4111 = vmatpush1.bf16.msra.mxu0 %v3901
        %4112 = vmatprep.subr.bf16.mxu0 %v3904
        %4113 = vmatpush1.bf16.msra.mxu0 %v3903
        %4114 = vmatprep.subr.bf16.mxu0 %v3906
        %4115 = vmatpush1.bf16.msra.mxu0 %v3905
        %4116 = vmatprep.mubr.bf16.mxu0 %v3546
        %4117 = vmatmul.mubr.bf16.gmra.mrb[0].mxu0 %v3545
        %v4118 = vpop.f32.mrb[0].mxu0
        %v4119 = vadd.f32 %v4006, %v4118
        %v4120 = vpop.f32.mrb[0].mxu0
        %v4121 = vadd.f32 %v4008, %v4120
        %v4122 = vpop.f32.mrb[0].mxu0
        %v4123 = vadd.f32 %v4010, %v4122
        %v4124 = vpop.f32.mrb[0].mxu0
        %v4125 = vadd.f32 %v4012, %v4124
        %4126 = vmatprep.mubr.bf16.mxu0 %v3550
        %4127 = vmatmul.mubr.bf16.gmra.mrb[0].mxu0 %v3549
        %v4128 = vpop.f32.mrb[0].mxu0
        %v4129 = vadd.f32 %v4016, %v4128
        %v4130 = vpop.f32.mrb[0].mxu0
        %v4131 = vadd.f32 %v4018, %v4130
        %v4132 = vpop.f32.mrb[0].mxu0
        %v4133 = vadd.f32 %v4020, %v4132
        %v4134 = vpop.f32.mrb[0].mxu0
        %v4135 = vadd.f32 %v4022, %v4134
        %4136 = vmatprep.mubr.bf16.mxu0 %v3554
        %4137 = vmatmul.mubr.bf16.gmra.mrb[0].mxu0 %v3553
        %v4138 = vpop.f32.mrb[0].mxu0
        %v4139 = vadd.f32 %v4026, %v4138
        %v4140 = vpop.f32.mrb[0].mxu0
        %v4141 = vadd.f32 %v4028, %v4140
        %v4142 = vpop.f32.mrb[0].mxu0
        %v4143 = vadd.f32 %v4030, %v4142
        %v4144 = vpop.f32.mrb[0].mxu0
        %v4145 = vadd.f32 %v4032, %v4144
        %4146 = vmatprep.mubr.bf16.mxu0 %v3558
        %4147 = vmatmul.mubr.bf16.gmra.mrb[0].mxu0 %v3557
        %v4148 = vpop.f32.mrb[0].mxu0
        %v4149 = vadd.f32 %v4036, %v4148
        %v4150 = vpop.f32.mrb[0].mxu0
        %v4151 = vadd.f32 %v4038, %v4150
        %v4152 = vpop.f32.mrb[0].mxu0
        %v4153 = vadd.f32 %v4040, %v4152
        %v4154 = vpop.f32.mrb[0].mxu0
        %v4155 = vadd.f32 %v4042, %v4154
        %4156 = vmatprep.mubr.bf16.mxu0 %v3562
        %4157 = vmatmul.mubr.bf16.gmra.mrb[0].mxu0 %v3561
        %v4158 = vpop.f32.mrb[0].mxu0
        %v4159 = vadd.f32 %v4046, %v4158
        %v4160 = vpop.f32.mrb[0].mxu0
        %v4161 = vadd.f32 %v4048, %v4160
        %v4162 = vpop.f32.mrb[0].mxu0
        %v4163 = vadd.f32 %v4050, %v4162
        %v4164 = vpop.f32.mrb[0].mxu0
        %v4165 = vadd.f32 %v4052, %v4164
        %4166 = vmatprep.mubr.bf16.mxu0 %v3566
        %4167 = vmatmul.mubr.bf16.gmra.mrb[0].mxu0 %v3565
        %v4168 = vpop.f32.mrb[0].mxu0
        %v4169 = vadd.f32 %v4056, %v4168
        %v4170 = vpop.f32.mrb[0].mxu0
        %v4171 = vadd.f32 %v4058, %v4170
        %v4172 = vpop.f32.mrb[0].mxu0
        %v4173 = vadd.f32 %v4060, %v4172
        %v4174 = vpop.f32.mrb[0].mxu0
        %v4175 = vadd.f32 %v4062, %v4174
        %4176 = vmatprep.mubr.bf16.mxu0 %v3570
        %4177 = vmatmul.mubr.bf16.gmra.mrb[0].mxu0 %v3569
        %v4178 = vpop.f32.mrb[0].mxu0
        %v4179 = vadd.f32 %v4066, %v4178
        %v4180 = vpop.f32.mrb[0].mxu0
        %v4181 = vadd.f32 %v4068, %v4180
        %v4182 = vpop.f32.mrb[0].mxu0
        %v4183 = vadd.f32 %v4070, %v4182
        %v4184 = vpop.f32.mrb[0].mxu0
        %v4185 = vadd.f32 %v4072, %v4184
        %4186 = vmatprep.mubr.bf16.mxu0 %v3574
        %4187 = vmatmul.mubr.bf16.gmra.mrb[0].mxu0 %v3573
        %v4188 = vpop.f32.mrb[0].mxu0
        %v4189 = vadd.f32 %v4076, %v4188
        %v4190 = vpop.f32.mrb[0].mxu0
        %v4191 = vadd.f32 %v4078, %v4190
        %v4192 = vpop.f32.mrb[0].mxu0
        %v4193 = vadd.f32 %v4080, %v4192
        %v4194 = vpop.f32.mrb[0].mxu0
        %v4195 = vadd.f32 %v4082, %v4194
        %4196 = vdwg.mxu0
        %v4197 = vpack.c.bf16 %v4123, %v4119
        %v4198 = vpack.c.bf16 %v4125, %v4121
        %v4199 = vpack.c.bf16 %v4133, %v4129
        %v4200 = vpack.c.bf16 %v4135, %v4131
        %v4201 = vpack.c.bf16 %v4143, %v4139
        %v4202 = vpack.c.bf16 %v4145, %v4141
        %v4203 = vpack.c.bf16 %v4153, %v4149
        %v4204 = vpack.c.bf16 %v4155, %v4151
        %v4205 = vpack.c.bf16 %v4163, %v4159
        %v4206 = vpack.c.bf16 %v4165, %v4161
        %v4207 = vpack.c.bf16 %v4173, %v4169
        %v4208 = vpack.c.bf16 %v4175, %v4171
        %v4209 = vpack.c.bf16 %v4183, %v4179
        %v4210 = vpack.c.bf16 %v4185, %v4181
        %v4211 = vpack.c.bf16 %v4193, %v4189
        %v4212 = vpack.c.bf16 %v4195, %v4191
        %v4213 = vmax.bf16 %v4197, 0
        %v4214 = vmax.bf16 %v4198, 0
        %v4215 = vmax.bf16 %v4199, 0
        %v4216 = vmax.bf16 %v4200, 0
        %v4217 = vmax.bf16 %v4201, 0
        %v4218 = vmax.bf16 %v4202, 0
        %v4219 = vmax.bf16 %v4203, 0
        %v4220 = vmax.bf16 %v4204, 0
        %v4221 = vmax.bf16 %v4205, 0
        %v4222 = vmax.bf16 %v4206, 0
        %v4223 = vmax.bf16 %v4207, 0
        %v4224 = vmax.bf16 %v4208, 0
        %v4225 = vmax.bf16 %v4209, 0
        %v4226 = vmax.bf16 %v4210, 0
        %v4227 = vmax.bf16 %v4211, 0
        %v4228 = vmax.bf16 %v4212, 0
        %v4229 = vld [vmem:[%s9] sm:$0xf]
        %v4230 = vld [vmem:[%s9 + $0x4] sm:$0xf]
        %v4231 = vld [vmem:[%s9 + $0x8] sm:$0xf]
        %v4232 = vld [vmem:[%s9 + $0xc] sm:$0xf]
        %v4233 = vld [vmem:[%s9 + $0x10] sm:$0xf]
        %v4234 = vld [vmem:[%s9 + $0x14] sm:$0xf]
        %v4235 = vld [vmem:[%s9 + $0x18] sm:$0xf]
        %v4236 = vld [vmem:[%s9 + $0x1c] sm:$0xf]
        %v4237 = vld [vmem:[%s9 + $0x20] sm:$0xf]
        %v4238 = vld [vmem:[%s9 + $0x24] sm:$0xf]
        %v4239 = vld [vmem:[%s9 + $0x28] sm:$0xf]
        %v4240 = vld [vmem:[%s9 + $0x2c] sm:$0xf]
        %v4241 = vld [vmem:[%s9 + $0x30] sm:$0xf]
        %v4242 = vld [vmem:[%s9 + $0x34] sm:$0xf]
        %v4243 = vld [vmem:[%s9 + $0x38] sm:$0xf]
        %v4244 = vld [vmem:[%s9 + $0x3c] sm:$0xf]
        %v4245 = vld [vmem:[%s9 + $0x40] sm:$0xf]
        %v4246 = vld [vmem:[%s9 + $0x44] sm:$0xf]
        %v4247 = vld [vmem:[%s9 + $0x48] sm:$0xf]
        %v4248 = vld [vmem:[%s9 + $0x4c] sm:$0xf]
        %v4249 = vld [vmem:[%s9 + $0x50] sm:$0xf]
        %v4250 = vld [vmem:[%s9 + $0x54] sm:$0xf]
        %v4251 = vld [vmem:[%s9 + $0x58] sm:$0xf]
        %v4252 = vld [vmem:[%s9 + $0x5c] sm:$0xf]
        %v4253 = vld [vmem:[%s9 + $0x60] sm:$0xf]
        %v4254 = vld [vmem:[%s9 + $0x64] sm:$0xf]
        %v4255 = vld [vmem:[%s9 + $0x68] sm:$0xf]
        %v4256 = vld [vmem:[%s9 + $0x6c] sm:$0xf]
        %v4257 = vld [vmem:[%s9 + $0x70] sm:$0xf]
        %v4258 = vld [vmem:[%s9 + $0x74] sm:$0xf]
        %v4259 = vld [vmem:[%s9 + $0x78] sm:$0xf]
        %v4260 = vld [vmem:[%s9 + $0x7c] sm:$0xf]
        %v4261 = vld [vmem:[%s10] sm:$0x1]
        %v4263 = vlaneseq
        %v4264 = vshrl.u32 %v4263, 7
        %v4265 = vsub.s32 0, %v4264
        %v4266 = vrot.slane %v4261, %v4265
        %v4300 = vunpack.c.l.b16 %v4229
        %v4301 = vunpack.c.l.b16 %v4230
        %v4302 = vunpack.c.l.b16 %v4231
        %v4303 = vunpack.c.l.b16 %v4232
        %v4304 = vunpack.c.l.b16 %v4233
        %v4305 = vunpack.c.l.b16 %v4234
        %v4306 = vunpack.c.l.b16 %v4235
        %v4307 = vunpack.c.l.b16 %v4236
        %v4308 = vunpack.c.l.b16 %v4237
        %v4309 = vunpack.c.l.b16 %v4238
        %v4310 = vunpack.c.l.b16 %v4239
        %v4311 = vunpack.c.l.b16 %v4240
        %v4312 = vunpack.c.l.b16 %v4241
        %v4313 = vunpack.c.l.b16 %v4242
        %v4314 = vunpack.c.l.b16 %v4243
        %v4315 = vunpack.c.l.b16 %v4244
        %v4316 = vunpack.c.l.b16 %v4245
        %v4317 = vunpack.c.l.b16 %v4246
        %v4318 = vunpack.c.l.b16 %v4247
        %v4319 = vunpack.c.l.b16 %v4248
        %v4320 = vunpack.c.l.b16 %v4249
        %v4321 = vunpack.c.l.b16 %v4250
        %v4322 = vunpack.c.l.b16 %v4251
        %v4323 = vunpack.c.l.b16 %v4252
        %v4324 = vunpack.c.l.b16 %v4253
        %v4325 = vunpack.c.l.b16 %v4254
        %v4326 = vunpack.c.l.b16 %v4255
        %v4327 = vunpack.c.l.b16 %v4256
        %v4328 = vunpack.c.l.b16 %v4257
        %v4329 = vunpack.c.l.b16 %v4258
        %v4330 = vunpack.c.l.b16 %v4259
        %v4331 = vunpack.c.l.b16 %v4260
        %v4332 = vpack.c.b16 %v4301, %v4300
        %v4333 = vpack.c.b16 %v4303, %v4302
        %v4334 = vpack.c.b16 %v4305, %v4304
        %v4335 = vpack.c.b16 %v4307, %v4306
        %v4336 = vpack.c.b16 %v4309, %v4308
        %v4337 = vpack.c.b16 %v4311, %v4310
        %v4338 = vpack.c.b16 %v4313, %v4312
        %v4339 = vpack.c.b16 %v4315, %v4314
        %v4340 = vpack.c.b16 %v4317, %v4316
        %v4341 = vpack.c.b16 %v4319, %v4318
        %v4342 = vpack.c.b16 %v4321, %v4320
        %v4343 = vpack.c.b16 %v4323, %v4322
        %v4344 = vpack.c.b16 %v4325, %v4324
        %v4345 = vpack.c.b16 %v4327, %v4326
        %v4346 = vpack.c.b16 %v4329, %v4328
        %v4347 = vpack.c.b16 %v4331, %v4330
        %4364 = vmatprep.subr.bf16.mxu0 0
        %4365 = vmatpush1.bf16.msra.mxu0 %v4332
        %4366 = vmatprep.subr.bf16.mxu0 0
        %4367 = vmatpush1.bf16.msra.mxu0 %v4333
        %4368 = vmatprep.subr.bf16.mxu0 0
        %4369 = vmatpush1.bf16.msra.mxu0 %v4334
        %4370 = vmatprep.subr.bf16.mxu0 0
        %4371 = vmatpush1.bf16.msra.mxu0 %v4335
        %4372 = vmatprep.subr.bf16.mxu0 0
        %4373 = vmatpush1.bf16.msra.mxu0 %v4336
        %4374 = vmatprep.subr.bf16.mxu0 0
        %4375 = vmatpush1.bf16.msra.mxu0 %v4337
        %4376 = vmatprep.subr.bf16.mxu0 0
        %4377 = vmatpush1.bf16.msra.mxu0 %v4338
        %4378 = vmatprep.subr.bf16.mxu0 0
        %4379 = vmatpush1.bf16.msra.mxu0 %v4339
        %4380 = vmatprep.subr.bf16.mxu0 0
        %4381 = vmatpush1.bf16.msra.mxu0 %v4340
        %4382 = vmatprep.subr.bf16.mxu0 0
        %4383 = vmatpush1.bf16.msra.mxu0 %v4341
        %4384 = vmatprep.subr.bf16.mxu0 0
        %4385 = vmatpush1.bf16.msra.mxu0 %v4342
        %4386 = vmatprep.subr.bf16.mxu0 0
        %4387 = vmatpush1.bf16.msra.mxu0 %v4343
        %4388 = vmatprep.subr.bf16.mxu0 0
        %4389 = vmatpush1.bf16.msra.mxu0 %v4344
        %4390 = vmatprep.subr.bf16.mxu0 0
        %4391 = vmatpush1.bf16.msra.mxu0 %v4345
        %4392 = vmatprep.subr.bf16.mxu0 0
        %4393 = vmatpush1.bf16.msra.mxu0 %v4346
        %4394 = vmatprep.subr.bf16.mxu0 0
        %4395 = vmatpush1.bf16.msra.mxu0 %v4347
        %4396 = vmatprep.mubr.bf16.mxu0 %v4214
        %4397 = vmatmul.mubr.bf16.gmra.mrb[0].mxu0 %v4213
        %v4398 = vpop.f32.mrb[0].mxu0
        %v4399 = vadd.f32 %v4266, %v4398
        %v4400 = vpop.f32.mrb[0].mxu0
        %v4401 = vpop.f32.mrb[0].mxu0
        %v4402 = vadd.f32 %v4266, %v4401
        %v4403 = vpop.f32.mrb[0].mxu0
        %4404 = vmatprep.mubr.bf16.mxu0 %v4216
        %4405 = vmatmul.mubr.bf16.gmra.mrb[0].mxu0 %v4215
        %v4406 = vpop.f32.mrb[0].mxu0
        %v4407 = vadd.f32 %v4266, %v4406
        %v4408 = vpop.f32.mrb[0].mxu0
        %v4409 = vpop.f32.mrb[0].mxu0
        %v4410 = vadd.f32 %v4266, %v4409
        %v4411 = vpop.f32.mrb[0].mxu0
        %4412 = vmatprep.mubr.bf16.mxu0 %v4218
        %4413 = vmatmul.mubr.bf16.gmra.mrb[0].mxu0 %v4217
        %v4414 = vpop.f32.mrb[0].mxu0
        %v4415 = vadd.f32 %v4266, %v4414
        %v4416 = vpop.f32.mrb[0].mxu0
        %v4417 = vpop.f32.mrb[0].mxu0
        %v4418 = vadd.f32 %v4266, %v4417
        %v4419 = vpop.f32.mrb[0].mxu0
        %4420 = vmatprep.mubr.bf16.mxu0 %v4220
        %4421 = vmatmul.mubr.bf16.gmra.mrb[0].mxu0 %v4219
        %v4422 = vpop.f32.mrb[0].mxu0
        %v4423 = vadd.f32 %v4266, %v4422
        %v4424 = vpop.f32.mrb[0].mxu0
        %v4425 = vpop.f32.mrb[0].mxu0
        %v4426 = vadd.f32 %v4266, %v4425
        %v4427 = vpop.f32.mrb[0].mxu0
        %4428 = vmatprep.mubr.bf16.mxu0 %v4222
        %4429 = vmatmul.mubr.bf16.gmra.mrb[0].mxu0 %v4221
        %v4430 = vpop.f32.mrb[0].mxu0
        %v4431 = vadd.f32 %v4266, %v4430
        %v4432 = vpop.f32.mrb[0].mxu0
        %v4433 = vpop.f32.mrb[0].mxu0
        %v4434 = vadd.f32 %v4266, %v4433
        %v4435 = vpop.f32.mrb[0].mxu0
        %4436 = vmatprep.mubr.bf16.mxu0 %v4224
        %4437 = vmatmul.mubr.bf16.gmra.mrb[0].mxu0 %v4223
        %v4438 = vpop.f32.mrb[0].mxu0
        %v4439 = vadd.f32 %v4266, %v4438
        %v4440 = vpop.f32.mrb[0].mxu0
        %v4441 = vpop.f32.mrb[0].mxu0
        %v4442 = vadd.f32 %v4266, %v4441
        %v4443 = vpop.f32.mrb[0].mxu0
        %4444 = vmatprep.mubr.bf16.mxu0 %v4226
        %4445 = vmatmul.mubr.bf16.gmra.mrb[0].mxu0 %v4225
        %v4446 = vpop.f32.mrb[0].mxu0
        %v4447 = vadd.f32 %v4266, %v4446
        %v4448 = vpop.f32.mrb[0].mxu0
        %v4449 = vpop.f32.mrb[0].mxu0
        %v4450 = vadd.f32 %v4266, %v4449
        %v4451 = vpop.f32.mrb[0].mxu0
        %4452 = vmatprep.mubr.bf16.mxu0 %v4228
        %4453 = vmatmul.mubr.bf16.gmra.mrb[0].mxu0 %v4227
        %v4454 = vpop.f32.mrb[0].mxu0
        %v4455 = vadd.f32 %v4266, %v4454
        %v4456 = vpop.f32.mrb[0].mxu0
        %v4457 = vpop.f32.mrb[0].mxu0
        %v4458 = vadd.f32 %v4266, %v4457
        %v4459 = vpop.f32.mrb[0].mxu0
        %4460 = vdwg.mxu0
        %4461 = vst [vmem:[%s432] sm:$0xff] %v4399
        %4462 = vst [vmem:[%s432 + $0x8] sm:$0xff] %v4402
        %4463 = vst [vmem:[%s432 + $0x10] sm:$0xff] %v4407
        %4464 = vst [vmem:[%s432 + $0x18] sm:$0xff] %v4410
        %4465 = vst [vmem:[%s432 + $0x20] sm:$0xff] %v4415
        %4466 = vst [vmem:[%s432 + $0x28] sm:$0xff] %v4418
        %4467 = vst [vmem:[%s432 + $0x30] sm:$0xff] %v4423
        %4468 = vst [vmem:[%s432 + $0x38] sm:$0xff] %v4426
        %4469 = vst [vmem:[%s432 + $0x40] sm:$0xff] %v4431
        %4470 = vst [vmem:[%s432 + $0x48] sm:$0xff] %v4434
        %4471 = vst [vmem:[%s432 + $0x50] sm:$0xff] %v4439
        %4472 = vst [vmem:[%s432 + $0x58] sm:$0xff] %v4442
        %4473 = vst [vmem:[%s432 + $0x60] sm:$0xff] %v4447
        %4474 = vst [vmem:[%s432 + $0x68] sm:$0xff] %v4450
        %4475 = vst [vmem:[%s432 + $0x70] sm:$0xff] %v4455
        %4476 = vst [vmem:[%s432 + $0x78] sm:$0xff] %v4458
        %s4477 = smul.u32 16, %s24
        %p4478 = scmp.lt.s32.totalorder %s4477, 31
        %s4479 = scalar_select %p4478, %s4477, 31
        %s4480 = smul.addr %s4479, 8
        %s4481 = scalar_lea.vmem %s11, %s4480
        // Predicated region
        $region77: #{_forward_impl.1} parent=63 // pred_check
          %p4482 = pneg %p278
        $region78: #{_forward_impl.1} parent=63 // pred_check_branch
          %4484 = sbr.rel (%p4482) target = $region80
        $region79: #{_forward_impl.1} parent=63 // pred_region
          %s4485 = smul.u32 16, %s24
        $region80: #{_forward_impl.1} parent=63 // pred_fallthru
          _
      $region64: #{_forward_impl.1} parent=5 // pred_fallthru
        _
      %p4486 = scmp.le.s32.totalorder 2, %s19
      // Predicated region
      $region81: #{_forward_impl.1} parent=5 // pred_check
        %p4487 = pneg %p4486
      $region82: #{_forward_impl.1} parent=5 // pred_check_branch
        %4489 = sbr.rel (%p4487) target = $region84
      $region83: #{_forward_impl.1} parent=5 // pred_region
        %s4490 = ssub.s32 %s19, 2
        // Predicated region
        $region85: #{_forward_impl.1} parent=83 // pred_check
          %p4491 = pneg %p284
        $region86: #{_forward_impl.1} parent=83 // pred_check_branch
          %4493 = sbr.rel (%p4491) target = $region88
        $region87: #{_forward_impl.1} parent=83 // pred_region
          %s4494 = smul.u32 16, %s25
          %p4495 = scmp.lt.s32.totalorder %s4494, 31
          %s4496 = scalar_select %p4495, %s4494, 31
          %s4497 = smul.addr %s4496, 8
          %s4498 = scalar_lea.vmem %s11, %s4497
        $region88: #{_forward_impl.1} parent=83 // pred_fallthru
          _
      $region84: #{_forward_impl.1} parent=5 // pred_fallthru
        _
    $region6: #{_forward_impl.1} parent=1 // loop_footer
      %s23 = sadd.s32 1, %s19
    $region7: #{_forward_impl.1} parent=1 // loop_footer_branch
      %18 = sbr.rel target = $region3
    $region8: #{_forward_impl.1} parent=1 // loop_exit
      _
    %4499 = vsyncpa [#allocation3], 1
    %s4500 = scalar_lea.sflag [#allocation3], 1
    %4501 = vsyncpa %s4500, 1
    %4502 = vsyncpa [#allocation5], 1

</llo_original>
